<compile_context>
chip_gen: v7x
topology: tpu7x:2x2x1
jax: 0.10.0
libtpu: 0.0.40
codegen_flags: <defaults>
</compile_context>

<pallas_src>
import math

import jax
import jax.numpy as jnp
from jax.experimental import pallas as pl
from jax.experimental.pallas import tpu as pltpu

# ---- small-config "BERT" ----------------------------------------------------
B, S = 2, 8            # batch, sequence length
H = 32                 # hidden size (stand-in for 768)
NH = 4                 # attention heads
DH = H // NH           # head dim
INTER = 64             # FFN intermediate size
LAYERS = 2             # encoder layers
VOCAB = 100
MAX_POS = 32
NUM_CLASS = 3
EPS = 1e-12            # BERT LayerNorm eps
LANE = 128             # lane-dense width for the padded classifier output
M = B * S


# ---- in-kernel helpers (traced, VMEM-resident values) -------------------------
def _layernorm(x, g, b):
    mean = jnp.mean(x, axis=-1, keepdims=True)
    var = jnp.mean((x - mean) ** 2, axis=-1, keepdims=True)
    return (x - mean) * jax.lax.rsqrt(var + EPS) * g + b


def _gelu(x):
    # exact (erf) GELU, matching HF BERT default
    return 0.5 * x * (1.0 + jax.lax.erf(x * (1.0 / math.sqrt(2.0))))


# ---- fused whole-model kernel --------------------------------------------------
def _bert_fused_kernel(emb_ref, mask_ref, emb_ln_g_ref, emb_ln_b_ref,
                       wqkv_ref, bqkv_ref, wo_ref, bo_ref,
                       ln1_g_ref, ln1_b_ref,
                       wi_ref, bi_ref, wo2_ref, bo2_ref,
                       ln2_g_ref, ln2_b_ref,
                       fc_w_ref, fc_b_ref,
                       logits_ref):
    scale = 1.0 / math.sqrt(DH)
    mask = mask_ref[...]                                         # [B, S] additive

    # embedding LayerNorm
    h = _layernorm(emb_ref[...], emb_ln_g_ref[...], emb_ln_b_ref[...])   # [B*S, H]

    for li in range(LAYERS):
        # ---- fused QKV projection: one MXU pass with N = 3H ----
        qkv = jnp.dot(h, wqkv_ref[li],
                      preferred_element_type=jnp.float32) + bqkv_ref[li]  # [B*S, 3H]

        # ---- self-attention, per (batch, head), static slices, all VMEM-resident ----
        batch_ctx = []
        for b in range(B):
            r0 = b * S
            mask_b = mask[b:b + 1, :]                            # [1, S]
            head_ctx = []
            for hh in range(NH):
                c0 = hh * DH
                q_bh = qkv[r0:r0 + S, c0:c0 + DH]                # [S, DH]
                k_bh = qkv[r0:r0 + S, H + c0:H + c0 + DH]        # [S, DH]
                v_bh = qkv[r0:r0 + S, 2 * H + c0:2 * H + c0 + DH]

                s = jax.lax.dot_general(                         # q @ k^T
                    q_bh, k_bh, (((1,), (1,)), ((), ())),
                    preferred_element_type=jnp.float32) * scale  # [S, S]
                s = s + mask_b
                s = s - jnp.max(s, axis=-1, keepdims=True)
                p = jnp.exp(s)
                p = p * pl.reciprocal(jnp.sum(p, axis=-1, keepdims=True),
                                      approx=True)
                head_ctx.append(jnp.dot(p, v_bh,
                                        preferred_element_type=jnp.float32))
            batch_ctx.append(jnp.concatenate(head_ctx, axis=1))  # [S, H]
        ctx = jnp.concatenate(batch_ctx, axis=0)                 # [B*S, H]

        # ---- attention output projection + residual + LN ----
        attn_out = jnp.dot(ctx, wo_ref[li],
                           preferred_element_type=jnp.float32) + bo_ref[li]
        h = _layernorm(attn_out + h, ln1_g_ref[li], ln1_b_ref[li])

        # ---- FFN (GELU) + residual + LN ----
        inter = _gelu(jnp.dot(h, wi_ref[li],
                              preferred_element_type=jnp.float32) + bi_ref[li])
        ffn = jnp.dot(inter, wo2_ref[li],
                      preferred_element_type=jnp.float32) + bo2_ref[li]
        h = _layernorm(ffn + h, ln2_g_ref[li], ln2_b_ref[li])

    # ---- [CLS] pooling + classifier (dropout = inference-mode identity) ----
    cls = jnp.concatenate([h[b * S:b * S + 1, :] for b in range(B)], axis=0)  # [B, H]
    logits = jnp.dot(cls, fc_w_ref[...],
                     preferred_element_type=jnp.float32) + fc_b_ref[...]      # [B, 128]
    logits_ref[...] = logits.astype(logits_ref.dtype)


def _fs(shape):
    """Full-array BlockSpec (single block, no tiling)."""
    zeros = (0,) * len(shape)
    return pl.BlockSpec(shape, lambda i, _z=zeros: _z)


# ---- parameter construction (deterministic) ----------------------------------
def init_params(key):
    def nrm(k, shape, scale=0.02):
        return scale * jax.random.normal(k, shape, dtype=jnp.float32)

    keys = jax.random.split(key, 4 + LAYERS)
    p = {
        "word_emb": nrm(keys[0], (VOCAB, H)),
        "pos_emb": nrm(keys[1], (MAX_POS, H)),
        "type_emb": nrm(keys[2], (2, H)),
        "emb_ln_g": jnp.ones((1, H), jnp.float32),
        "emb_ln_b": jnp.zeros((1, H), jnp.float32),
        "fc_w": nrm(keys[3], (H, NUM_CLASS)),
        "fc_b": jnp.zeros((NUM_CLASS,), jnp.float32),
    }
    wqkv, wo, wi, wo2 = [], [], [], []
    for li in range(LAYERS):
        lk = jax.random.split(keys[4 + li], 6)
        wqkv.append(jnp.concatenate(
            [nrm(lk[0], (H, H)), nrm(lk[1], (H, H)), nrm(lk[2], (H, H))], axis=1))
        wo.append(nrm(lk[3], (H, H)))
        wi.append(nrm(lk[4], (H, INTER)))
        wo2.append(nrm(lk[5], (INTER, H)))
    p.update({
        "wqkv": jnp.stack(wqkv),                                  # [L, H, 3H]
        "bqkv": jnp.zeros((LAYERS, 1, 3 * H), jnp.float32),
        "wo": jnp.stack(wo),                                      # [L, H, H]
        "bo": jnp.zeros((LAYERS, 1, H), jnp.float32),
        "ln1_g": jnp.ones((LAYERS, 1, H), jnp.float32),
        "ln1_b": jnp.zeros((LAYERS, 1, H), jnp.float32),
        "wi": jnp.stack(wi),                                      # [L, H, INTER]
        "bi": jnp.zeros((LAYERS, 1, INTER), jnp.float32),
        "wo2": jnp.stack(wo2),                                    # [L, INTER, H]
        "bo2": jnp.zeros((LAYERS, 1, H), jnp.float32),
        "ln2_g": jnp.ones((LAYERS, 1, H), jnp.float32),
        "ln2_b": jnp.zeros((LAYERS, 1, H), jnp.float32),
    })
    return p


# ---- model forward: glue (gather / padding) in JAX, everything else fused -----
def bert_cls_forward(params, input_ids, attention_mask):
    # TODO(synk): embedding gather (jnp.take) stays in XLA glue — a data-dependent
    # row gather has no clean single-block Pallas equivalent at this size.
    word = jnp.take(params["word_emb"], input_ids, axis=0)          # [B, S, H]
    pos = params["pos_emb"][:S][None, :, :]                         # [1, S, H]
    typ = params["type_emb"][0][None, None, :]                      # token_type_ids = 0
    emb = (word + pos + typ).reshape(M, H)                          # [B*S, H]

    # extended additive attention mask: (1 - mask) * -10000, one row per batch
    ext_mask = (1.0 - attention_mask.astype(jnp.float32)) * -10000.0  # [B, S]

    # pad classifier weights to a lane-dense 128-wide output tile
    fc_w_pad = jnp.zeros((H, LANE), jnp.float32).at[:, :NUM_CLASS].set(params["fc_w"])
    fc_b_pad = jnp.zeros((1, LANE), jnp.float32).at[0, :NUM_CLASS].set(params["fc_b"])

    args = (
        emb, ext_mask, params["emb_ln_g"], params["emb_ln_b"],
        params["wqkv"], params["bqkv"], params["wo"], params["bo"],
        params["ln1_g"], params["ln1_b"],
        params["wi"], params["bi"], params["wo2"], params["bo2"],
        params["ln2_g"], params["ln2_b"],
        fc_w_pad, fc_b_pad,
    )

    logits_pad = pl.pallas_call(
        _bert_fused_kernel,
        out_shape=jax.ShapeDtypeStruct((B, LANE), jnp.float32),
        grid=(1,),
        in_specs=[_fs(a.shape) for a in args],
        out_specs=_fs((B, LANE)),
        compiler_params=pltpu.CompilerParams(
            dimension_semantics=("arbitrary",),
            vmem_limit_bytes=32 * 1024 * 1024,
        ),
    )(*args)

    # slice padded logits back to NUM_CLASS
    return logits_pad[:, :NUM_CLASS]


if __name__ == "__main__":
    key = jax.random.PRNGKey(0)
    pkey, ikey = jax.random.split(key)
    params = init_params(pkey)

    input_ids = jax.random.randint(ikey, (B, S), 0, VOCAB, dtype=jnp.int32)
    attention_mask = jnp.array(
        [[1, 1, 1, 1, 1, 1, 1, 1],
         [1, 1, 1, 1, 1, 1, 0, 0]], dtype=jnp.int32)

    fwd = jax.jit(bert_cls_forward)
    logits = fwd(params, input_ids, attention_mask)
    jax.block_until_ready(logits)
    assert logits.shape == (B, NUM_CLASS)
    print("KERNEL_OK")
</pallas_src>

<mosaic_0001>
module attributes {stable_mosaic.version = 11 : i64} {
  func.func @_bert_fused_kernel(%arg0: i32, %arg1: memref<16x32xf32, #tpu.memory_space<vmem>>, %arg2: memref<2x8xf32, #tpu.memory_space<vmem>>, %arg3: memref<1x32xf32, #tpu.memory_space<vmem>>, %arg4: memref<1x32xf32, #tpu.memory_space<vmem>>, %arg5: memref<2x32x96xf32, #tpu.memory_space<vmem>>, %arg6: memref<2x1x96xf32, #tpu.memory_space<vmem>>, %arg7: memref<2x32x32xf32, #tpu.memory_space<vmem>>, %arg8: memref<2x1x32xf32, #tpu.memory_space<vmem>>, %arg9: memref<2x1x32xf32, #tpu.memory_space<vmem>>, %arg10: memref<2x1x32xf32, #tpu.memory_space<vmem>>, %arg11: memref<2x32x64xf32, #tpu.memory_space<vmem>>, %arg12: memref<2x1x64xf32, #tpu.memory_space<vmem>>, %arg13: memref<2x64x32xf32, #tpu.memory_space<vmem>>, %arg14: memref<2x1x32xf32, #tpu.memory_space<vmem>>, %arg15: memref<2x1x32xf32, #tpu.memory_space<vmem>>, %arg16: memref<2x1x32xf32, #tpu.memory_space<vmem>>, %arg17: memref<32x128xf32, #tpu.memory_space<vmem>>, %arg18: memref<1x128xf32, #tpu.memory_space<vmem>>, %arg19: memref<2x128xf32, #tpu.memory_space<vmem>>) attributes {dimension_semantics = [#tpu.dimension_semantics<arbitrary>], iteration_bounds = array<i64: 1>, scalar_prefetch = 0 : i64, scratch_operands = 0 : i64, tpu.core_type = #tpu.core_type<tc>, window_params = [{pipeline_mode = #tpu.pipeline_mode<synchronous>, transform_indices = @transform_0, window_bounds = array<i64: 16, 32>}, {pipeline_mode = #tpu.pipeline_mode<synchronous>, transform_indices = @transform_1, window_bounds = array<i64: 2, 8>}, {pipeline_mode = #tpu.pipeline_mode<synchronous>, transform_indices = @transform_2, window_bounds = array<i64: 1, 32>}, {pipeline_mode = #tpu.pipeline_mode<synchronous>, transform_indices = @transform_3, window_bounds = array<i64: 1, 32>}, {pipeline_mode = #tpu.pipeline_mode<synchronous>, transform_indices = @transform_4, window_bounds = array<i64: 2, 32, 96>}, {pipeline_mode = #tpu.pipeline_mode<synchronous>, transform_indices = @transform_5, window_bounds = array<i64: 2, 1, 96>}, {pipeline_mode = #tpu.pipeline_mode<synchronous>, transform_indices = @transform_6, window_bounds = array<i64: 2, 32, 32>}, {pipeline_mode = #tpu.pipeline_mode<synchronous>, transform_indices = @transform_7, window_bounds = array<i64: 2, 1, 32>}, {pipeline_mode = #tpu.pipeline_mode<synchronous>, transform_indices = @transform_8, window_bounds = array<i64: 2, 1, 32>}, {pipeline_mode = #tpu.pipeline_mode<synchronous>, transform_indices = @transform_9, window_bounds = array<i64: 2, 1, 32>}, {pipeline_mode = #tpu.pipeline_mode<synchronous>, transform_indices = @transform_10, window_bounds = array<i64: 2, 32, 64>}, {pipeline_mode = #tpu.pipeline_mode<synchronous>, transform_indices = @transform_11, window_bounds = array<i64: 2, 1, 64>}, {pipeline_mode = #tpu.pipeline_mode<synchronous>, transform_indices = @transform_12, window_bounds = array<i64: 2, 64, 32>}, {pipeline_mode = #tpu.pipeline_mode<synchronous>, transform_indices = @transform_13, window_bounds = array<i64: 2, 1, 32>}, {pipeline_mode = #tpu.pipeline_mode<synchronous>, transform_indices = @transform_14, window_bounds = array<i64: 2, 1, 32>}, {pipeline_mode = #tpu.pipeline_mode<synchronous>, transform_indices = @transform_15, window_bounds = array<i64: 2, 1, 32>}, {pipeline_mode = #tpu.pipeline_mode<synchronous>, transform_indices = @transform_16, window_bounds = array<i64: 32, 128>}, {pipeline_mode = #tpu.pipeline_mode<synchronous>, transform_indices = @transform_17, window_bounds = array<i64: 1, 128>}, {pipeline_mode = #tpu.pipeline_mode<synchronous>, transform_indices = @transform_18, window_bounds = array<i64: 2, 128>}]} {
    %c0 = arith.constant 0 : index
    %c0_0 = arith.constant 0 : index
    %0 = vector.load %arg2[%c0, %c0_0] : memref<2x8xf32, #tpu.memory_space<vmem>>, vector<2x8xf32>
    %c0_1 = arith.constant 0 : index
    %c0_2 = arith.constant 0 : index
    %1 = vector.load %arg1[%c0_1, %c0_2] : memref<16x32xf32, #tpu.memory_space<vmem>>, vector<16x32xf32>
    %c0_3 = arith.constant 0 : index
    %c0_4 = arith.constant 0 : index
    %2 = vector.load %arg3[%c0_3, %c0_4] : memref<1x32xf32, #tpu.memory_space<vmem>>, vector<1x32xf32>
    %c0_5 = arith.constant 0 : index
    %c0_6 = arith.constant 0 : index
    %3 = vector.load %arg4[%c0_5, %c0_6] : memref<1x32xf32, #tpu.memory_space<vmem>>, vector<1x32xf32>
    %cst = arith.constant dense<0.000000e+00> : vector<16xf32>
    %4 = vector.multi_reduction <add>, %1, %cst [1] : vector<16x32xf32> to vector<16xf32>
    %5 = vector.shape_cast %4 : vector<16xf32> to vector<16x1xf32>
    %cst_7 = arith.constant 3.200000e+01 : f32
    %6 = vector.broadcast %cst_7 : f32 to vector<16x1xf32>
    %7 = arith.divf %5, %6 : vector<16x1xf32>
    %8 = vector.broadcast %7 : vector<16x1xf32> to vector<16x32xf32>
    %9 = arith.subf %1, %8 : vector<16x32xf32>
    %10 = arith.mulf %9, %9 : vector<16x32xf32>
    %cst_8 = arith.constant dense<0.000000e+00> : vector<16xf32>
    %11 = vector.multi_reduction <add>, %10, %cst_8 [1] : vector<16x32xf32> to vector<16xf32>
    %12 = vector.shape_cast %11 : vector<16xf32> to vector<16x1xf32>
    %cst_9 = arith.constant 3.200000e+01 : f32
    %13 = vector.broadcast %cst_9 : f32 to vector<16x1xf32>
    %14 = arith.divf %12, %13 : vector<16x1xf32>
    %15 = vector.broadcast %7 : vector<16x1xf32> to vector<16x32xf32>
    %16 = arith.subf %1, %15 : vector<16x32xf32>
    %cst_10 = arith.constant 9.99999996E-13 : f32
    %17 = vector.broadcast %cst_10 : f32 to vector<16x1xf32>
    %18 = arith.addf %14, %17 : vector<16x1xf32>
    %19 = math.rsqrt %18 : vector<16x1xf32>
    %20 = vector.broadcast %19 : vector<16x1xf32> to vector<16x32xf32>
    %21 = arith.mulf %16, %20 : vector<16x32xf32>
    %22 = vector.broadcast %2 : vector<1x32xf32> to vector<16x32xf32>
    %23 = arith.mulf %21, %22 : vector<16x32xf32>
    %24 = vector.broadcast %3 : vector<1x32xf32> to vector<16x32xf32>
    %25 = arith.addf %23, %24 : vector<16x32xf32>
    %c0_11 = arith.constant 0 : index
    %c0_12 = arith.constant 0 : index
    %c0_13 = arith.constant 0 : index
    %26 = vector.load %arg5[%c0_11, %c0_12, %c0_13] : memref<2x32x96xf32, #tpu.memory_space<vmem>>, vector<1x32x96xf32>
    %27 = vector.shape_cast %26 : vector<1x32x96xf32> to vector<32x96xf32>
    %cst_14 = arith.constant dense<0.000000e+00> : vector<16x96xf32>
    %28 = tpu.matmul %25, %27, %cst_14 {dimension_numbers = #tpu.dot_dimension_numbers<[1], [0], [0], [1], [0, 0, 1, 1], [], []>} : vector<16x32xf32>, vector<32x96xf32>, vector<16x96xf32> -> vector<16x96xf32>
    %c0_15 = arith.constant 0 : index
    %c0_16 = arith.constant 0 : index
    %c0_17 = arith.constant 0 : index
    %29 = vector.load %arg6[%c0_15, %c0_16, %c0_17] : memref<2x1x96xf32, #tpu.memory_space<vmem>>, vector<1x1x96xf32>
    %30 = vector.shape_cast %29 : vector<1x1x96xf32> to vector<1x96xf32>
    %31 = vector.broadcast %30 : vector<1x96xf32> to vector<16x96xf32>
    %32 = arith.addf %28, %31 : vector<16x96xf32>
    %33 = vector.extract_strided_slice %0 {offsets = [0, 0], sizes = [1, 8], strides = [1, 1]} : vector<2x8xf32> to vector<1x8xf32>
    %34 = vector.extract_strided_slice %32 {offsets = [0, 0], sizes = [8, 8], strides = [1, 1]} : vector<16x96xf32> to vector<8x8xf32>
    %35 = vector.extract_strided_slice %32 {offsets = [0, 32], sizes = [8, 8], strides = [1, 1]} : vector<16x96xf32> to vector<8x8xf32>
    %36 = vector.extract_strided_slice %32 {offsets = [0, 64], sizes = [8, 8], strides = [1, 1]} : vector<16x96xf32> to vector<8x8xf32>
    %cst_18 = arith.constant dense<0.000000e+00> : vector<8x8xf32>
    %37 = tpu.matmul %34, %35, %cst_18 {dimension_numbers = #tpu.dot_dimension_numbers<[1], [1], [0], [0], [0, 0, 1, 0], [], []>} : vector<8x8xf32>, vector<8x8xf32>, vector<8x8xf32> -> vector<8x8xf32>
    %cst_19 = arith.constant 0.353553385 : f32
    %38 = vector.broadcast %cst_19 : f32 to vector<8x8xf32>
    %39 = arith.mulf %37, %38 : vector<8x8xf32>
    %40 = vector.broadcast %33 : vector<1x8xf32> to vector<8x8xf32>
    %41 = arith.addf %39, %40 : vector<8x8xf32>
    %cst_20 = arith.constant dense<0xFF800000> : vector<8xf32>
    %42 = vector.multi_reduction <maximumf>, %41, %cst_20 [1] : vector<8x8xf32> to vector<8xf32>
    %43 = vector.shape_cast %42 : vector<8xf32> to vector<8x1xf32>
    %44 = vector.broadcast %43 : vector<8x1xf32> to vector<8x8xf32>
    %45 = arith.subf %41, %44 : vector<8x8xf32>
    %46 = math.exp %45 : vector<8x8xf32>
    %cst_21 = arith.constant dense<0.000000e+00> : vector<8xf32>
    %47 = vector.multi_reduction <add>, %46, %cst_21 [1] : vector<8x8xf32> to vector<8xf32>
    %48 = vector.shape_cast %47 : vector<8xf32> to vector<8x1xf32>
    %49 = tpu.reciprocal %48 {approx = true} : vector<8x1xf32> -> vector<8x1xf32>
    %50 = vector.broadcast %49 : vector<8x1xf32> to vector<8x8xf32>
    %51 = arith.mulf %46, %50 : vector<8x8xf32>
    %cst_22 = arith.constant dense<0.000000e+00> : vector<8x8xf32>
    %52 = tpu.matmul %51, %36, %cst_22 {dimension_numbers = #tpu.dot_dimension_numbers<[1], [0], [0], [1], [0, 0, 1, 1], [], []>} : vector<8x8xf32>, vector<8x8xf32>, vector<8x8xf32> -> vector<8x8xf32>
    %53 = vector.extract_strided_slice %32 {offsets = [0, 8], sizes = [8, 8], strides = [1, 1]} : vector<16x96xf32> to vector<8x8xf32>
    %54 = vector.extract_strided_slice %32 {offsets = [0, 40], sizes = [8, 8], strides = [1, 1]} : vector<16x96xf32> to vector<8x8xf32>
    %55 = vector.extract_strided_slice %32 {offsets = [0, 72], sizes = [8, 8], strides = [1, 1]} : vector<16x96xf32> to vector<8x8xf32>
    %cst_23 = arith.constant dense<0.000000e+00> : vector<8x8xf32>
    %56 = tpu.matmul %53, %54, %cst_23 {dimension_numbers = #tpu.dot_dimension_numbers<[1], [1], [0], [0], [0, 0, 1, 0], [], []>} : vector<8x8xf32>, vector<8x8xf32>, vector<8x8xf32> -> vector<8x8xf32>
    %cst_24 = arith.constant 0.353553385 : f32
    %57 = vector.broadcast %cst_24 : f32 to vector<8x8xf32>
    %58 = arith.mulf %56, %57 : vector<8x8xf32>
    %59 = vector.broadcast %33 : vector<1x8xf32> to vector<8x8xf32>
    %60 = arith.addf %58, %59 : vector<8x8xf32>
    %cst_25 = arith.constant dense<0xFF800000> : vector<8xf32>
    %61 = vector.multi_reduction <maximumf>, %60, %cst_25 [1] : vector<8x8xf32> to vector<8xf32>
    %62 = vector.shape_cast %61 : vector<8xf32> to vector<8x1xf32>
    %63 = vector.broadcast %62 : vector<8x1xf32> to vector<8x8xf32>
    %64 = arith.subf %60, %63 : vector<8x8xf32>
    %65 = math.exp %64 : vector<8x8xf32>
    %cst_26 = arith.constant dense<0.000000e+00> : vector<8xf32>
    %66 = vector.multi_reduction <add>, %65, %cst_26 [1] : vector<8x8xf32> to vector<8xf32>
    %67 = vector.shape_cast %66 : vector<8xf32> to vector<8x1xf32>
    %68 = tpu.reciprocal %67 {approx = true} : vector<8x1xf32> -> vector<8x1xf32>
    %69 = vector.broadcast %68 : vector<8x1xf32> to vector<8x8xf32>
    %70 = arith.mulf %65, %69 : vector<8x8xf32>
    %cst_27 = arith.constant dense<0.000000e+00> : vector<8x8xf32>
    %71 = tpu.matmul %70, %55, %cst_27 {dimension_numbers = #tpu.dot_dimension_numbers<[1], [0], [0], [1], [0, 0, 1, 1], [], []>} : vector<8x8xf32>, vector<8x8xf32>, vector<8x8xf32> -> vector<8x8xf32>
    %72 = vector.extract_strided_slice %32 {offsets = [0, 16], sizes = [8, 8], strides = [1, 1]} : vector<16x96xf32> to vector<8x8xf32>
    %73 = vector.extract_strided_slice %32 {offsets = [0, 48], sizes = [8, 8], strides = [1, 1]} : vector<16x96xf32> to vector<8x8xf32>
    %74 = vector.extract_strided_slice %32 {offsets = [0, 80], sizes = [8, 8], strides = [1, 1]} : vector<16x96xf32> to vector<8x8xf32>
    %cst_28 = arith.constant dense<0.000000e+00> : vector<8x8xf32>
    %75 = tpu.matmul %72, %73, %cst_28 {dimension_numbers = #tpu.dot_dimension_numbers<[1], [1], [0], [0], [0, 0, 1, 0], [], []>} : vector<8x8xf32>, vector<8x8xf32>, vector<8x8xf32> -> vector<8x8xf32>
    %cst_29 = arith.constant 0.353553385 : f32
    %76 = vector.broadcast %cst_29 : f32 to vector<8x8xf32>
    %77 = arith.mulf %75, %76 : vector<8x8xf32>
    %78 = vector.broadcast %33 : vector<1x8xf32> to vector<8x8xf32>
    %79 = arith.addf %77, %78 : vector<8x8xf32>
    %cst_30 = arith.constant dense<0xFF800000> : vector<8xf32>
    %80 = vector.multi_reduction <maximumf>, %79, %cst_30 [1] : vector<8x8xf32> to vector<8xf32>
    %81 = vector.shape_cast %80 : vector<8xf32> to vector<8x1xf32>
    %82 = vector.broadcast %81 : vector<8x1xf32> to vector<8x8xf32>
    %83 = arith.subf %79, %82 : vector<8x8xf32>
    %84 = math.exp %83 : vector<8x8xf32>
    %cst_31 = arith.constant dense<0.000000e+00> : vector<8xf32>
    %85 = vector.multi_reduction <add>, %84, %cst_31 [1] : vector<8x8xf32> to vector<8xf32>
    %86 = vector.shape_cast %85 : vector<8xf32> to vector<8x1xf32>
    %87 = tpu.reciprocal %86 {approx = true} : vector<8x1xf32> -> vector<8x1xf32>
    %88 = vector.broadcast %87 : vector<8x1xf32> to vector<8x8xf32>
    %89 = arith.mulf %84, %88 : vector<8x8xf32>
    %cst_32 = arith.constant dense<0.000000e+00> : vector<8x8xf32>
    %90 = tpu.matmul %89, %74, %cst_32 {dimension_numbers = #tpu.dot_dimension_numbers<[1], [0], [0], [1], [0, 0, 1, 1], [], []>} : vector<8x8xf32>, vector<8x8xf32>, vector<8x8xf32> -> vector<8x8xf32>
    %91 = vector.extract_strided_slice %32 {offsets = [0, 24], sizes = [8, 8], strides = [1, 1]} : vector<16x96xf32> to vector<8x8xf32>
    %92 = vector.extract_strided_slice %32 {offsets = [0, 56], sizes = [8, 8], strides = [1, 1]} : vector<16x96xf32> to vector<8x8xf32>
    %93 = vector.extract_strided_slice %32 {offsets = [0, 88], sizes = [8, 8], strides = [1, 1]} : vector<16x96xf32> to vector<8x8xf32>
    %cst_33 = arith.constant dense<0.000000e+00> : vector<8x8xf32>
    %94 = tpu.matmul %91, %92, %cst_33 {dimension_numbers = #tpu.dot_dimension_numbers<[1], [1], [0], [0], [0, 0, 1, 0], [], []>} : vector<8x8xf32>, vector<8x8xf32>, vector<8x8xf32> -> vector<8x8xf32>
    %cst_34 = arith.constant 0.353553385 : f32
    %95 = vector.broadcast %cst_34 : f32 to vector<8x8xf32>
    %96 = arith.mulf %94, %95 : vector<8x8xf32>
    %97 = vector.broadcast %33 : vector<1x8xf32> to vector<8x8xf32>
    %98 = arith.addf %96, %97 : vector<8x8xf32>
    %cst_35 = arith.constant dense<0xFF800000> : vector<8xf32>
    %99 = vector.multi_reduction <maximumf>, %98, %cst_35 [1] : vector<8x8xf32> to vector<8xf32>
    %100 = vector.shape_cast %99 : vector<8xf32> to vector<8x1xf32>
    %101 = vector.broadcast %100 : vector<8x1xf32> to vector<8x8xf32>
    %102 = arith.subf %98, %101 : vector<8x8xf32>
    %103 = math.exp %102 : vector<8x8xf32>
    %cst_36 = arith.constant dense<0.000000e+00> : vector<8xf32>
    %104 = vector.multi_reduction <add>, %103, %cst_36 [1] : vector<8x8xf32> to vector<8xf32>
    %105 = vector.shape_cast %104 : vector<8xf32> to vector<8x1xf32>
    %106 = tpu.reciprocal %105 {approx = true} : vector<8x1xf32> -> vector<8x1xf32>
    %107 = vector.broadcast %106 : vector<8x1xf32> to vector<8x8xf32>
    %108 = arith.mulf %103, %107 : vector<8x8xf32>
    %cst_37 = arith.constant dense<0.000000e+00> : vector<8x8xf32>
    %109 = tpu.matmul %108, %93, %cst_37 {dimension_numbers = #tpu.dot_dimension_numbers<[1], [0], [0], [1], [0, 0, 1, 1], [], []>} : vector<8x8xf32>, vector<8x8xf32>, vector<8x8xf32> -> vector<8x8xf32>
    %110 = tpu.concatenate %52, %71, %90, %109 in 1 : vector<8x8xf32>, vector<8x8xf32>, vector<8x8xf32>, vector<8x8xf32> -> vector<8x32xf32>
    %111 = vector.extract_strided_slice %0 {offsets = [1, 0], sizes = [1, 8], strides = [1, 1]} : vector<2x8xf32> to vector<1x8xf32>
    %112 = vector.extract_strided_slice %32 {offsets = [8, 0], sizes = [8, 8], strides = [1, 1]} : vector<16x96xf32> to vector<8x8xf32>
    %113 = vector.extract_strided_slice %32 {offsets = [8, 32], sizes = [8, 8], strides = [1, 1]} : vector<16x96xf32> to vector<8x8xf32>
    %114 = vector.extract_strided_slice %32 {offsets = [8, 64], sizes = [8, 8], strides = [1, 1]} : vector<16x96xf32> to vector<8x8xf32>
    %cst_38 = arith.constant dense<0.000000e+00> : vector<8x8xf32>
    %115 = tpu.matmul %112, %113, %cst_38 {dimension_numbers = #tpu.dot_dimension_numbers<[1], [1], [0], [0], [0, 0, 1, 0], [], []>} : vector<8x8xf32>, vector<8x8xf32>, vector<8x8xf32> -> vector<8x8xf32>
    %cst_39 = arith.constant 0.353553385 : f32
    %116 = vector.broadcast %cst_39 : f32 to vector<8x8xf32>
    %117 = arith.mulf %115, %116 : vector<8x8xf32>
    %118 = vector.broadcast %111 : vector<1x8xf32> to vector<8x8xf32>
    %119 = arith.addf %117, %118 : vector<8x8xf32>
    %cst_40 = arith.constant dense<0xFF800000> : vector<8xf32>
    %120 = vector.multi_reduction <maximumf>, %119, %cst_40 [1] : vector<8x8xf32> to vector<8xf32>
    %121 = vector.shape_cast %120 : vector<8xf32> to vector<8x1xf32>
    %122 = vector.broadcast %121 : vector<8x1xf32> to vector<8x8xf32>
    %123 = arith.subf %119, %122 : vector<8x8xf32>
    %124 = math.exp %123 : vector<8x8xf32>
    %cst_41 = arith.constant dense<0.000000e+00> : vector<8xf32>
    %125 = vector.multi_reduction <add>, %124, %cst_41 [1] : vector<8x8xf32> to vector<8xf32>
    %126 = vector.shape_cast %125 : vector<8xf32> to vector<8x1xf32>
    %127 = tpu.reciprocal %126 {approx = true} : vector<8x1xf32> -> vector<8x1xf32>
    %128 = vector.broadcast %127 : vector<8x1xf32> to vector<8x8xf32>
    %129 = arith.mulf %124, %128 : vector<8x8xf32>
    %cst_42 = arith.constant dense<0.000000e+00> : vector<8x8xf32>
    %130 = tpu.matmul %129, %114, %cst_42 {dimension_numbers = #tpu.dot_dimension_numbers<[1], [0], [0], [1], [0, 0, 1, 1], [], []>} : vector<8x8xf32>, vector<8x8xf32>, vector<8x8xf32> -> vector<8x8xf32>
    %131 = vector.extract_strided_slice %32 {offsets = [8, 8], sizes = [8, 8], strides = [1, 1]} : vector<16x96xf32> to vector<8x8xf32>
    %132 = vector.extract_strided_slice %32 {offsets = [8, 40], sizes = [8, 8], strides = [1, 1]} : vector<16x96xf32> to vector<8x8xf32>
    %133 = vector.extract_strided_slice %32 {offsets = [8, 72], sizes = [8, 8], strides = [1, 1]} : vector<16x96xf32> to vector<8x8xf32>
    %cst_43 = arith.constant dense<0.000000e+00> : vector<8x8xf32>
    %134 = tpu.matmul %131, %132, %cst_43 {dimension_numbers = #tpu.dot_dimension_numbers<[1], [1], [0], [0], [0, 0, 1, 0], [], []>} : vector<8x8xf32>, vector<8x8xf32>, vector<8x8xf32> -> vector<8x8xf32>
    %cst_44 = arith.constant 0.353553385 : f32
    %135 = vector.broadcast %cst_44 : f32 to vector<8x8xf32>
    %136 = arith.mulf %134, %135 : vector<8x8xf32>
    %137 = vector.broadcast %111 : vector<1x8xf32> to vector<8x8xf32>
    %138 = arith.addf %136, %137 : vector<8x8xf32>
    %cst_45 = arith.constant dense<0xFF800000> : vector<8xf32>
    %139 = vector.multi_reduction <maximumf>, %138, %cst_45 [1] : vector<8x8xf32> to vector<8xf32>
    %140 = vector.shape_cast %139 : vector<8xf32> to vector<8x1xf32>
    %141 = vector.broadcast %140 : vector<8x1xf32> to vector<8x8xf32>
    %142 = arith.subf %138, %141 : vector<8x8xf32>
    %143 = math.exp %142 : vector<8x8xf32>
    %cst_46 = arith.constant dense<0.000000e+00> : vector<8xf32>
    %144 = vector.multi_reduction <add>, %143, %cst_46 [1] : vector<8x8xf32> to vector<8xf32>
    %145 = vector.shape_cast %144 : vector<8xf32> to vector<8x1xf32>
    %146 = tpu.reciprocal %145 {approx = true} : vector<8x1xf32> -> vector<8x1xf32>
    %147 = vector.broadcast %146 : vector<8x1xf32> to vector<8x8xf32>
    %148 = arith.mulf %143, %147 : vector<8x8xf32>
    %cst_47 = arith.constant dense<0.000000e+00> : vector<8x8xf32>
    %149 = tpu.matmul %148, %133, %cst_47 {dimension_numbers = #tpu.dot_dimension_numbers<[1], [0], [0], [1], [0, 0, 1, 1], [], []>} : vector<8x8xf32>, vector<8x8xf32>, vector<8x8xf32> -> vector<8x8xf32>
    %150 = vector.extract_strided_slice %32 {offsets = [8, 16], sizes = [8, 8], strides = [1, 1]} : vector<16x96xf32> to vector<8x8xf32>
    %151 = vector.extract_strided_slice %32 {offsets = [8, 48], sizes = [8, 8], strides = [1, 1]} : vector<16x96xf32> to vector<8x8xf32>
    %152 = vector.extract_strided_slice %32 {offsets = [8, 80], sizes = [8, 8], strides = [1, 1]} : vector<16x96xf32> to vector<8x8xf32>
    %cst_48 = arith.constant dense<0.000000e+00> : vector<8x8xf32>
    %153 = tpu.matmul %150, %151, %cst_48 {dimension_numbers = #tpu.dot_dimension_numbers<[1], [1], [0], [0], [0, 0, 1, 0], [], []>} : vector<8x8xf32>, vector<8x8xf32>, vector<8x8xf32> -> vector<8x8xf32>
    %cst_49 = arith.constant 0.353553385 : f32
    %154 = vector.broadcast %cst_49 : f32 to vector<8x8xf32>
    %155 = arith.mulf %153, %154 : vector<8x8xf32>
    %156 = vector.broadcast %111 : vector<1x8xf32> to vector<8x8xf32>
    %157 = arith.addf %155, %156 : vector<8x8xf32>
    %cst_50 = arith.constant dense<0xFF800000> : vector<8xf32>
    %158 = vector.multi_reduction <maximumf>, %157, %cst_50 [1] : vector<8x8xf32> to vector<8xf32>
    %159 = vector.shape_cast %158 : vector<8xf32> to vector<8x1xf32>
    %160 = vector.broadcast %159 : vector<8x1xf32> to vector<8x8xf32>
    %161 = arith.subf %157, %160 : vector<8x8xf32>
    %162 = math.exp %161 : vector<8x8xf32>
    %cst_51 = arith.constant dense<0.000000e+00> : vector<8xf32>
    %163 = vector.multi_reduction <add>, %162, %cst_51 [1] : vector<8x8xf32> to vector<8xf32>
    %164 = vector.shape_cast %163 : vector<8xf32> to vector<8x1xf32>
    %165 = tpu.reciprocal %164 {approx = true} : vector<8x1xf32> -> vector<8x1xf32>
    %166 = vector.broadcast %165 : vector<8x1xf32> to vector<8x8xf32>
    %167 = arith.mulf %162, %166 : vector<8x8xf32>
    %cst_52 = arith.constant dense<0.000000e+00> : vector<8x8xf32>
    %168 = tpu.matmul %167, %152, %cst_52 {dimension_numbers = #tpu.dot_dimension_numbers<[1], [0], [0], [1], [0, 0, 1, 1], [], []>} : vector<8x8xf32>, vector<8x8xf32>, vector<8x8xf32> -> vector<8x8xf32>
    %169 = vector.extract_strided_slice %32 {offsets = [8, 24], sizes = [8, 8], strides = [1, 1]} : vector<16x96xf32> to vector<8x8xf32>
    %170 = vector.extract_strided_slice %32 {offsets = [8, 56], sizes = [8, 8], strides = [1, 1]} : vector<16x96xf32> to vector<8x8xf32>
    %171 = vector.extract_strided_slice %32 {offsets = [8, 88], sizes = [8, 8], strides = [1, 1]} : vector<16x96xf32> to vector<8x8xf32>
    %cst_53 = arith.constant dense<0.000000e+00> : vector<8x8xf32>
    %172 = tpu.matmul %169, %170, %cst_53 {dimension_numbers = #tpu.dot_dimension_numbers<[1], [1], [0], [0], [0, 0, 1, 0], [], []>} : vector<8x8xf32>, vector<8x8xf32>, vector<8x8xf32> -> vector<8x8xf32>
    %cst_54 = arith.constant 0.353553385 : f32
    %173 = vector.broadcast %cst_54 : f32 to vector<8x8xf32>
    %174 = arith.mulf %172, %173 : vector<8x8xf32>
    %175 = vector.broadcast %111 : vector<1x8xf32> to vector<8x8xf32>
    %176 = arith.addf %174, %175 : vector<8x8xf32>
    %cst_55 = arith.constant dense<0xFF800000> : vector<8xf32>
    %177 = vector.multi_reduction <maximumf>, %176, %cst_55 [1] : vector<8x8xf32> to vector<8xf32>
    %178 = vector.shape_cast %177 : vector<8xf32> to vector<8x1xf32>
    %179 = vector.broadcast %178 : vector<8x1xf32> to vector<8x8xf32>
    %180 = arith.subf %176, %179 : vector<8x8xf32>
    %181 = math.exp %180 : vector<8x8xf32>
    %cst_56 = arith.constant dense<0.000000e+00> : vector<8xf32>
    %182 = vector.multi_reduction <add>, %181, %cst_56 [1] : vector<8x8xf32> to vector<8xf32>
    %183 = vector.shape_cast %182 : vector<8xf32> to vector<8x1xf32>
    %184 = tpu.reciprocal %183 {approx = true} : vector<8x1xf32> -> vector<8x1xf32>
    %185 = vector.broadcast %184 : vector<8x1xf32> to vector<8x8xf32>
    %186 = arith.mulf %181, %185 : vector<8x8xf32>
    %cst_57 = arith.constant dense<0.000000e+00> : vector<8x8xf32>
    %187 = tpu.matmul %186, %171, %cst_57 {dimension_numbers = #tpu.dot_dimension_numbers<[1], [0], [0], [1], [0, 0, 1, 1], [], []>} : vector<8x8xf32>, vector<8x8xf32>, vector<8x8xf32> -> vector<8x8xf32>
    %188 = tpu.concatenate %130, %149, %168, %187 in 1 : vector<8x8xf32>, vector<8x8xf32>, vector<8x8xf32>, vector<8x8xf32> -> vector<8x32xf32>
    %189 = tpu.concatenate %110, %188 in 0 : vector<8x32xf32>, vector<8x32xf32> -> vector<16x32xf32>
    %c0_58 = arith.constant 0 : index
    %c0_59 = arith.constant 0 : index
    %c0_60 = arith.constant 0 : index
    %190 = vector.load %arg7[%c0_58, %c0_59, %c0_60] : memref<2x32x32xf32, #tpu.memory_space<vmem>>, vector<1x32x32xf32>
    %191 = vector.shape_cast %190 : vector<1x32x32xf32> to vector<32x32xf32>
    %cst_61 = arith.constant dense<0.000000e+00> : vector<16x32xf32>
    %192 = tpu.matmul %189, %191, %cst_61 {dimension_numbers = #tpu.dot_dimension_numbers<[1], [0], [0], [1], [0, 0, 1, 1], [], []>} : vector<16x32xf32>, vector<32x32xf32>, vector<16x32xf32> -> vector<16x32xf32>
    %c0_62 = arith.constant 0 : index
    %c0_63 = arith.constant 0 : index
    %c0_64 = arith.constant 0 : index
    %193 = vector.load %arg8[%c0_62, %c0_63, %c0_64] : memref<2x1x32xf32, #tpu.memory_space<vmem>>, vector<1x1x32xf32>
    %194 = vector.shape_cast %193 : vector<1x1x32xf32> to vector<1x32xf32>
    %195 = vector.broadcast %194 : vector<1x32xf32> to vector<16x32xf32>
    %196 = arith.addf %192, %195 : vector<16x32xf32>
    %197 = arith.addf %196, %25 : vector<16x32xf32>
    %c0_65 = arith.constant 0 : index
    %c0_66 = arith.constant 0 : index
    %c0_67 = arith.constant 0 : index
    %198 = vector.load %arg9[%c0_65, %c0_66, %c0_67] : memref<2x1x32xf32, #tpu.memory_space<vmem>>, vector<1x1x32xf32>
    %199 = vector.shape_cast %198 : vector<1x1x32xf32> to vector<1x32xf32>
    %c0_68 = arith.constant 0 : index
    %c0_69 = arith.constant 0 : index
    %c0_70 = arith.constant 0 : index
    %200 = vector.load %arg10[%c0_68, %c0_69, %c0_70] : memref<2x1x32xf32, #tpu.memory_space<vmem>>, vector<1x1x32xf32>
    %201 = vector.shape_cast %200 : vector<1x1x32xf32> to vector<1x32xf32>
    %cst_71 = arith.constant dense<0.000000e+00> : vector<16xf32>
    %202 = vector.multi_reduction <add>, %197, %cst_71 [1] : vector<16x32xf32> to vector<16xf32>
    %203 = vector.shape_cast %202 : vector<16xf32> to vector<16x1xf32>
    %cst_72 = arith.constant 3.200000e+01 : f32
    %204 = vector.broadcast %cst_72 : f32 to vector<16x1xf32>
    %205 = arith.divf %203, %204 : vector<16x1xf32>
    %206 = vector.broadcast %205 : vector<16x1xf32> to vector<16x32xf32>
    %207 = arith.subf %197, %206 : vector<16x32xf32>
    %208 = arith.mulf %207, %207 : vector<16x32xf32>
    %cst_73 = arith.constant dense<0.000000e+00> : vector<16xf32>
    %209 = vector.multi_reduction <add>, %208, %cst_73 [1] : vector<16x32xf32> to vector<16xf32>
    %210 = vector.shape_cast %209 : vector<16xf32> to vector<16x1xf32>
    %cst_74 = arith.constant 3.200000e+01 : f32
    %211 = vector.broadcast %cst_74 : f32 to vector<16x1xf32>
    %212 = arith.divf %210, %211 : vector<16x1xf32>
    %213 = vector.broadcast %205 : vector<16x1xf32> to vector<16x32xf32>
    %214 = arith.subf %197, %213 : vector<16x32xf32>
    %cst_75 = arith.constant 9.99999996E-13 : f32
    %215 = vector.broadcast %cst_75 : f32 to vector<16x1xf32>
    %216 = arith.addf %212, %215 : vector<16x1xf32>
    %217 = math.rsqrt %216 : vector<16x1xf32>
    %218 = vector.broadcast %217 : vector<16x1xf32> to vector<16x32xf32>
    %219 = arith.mulf %214, %218 : vector<16x32xf32>
    %220 = vector.broadcast %199 : vector<1x32xf32> to vector<16x32xf32>
    %221 = arith.mulf %219, %220 : vector<16x32xf32>
    %222 = vector.broadcast %201 : vector<1x32xf32> to vector<16x32xf32>
    %223 = arith.addf %221, %222 : vector<16x32xf32>
    %c0_76 = arith.constant 0 : index
    %c0_77 = arith.constant 0 : index
    %c0_78 = arith.constant 0 : index
    %224 = vector.load %arg11[%c0_76, %c0_77, %c0_78] : memref<2x32x64xf32, #tpu.memory_space<vmem>>, vector<1x32x64xf32>
    %225 = vector.shape_cast %224 : vector<1x32x64xf32> to vector<32x64xf32>
    %cst_79 = arith.constant dense<0.000000e+00> : vector<16x64xf32>
    %226 = tpu.matmul %223, %225, %cst_79 {dimension_numbers = #tpu.dot_dimension_numbers<[1], [0], [0], [1], [0, 0, 1, 1], [], []>} : vector<16x32xf32>, vector<32x64xf32>, vector<16x64xf32> -> vector<16x64xf32>
    %c0_80 = arith.constant 0 : index
    %c0_81 = arith.constant 0 : index
    %c0_82 = arith.constant 0 : index
    %227 = vector.load %arg12[%c0_80, %c0_81, %c0_82] : memref<2x1x64xf32, #tpu.memory_space<vmem>>, vector<1x1x64xf32>
    %228 = vector.shape_cast %227 : vector<1x1x64xf32> to vector<1x64xf32>
    %229 = vector.broadcast %228 : vector<1x64xf32> to vector<16x64xf32>
    %230 = arith.addf %226, %229 : vector<16x64xf32>
    %cst_83 = arith.constant 5.000000e-01 : f32
    %231 = vector.broadcast %cst_83 : f32 to vector<16x64xf32>
    %232 = arith.mulf %231, %230 : vector<16x64xf32>
    %cst_84 = arith.constant 0.707106769 : f32
    %233 = vector.broadcast %cst_84 : f32 to vector<16x64xf32>
    %234 = arith.mulf %230, %233 : vector<16x64xf32>
    %235 = math.erf %234 : vector<16x64xf32>
    %cst_85 = arith.constant 1.000000e+00 : f32
    %236 = vector.broadcast %cst_85 : f32 to vector<16x64xf32>
    %237 = arith.addf %236, %235 : vector<16x64xf32>
    %238 = arith.mulf %232, %237 : vector<16x64xf32>
    %c0_86 = arith.constant 0 : index
    %c0_87 = arith.constant 0 : index
    %c0_88 = arith.constant 0 : index
    %239 = vector.load %arg13[%c0_86, %c0_87, %c0_88] : memref<2x64x32xf32, #tpu.memory_space<vmem>>, vector<1x64x32xf32>
    %240 = vector.shape_cast %239 : vector<1x64x32xf32> to vector<64x32xf32>
    %cst_89 = arith.constant dense<0.000000e+00> : vector<16x32xf32>
    %241 = tpu.matmul %238, %240, %cst_89 {dimension_numbers = #tpu.dot_dimension_numbers<[1], [0], [0], [1], [0, 0, 1, 1], [], []>} : vector<16x64xf32>, vector<64x32xf32>, vector<16x32xf32> -> vector<16x32xf32>
    %c0_90 = arith.constant 0 : index
    %c0_91 = arith.constant 0 : index
    %c0_92 = arith.constant 0 : index
    %242 = vector.load %arg14[%c0_90, %c0_91, %c0_92] : memref<2x1x32xf32, #tpu.memory_space<vmem>>, vector<1x1x32xf32>
    %243 = vector.shape_cast %242 : vector<1x1x32xf32> to vector<1x32xf32>
    %244 = vector.broadcast %243 : vector<1x32xf32> to vector<16x32xf32>
    %245 = arith.addf %241, %244 : vector<16x32xf32>
    %246 = arith.addf %245, %223 : vector<16x32xf32>
    %c0_93 = arith.constant 0 : index
    %c0_94 = arith.constant 0 : index
    %c0_95 = arith.constant 0 : index
    %247 = vector.load %arg15[%c0_93, %c0_94, %c0_95] : memref<2x1x32xf32, #tpu.memory_space<vmem>>, vector<1x1x32xf32>
    %248 = vector.shape_cast %247 : vector<1x1x32xf32> to vector<1x32xf32>
    %c0_96 = arith.constant 0 : index
    %c0_97 = arith.constant 0 : index
    %c0_98 = arith.constant 0 : index
    %249 = vector.load %arg16[%c0_96, %c0_97, %c0_98] : memref<2x1x32xf32, #tpu.memory_space<vmem>>, vector<1x1x32xf32>
    %250 = vector.shape_cast %249 : vector<1x1x32xf32> to vector<1x32xf32>
    %cst_99 = arith.constant dense<0.000000e+00> : vector<16xf32>
    %251 = vector.multi_reduction <add>, %246, %cst_99 [1] : vector<16x32xf32> to vector<16xf32>
    %252 = vector.shape_cast %251 : vector<16xf32> to vector<16x1xf32>
    %cst_100 = arith.constant 3.200000e+01 : f32
    %253 = vector.broadcast %cst_100 : f32 to vector<16x1xf32>
    %254 = arith.divf %252, %253 : vector<16x1xf32>
    %255 = vector.broadcast %254 : vector<16x1xf32> to vector<16x32xf32>
    %256 = arith.subf %246, %255 : vector<16x32xf32>
    %257 = arith.mulf %256, %256 : vector<16x32xf32>
    %cst_101 = arith.constant dense<0.000000e+00> : vector<16xf32>
    %258 = vector.multi_reduction <add>, %257, %cst_101 [1] : vector<16x32xf32> to vector<16xf32>
    %259 = vector.shape_cast %258 : vector<16xf32> to vector<16x1xf32>
    %cst_102 = arith.constant 3.200000e+01 : f32
    %260 = vector.broadcast %cst_102 : f32 to vector<16x1xf32>
    %261 = arith.divf %259, %260 : vector<16x1xf32>
    %262 = vector.broadcast %254 : vector<16x1xf32> to vector<16x32xf32>
    %263 = arith.subf %246, %262 : vector<16x32xf32>
    %cst_103 = arith.constant 9.99999996E-13 : f32
    %264 = vector.broadcast %cst_103 : f32 to vector<16x1xf32>
    %265 = arith.addf %261, %264 : vector<16x1xf32>
    %266 = math.rsqrt %265 : vector<16x1xf32>
    %267 = vector.broadcast %266 : vector<16x1xf32> to vector<16x32xf32>
    %268 = arith.mulf %263, %267 : vector<16x32xf32>
    %269 = vector.broadcast %248 : vector<1x32xf32> to vector<16x32xf32>
    %270 = arith.mulf %268, %269 : vector<16x32xf32>
    %271 = vector.broadcast %250 : vector<1x32xf32> to vector<16x32xf32>
    %272 = arith.addf %270, %271 : vector<16x32xf32>
    %c1 = arith.constant 1 : index
    %c0_104 = arith.constant 0 : index
    %c0_105 = arith.constant 0 : index
    %273 = vector.load %arg5[%c1, %c0_104, %c0_105] : memref<2x32x96xf32, #tpu.memory_space<vmem>>, vector<1x32x96xf32>
    %274 = vector.shape_cast %273 : vector<1x32x96xf32> to vector<32x96xf32>
    %cst_106 = arith.constant dense<0.000000e+00> : vector<16x96xf32>
    %275 = tpu.matmul %272, %274, %cst_106 {dimension_numbers = #tpu.dot_dimension_numbers<[1], [0], [0], [1], [0, 0, 1, 1], [], []>} : vector<16x32xf32>, vector<32x96xf32>, vector<16x96xf32> -> vector<16x96xf32>
    %c1_107 = arith.constant 1 : index
    %c0_108 = arith.constant 0 : index
    %c0_109 = arith.constant 0 : index
    %276 = vector.load %arg6[%c1_107, %c0_108, %c0_109] : memref<2x1x96xf32, #tpu.memory_space<vmem>>, vector<1x1x96xf32>
    %277 = vector.shape_cast %276 : vector<1x1x96xf32> to vector<1x96xf32>
    %278 = vector.broadcast %277 : vector<1x96xf32> to vector<16x96xf32>
    %279 = arith.addf %275, %278 : vector<16x96xf32>
    %280 = vector.extract_strided_slice %0 {offsets = [0, 0], sizes = [1, 8], strides = [1, 1]} : vector<2x8xf32> to vector<1x8xf32>
    %281 = vector.extract_strided_slice %279 {offsets = [0, 0], sizes = [8, 8], strides = [1, 1]} : vector<16x96xf32> to vector<8x8xf32>
    %282 = vector.extract_strided_slice %279 {offsets = [0, 32], sizes = [8, 8], strides = [1, 1]} : vector<16x96xf32> to vector<8x8xf32>
    %283 = vector.extract_strided_slice %279 {offsets = [0, 64], sizes = [8, 8], strides = [1, 1]} : vector<16x96xf32> to vector<8x8xf32>
    %cst_110 = arith.constant dense<0.000000e+00> : vector<8x8xf32>
    %284 = tpu.matmul %281, %282, %cst_110 {dimension_numbers = #tpu.dot_dimension_numbers<[1], [1], [0], [0], [0, 0, 1, 0], [], []>} : vector<8x8xf32>, vector<8x8xf32>, vector<8x8xf32> -> vector<8x8xf32>
    %cst_111 = arith.constant 0.353553385 : f32
    %285 = vector.broadcast %cst_111 : f32 to vector<8x8xf32>
    %286 = arith.mulf %284, %285 : vector<8x8xf32>
    %287 = vector.broadcast %280 : vector<1x8xf32> to vector<8x8xf32>
    %288 = arith.addf %286, %287 : vector<8x8xf32>
    %cst_112 = arith.constant dense<0xFF800000> : vector<8xf32>
    %289 = vector.multi_reduction <maximumf>, %288, %cst_112 [1] : vector<8x8xf32> to vector<8xf32>
    %290 = vector.shape_cast %289 : vector<8xf32> to vector<8x1xf32>
    %291 = vector.broadcast %290 : vector<8x1xf32> to vector<8x8xf32>
    %292 = arith.subf %288, %291 : vector<8x8xf32>
    %293 = math.exp %292 : vector<8x8xf32>
    %cst_113 = arith.constant dense<0.000000e+00> : vector<8xf32>
    %294 = vector.multi_reduction <add>, %293, %cst_113 [1] : vector<8x8xf32> to vector<8xf32>
    %295 = vector.shape_cast %294 : vector<8xf32> to vector<8x1xf32>
    %296 = tpu.reciprocal %295 {approx = true} : vector<8x1xf32> -> vector<8x1xf32>
    %297 = vector.broadcast %296 : vector<8x1xf32> to vector<8x8xf32>
    %298 = arith.mulf %293, %297 : vector<8x8xf32>
    %cst_114 = arith.constant dense<0.000000e+00> : vector<8x8xf32>
    %299 = tpu.matmul %298, %283, %cst_114 {dimension_numbers = #tpu.dot_dimension_numbers<[1], [0], [0], [1], [0, 0, 1, 1], [], []>} : vector<8x8xf32>, vector<8x8xf32>, vector<8x8xf32> -> vector<8x8xf32>
    %300 = vector.extract_strided_slice %279 {offsets = [0, 8], sizes = [8, 8], strides = [1, 1]} : vector<16x96xf32> to vector<8x8xf32>
    %301 = vector.extract_strided_slice %279 {offsets = [0, 40], sizes = [8, 8], strides = [1, 1]} : vector<16x96xf32> to vector<8x8xf32>
    %302 = vector.extract_strided_slice %279 {offsets = [0, 72], sizes = [8, 8], strides = [1, 1]} : vector<16x96xf32> to vector<8x8xf32>
    %cst_115 = arith.constant dense<0.000000e+00> : vector<8x8xf32>
    %303 = tpu.matmul %300, %301, %cst_115 {dimension_numbers = #tpu.dot_dimension_numbers<[1], [1], [0], [0], [0, 0, 1, 0], [], []>} : vector<8x8xf32>, vector<8x8xf32>, vector<8x8xf32> -> vector<8x8xf32>
    %cst_116 = arith.constant 0.353553385 : f32
    %304 = vector.broadcast %cst_116 : f32 to vector<8x8xf32>
    %305 = arith.mulf %303, %304 : vector<8x8xf32>
    %306 = vector.broadcast %280 : vector<1x8xf32> to vector<8x8xf32>
    %307 = arith.addf %305, %306 : vector<8x8xf32>
    %cst_117 = arith.constant dense<0xFF800000> : vector<8xf32>
    %308 = vector.multi_reduction <maximumf>, %307, %cst_117 [1] : vector<8x8xf32> to vector<8xf32>
    %309 = vector.shape_cast %308 : vector<8xf32> to vector<8x1xf32>
    %310 = vector.broadcast %309 : vector<8x1xf32> to vector<8x8xf32>
    %311 = arith.subf %307, %310 : vector<8x8xf32>
    %312 = math.exp %311 : vector<8x8xf32>
    %cst_118 = arith.constant dense<0.000000e+00> : vector<8xf32>
    %313 = vector.multi_reduction <add>, %312, %cst_118 [1] : vector<8x8xf32> to vector<8xf32>
    %314 = vector.shape_cast %313 : vector<8xf32> to vector<8x1xf32>
    %315 = tpu.reciprocal %314 {approx = true} : vector<8x1xf32> -> vector<8x1xf32>
    %316 = vector.broadcast %315 : vector<8x1xf32> to vector<8x8xf32>
    %317 = arith.mulf %312, %316 : vector<8x8xf32>
    %cst_119 = arith.constant dense<0.000000e+00> : vector<8x8xf32>
    %318 = tpu.matmul %317, %302, %cst_119 {dimension_numbers = #tpu.dot_dimension_numbers<[1], [0], [0], [1], [0, 0, 1, 1], [], []>} : vector<8x8xf32>, vector<8x8xf32>, vector<8x8xf32> -> vector<8x8xf32>
    %319 = vector.extract_strided_slice %279 {offsets = [0, 16], sizes = [8, 8], strides = [1, 1]} : vector<16x96xf32> to vector<8x8xf32>
    %320 = vector.extract_strided_slice %279 {offsets = [0, 48], sizes = [8, 8], strides = [1, 1]} : vector<16x96xf32> to vector<8x8xf32>
    %321 = vector.extract_strided_slice %279 {offsets = [0, 80], sizes = [8, 8], strides = [1, 1]} : vector<16x96xf32> to vector<8x8xf32>
    %cst_120 = arith.constant dense<0.000000e+00> : vector<8x8xf32>
    %322 = tpu.matmul %319, %320, %cst_120 {dimension_numbers = #tpu.dot_dimension_numbers<[1], [1], [0], [0], [0, 0, 1, 0], [], []>} : vector<8x8xf32>, vector<8x8xf32>, vector<8x8xf32> -> vector<8x8xf32>
    %cst_121 = arith.constant 0.353553385 : f32
    %323 = vector.broadcast %cst_121 : f32 to vector<8x8xf32>
    %324 = arith.mulf %322, %323 : vector<8x8xf32>
    %325 = vector.broadcast %280 : vector<1x8xf32> to vector<8x8xf32>
    %326 = arith.addf %324, %325 : vector<8x8xf32>
    %cst_122 = arith.constant dense<0xFF800000> : vector<8xf32>
    %327 = vector.multi_reduction <maximumf>, %326, %cst_122 [1] : vector<8x8xf32> to vector<8xf32>
    %328 = vector.shape_cast %327 : vector<8xf32> to vector<8x1xf32>
    %329 = vector.broadcast %328 : vector<8x1xf32> to vector<8x8xf32>
    %330 = arith.subf %326, %329 : vector<8x8xf32>
    %331 = math.exp %330 : vector<8x8xf32>
    %cst_123 = arith.constant dense<0.000000e+00> : vector<8xf32>
    %332 = vector.multi_reduction <add>, %331, %cst_123 [1] : vector<8x8xf32> to vector<8xf32>
    %333 = vector.shape_cast %332 : vector<8xf32> to vector<8x1xf32>
    %334 = tpu.reciprocal %333 {approx = true} : vector<8x1xf32> -> vector<8x1xf32>
    %335 = vector.broadcast %334 : vector<8x1xf32> to vector<8x8xf32>
    %336 = arith.mulf %331, %335 : vector<8x8xf32>
    %cst_124 = arith.constant dense<0.000000e+00> : vector<8x8xf32>
    %337 = tpu.matmul %336, %321, %cst_124 {dimension_numbers = #tpu.dot_dimension_numbers<[1], [0], [0], [1], [0, 0, 1, 1], [], []>} : vector<8x8xf32>, vector<8x8xf32>, vector<8x8xf32> -> vector<8x8xf32>
    %338 = vector.extract_strided_slice %279 {offsets = [0, 24], sizes = [8, 8], strides = [1, 1]} : vector<16x96xf32> to vector<8x8xf32>
    %339 = vector.extract_strided_slice %279 {offsets = [0, 56], sizes = [8, 8], strides = [1, 1]} : vector<16x96xf32> to vector<8x8xf32>
    %340 = vector.extract_strided_slice %279 {offsets = [0, 88], sizes = [8, 8], strides = [1, 1]} : vector<16x96xf32> to vector<8x8xf32>
    %cst_125 = arith.constant dense<0.000000e+00> : vector<8x8xf32>
    %341 = tpu.matmul %338, %339, %cst_125 {dimension_numbers = #tpu.dot_dimension_numbers<[1], [1], [0], [0], [0, 0, 1, 0], [], []>} : vector<8x8xf32>, vector<8x8xf32>, vector<8x8xf32> -> vector<8x8xf32>
    %cst_126 = arith.constant 0.353553385 : f32
    %342 = vector.broadcast %cst_126 : f32 to vector<8x8xf32>
    %343 = arith.mulf %341, %342 : vector<8x8xf32>
    %344 = vector.broadcast %280 : vector<1x8xf32> to vector<8x8xf32>
    %345 = arith.addf %343, %344 : vector<8x8xf32>
    %cst_127 = arith.constant dense<0xFF800000> : vector<8xf32>
    %346 = vector.multi_reduction <maximumf>, %345, %cst_127 [1] : vector<8x8xf32> to vector<8xf32>
    %347 = vector.shape_cast %346 : vector<8xf32> to vector<8x1xf32>
    %348 = vector.broadcast %347 : vector<8x1xf32> to vector<8x8xf32>
    %349 = arith.subf %345, %348 : vector<8x8xf32>
    %350 = math.exp %349 : vector<8x8xf32>
    %cst_128 = arith.constant dense<0.000000e+00> : vector<8xf32>
    %351 = vector.multi_reduction <add>, %350, %cst_128 [1] : vector<8x8xf32> to vector<8xf32>
    %352 = vector.shape_cast %351 : vector<8xf32> to vector<8x1xf32>
    %353 = tpu.reciprocal %352 {approx = true} : vector<8x1xf32> -> vector<8x1xf32>
    %354 = vector.broadcast %353 : vector<8x1xf32> to vector<8x8xf32>
    %355 = arith.mulf %350, %354 : vector<8x8xf32>
    %cst_129 = arith.constant dense<0.000000e+00> : vector<8x8xf32>
    %356 = tpu.matmul %355, %340, %cst_129 {dimension_numbers = #tpu.dot_dimension_numbers<[1], [0], [0], [1], [0, 0, 1, 1], [], []>} : vector<8x8xf32>, vector<8x8xf32>, vector<8x8xf32> -> vector<8x8xf32>
    %357 = tpu.concatenate %299, %318, %337, %356 in 1 : vector<8x8xf32>, vector<8x8xf32>, vector<8x8xf32>, vector<8x8xf32> -> vector<8x32xf32>
    %358 = vector.extract_strided_slice %0 {offsets = [1, 0], sizes = [1, 8], strides = [1, 1]} : vector<2x8xf32> to vector<1x8xf32>
    %359 = vector.extract_strided_slice %279 {offsets = [8, 0], sizes = [8, 8], strides = [1, 1]} : vector<16x96xf32> to vector<8x8xf32>
    %360 = vector.extract_strided_slice %279 {offsets = [8, 32], sizes = [8, 8], strides = [1, 1]} : vector<16x96xf32> to vector<8x8xf32>
    %361 = vector.extract_strided_slice %279 {offsets = [8, 64], sizes = [8, 8], strides = [1, 1]} : vector<16x96xf32> to vector<8x8xf32>
    %cst_130 = arith.constant dense<0.000000e+00> : vector<8x8xf32>
    %362 = tpu.matmul %359, %360, %cst_130 {dimension_numbers = #tpu.dot_dimension_numbers<[1], [1], [0], [0], [0, 0, 1, 0], [], []>} : vector<8x8xf32>, vector<8x8xf32>, vector<8x8xf32> -> vector<8x8xf32>
    %cst_131 = arith.constant 0.353553385 : f32
    %363 = vector.broadcast %cst_131 : f32 to vector<8x8xf32>
    %364 = arith.mulf %362, %363 : vector<8x8xf32>
    %365 = vector.broadcast %358 : vector<1x8xf32> to vector<8x8xf32>
    %366 = arith.addf %364, %365 : vector<8x8xf32>
    %cst_132 = arith.constant dense<0xFF800000> : vector<8xf32>
    %367 = vector.multi_reduction <maximumf>, %366, %cst_132 [1] : vector<8x8xf32> to vector<8xf32>
    %368 = vector.shape_cast %367 : vector<8xf32> to vector<8x1xf32>
    %369 = vector.broadcast %368 : vector<8x1xf32> to vector<8x8xf32>
    %370 = arith.subf %366, %369 : vector<8x8xf32>
    %371 = math.exp %370 : vector<8x8xf32>
    %cst_133 = arith.constant dense<0.000000e+00> : vector<8xf32>
    %372 = vector.multi_reduction <add>, %371, %cst_133 [1] : vector<8x8xf32> to vector<8xf32>
    %373 = vector.shape_cast %372 : vector<8xf32> to vector<8x1xf32>
    %374 = tpu.reciprocal %373 {approx = true} : vector<8x1xf32> -> vector<8x1xf32>
    %375 = vector.broadcast %374 : vector<8x1xf32> to vector<8x8xf32>
    %376 = arith.mulf %371, %375 : vector<8x8xf32>
    %cst_134 = arith.constant dense<0.000000e+00> : vector<8x8xf32>
    %377 = tpu.matmul %376, %361, %cst_134 {dimension_numbers = #tpu.dot_dimension_numbers<[1], [0], [0], [1], [0, 0, 1, 1], [], []>} : vector<8x8xf32>, vector<8x8xf32>, vector<8x8xf32> -> vector<8x8xf32>
    %378 = vector.extract_strided_slice %279 {offsets = [8, 8], sizes = [8, 8], strides = [1, 1]} : vector<16x96xf32> to vector<8x8xf32>
    %379 = vector.extract_strided_slice %279 {offsets = [8, 40], sizes = [8, 8], strides = [1, 1]} : vector<16x96xf32> to vector<8x8xf32>
    %380 = vector.extract_strided_slice %279 {offsets = [8, 72], sizes = [8, 8], strides = [1, 1]} : vector<16x96xf32> to vector<8x8xf32>
    %cst_135 = arith.constant dense<0.000000e+00> : vector<8x8xf32>
    %381 = tpu.matmul %378, %379, %cst_135 {dimension_numbers = #tpu.dot_dimension_numbers<[1], [1], [0], [0], [0, 0, 1, 0], [], []>} : vector<8x8xf32>, vector<8x8xf32>, vector<8x8xf32> -> vector<8x8xf32>
    %cst_136 = arith.constant 0.353553385 : f32
    %382 = vector.broadcast %cst_136 : f32 to vector<8x8xf32>
    %383 = arith.mulf %381, %382 : vector<8x8xf32>
    %384 = vector.broadcast %358 : vector<1x8xf32> to vector<8x8xf32>
    %385 = arith.addf %383, %384 : vector<8x8xf32>
    %cst_137 = arith.constant dense<0xFF800000> : vector<8xf32>
    %386 = vector.multi_reduction <maximumf>, %385, %cst_137 [1] : vector<8x8xf32> to vector<8xf32>
    %387 = vector.shape_cast %386 : vector<8xf32> to vector<8x1xf32>
    %388 = vector.broadcast %387 : vector<8x1xf32> to vector<8x8xf32>
    %389 = arith.subf %385, %388 : vector<8x8xf32>
    %390 = math.exp %389 : vector<8x8xf32>
    %cst_138 = arith.constant dense<0.000000e+00> : vector<8xf32>
    %391 = vector.multi_reduction <add>, %390, %cst_138 [1] : vector<8x8xf32> to vector<8xf32>
    %392 = vector.shape_cast %391 : vector<8xf32> to vector<8x1xf32>
    %393 = tpu.reciprocal %392 {approx = true} : vector<8x1xf32> -> vector<8x1xf32>
    %394 = vector.broadcast %393 : vector<8x1xf32> to vector<8x8xf32>
    %395 = arith.mulf %390, %394 : vector<8x8xf32>
    %cst_139 = arith.constant dense<0.000000e+00> : vector<8x8xf32>
    %396 = tpu.matmul %395, %380, %cst_139 {dimension_numbers = #tpu.dot_dimension_numbers<[1], [0], [0], [1], [0, 0, 1, 1], [], []>} : vector<8x8xf32>, vector<8x8xf32>, vector<8x8xf32> -> vector<8x8xf32>
    %397 = vector.extract_strided_slice %279 {offsets = [8, 16], sizes = [8, 8], strides = [1, 1]} : vector<16x96xf32> to vector<8x8xf32>
    %398 = vector.extract_strided_slice %279 {offsets = [8, 48], sizes = [8, 8], strides = [1, 1]} : vector<16x96xf32> to vector<8x8xf32>
    %399 = vector.extract_strided_slice %279 {offsets = [8, 80], sizes = [8, 8], strides = [1, 1]} : vector<16x96xf32> to vector<8x8xf32>
    %cst_140 = arith.constant dense<0.000000e+00> : vector<8x8xf32>
    %400 = tpu.matmul %397, %398, %cst_140 {dimension_numbers = #tpu.dot_dimension_numbers<[1], [1], [0], [0], [0, 0, 1, 0], [], []>} : vector<8x8xf32>, vector<8x8xf32>, vector<8x8xf32> -> vector<8x8xf32>
    %cst_141 = arith.constant 0.353553385 : f32
    %401 = vector.broadcast %cst_141 : f32 to vector<8x8xf32>
    %402 = arith.mulf %400, %401 : vector<8x8xf32>
    %403 = vector.broadcast %358 : vector<1x8xf32> to vector<8x8xf32>
    %404 = arith.addf %402, %403 : vector<8x8xf32>
    %cst_142 = arith.constant dense<0xFF800000> : vector<8xf32>
    %405 = vector.multi_reduction <maximumf>, %404, %cst_142 [1] : vector<8x8xf32> to vector<8xf32>
    %406 = vector.shape_cast %405 : vector<8xf32> to vector<8x1xf32>
    %407 = vector.broadcast %406 : vector<8x1xf32> to vector<8x8xf32>
    %408 = arith.subf %404, %407 : vector<8x8xf32>
    %409 = math.exp %408 : vector<8x8xf32>
    %cst_143 = arith.constant dense<0.000000e+00> : vector<8xf32>
    %410 = vector.multi_reduction <add>, %409, %cst_143 [1] : vector<8x8xf32> to vector<8xf32>
    %411 = vector.shape_cast %410 : vector<8xf32> to vector<8x1xf32>
    %412 = tpu.reciprocal %411 {approx = true} : vector<8x1xf32> -> vector<8x1xf32>
    %413 = vector.broadcast %412 : vector<8x1xf32> to vector<8x8xf32>
    %414 = arith.mulf %409, %413 : vector<8x8xf32>
    %cst_144 = arith.constant dense<0.000000e+00> : vector<8x8xf32>
    %415 = tpu.matmul %414, %399, %cst_144 {dimension_numbers = #tpu.dot_dimension_numbers<[1], [0], [0], [1], [0, 0, 1, 1], [], []>} : vector<8x8xf32>, vector<8x8xf32>, vector<8x8xf32> -> vector<8x8xf32>
    %416 = vector.extract_strided_slice %279 {offsets = [8, 24], sizes = [8, 8], strides = [1, 1]} : vector<16x96xf32> to vector<8x8xf32>
    %417 = vector.extract_strided_slice %279 {offsets = [8, 56], sizes = [8, 8], strides = [1, 1]} : vector<16x96xf32> to vector<8x8xf32>
    %418 = vector.extract_strided_slice %279 {offsets = [8, 88], sizes = [8, 8], strides = [1, 1]} : vector<16x96xf32> to vector<8x8xf32>
    %cst_145 = arith.constant dense<0.000000e+00> : vector<8x8xf32>
    %419 = tpu.matmul %416, %417, %cst_145 {dimension_numbers = #tpu.dot_dimension_numbers<[1], [1], [0], [0], [0, 0, 1, 0], [], []>} : vector<8x8xf32>, vector<8x8xf32>, vector<8x8xf32> -> vector<8x8xf32>
    %cst_146 = arith.constant 0.353553385 : f32
    %420 = vector.broadcast %cst_146 : f32 to vector<8x8xf32>
    %421 = arith.mulf %419, %420 : vector<8x8xf32>
    %422 = vector.broadcast %358 : vector<1x8xf32> to vector<8x8xf32>
    %423 = arith.addf %421, %422 : vector<8x8xf32>
    %cst_147 = arith.constant dense<0xFF800000> : vector<8xf32>
    %424 = vector.multi_reduction <maximumf>, %423, %cst_147 [1] : vector<8x8xf32> to vector<8xf32>
    %425 = vector.shape_cast %424 : vector<8xf32> to vector<8x1xf32>
    %426 = vector.broadcast %425 : vector<8x1xf32> to vector<8x8xf32>
    %427 = arith.subf %423, %426 : vector<8x8xf32>
    %428 = math.exp %427 : vector<8x8xf32>
    %cst_148 = arith.constant dense<0.000000e+00> : vector<8xf32>
    %429 = vector.multi_reduction <add>, %428, %cst_148 [1] : vector<8x8xf32> to vector<8xf32>
    %430 = vector.shape_cast %429 : vector<8xf32> to vector<8x1xf32>
    %431 = tpu.reciprocal %430 {approx = true} : vector<8x1xf32> -> vector<8x1xf32>
    %432 = vector.broadcast %431 : vector<8x1xf32> to vector<8x8xf32>
    %433 = arith.mulf %428, %432 : vector<8x8xf32>
    %cst_149 = arith.constant dense<0.000000e+00> : vector<8x8xf32>
    %434 = tpu.matmul %433, %418, %cst_149 {dimension_numbers = #tpu.dot_dimension_numbers<[1], [0], [0], [1], [0, 0, 1, 1], [], []>} : vector<8x8xf32>, vector<8x8xf32>, vector<8x8xf32> -> vector<8x8xf32>
    %435 = tpu.concatenate %377, %396, %415, %434 in 1 : vector<8x8xf32>, vector<8x8xf32>, vector<8x8xf32>, vector<8x8xf32> -> vector<8x32xf32>
    %436 = tpu.concatenate %357, %435 in 0 : vector<8x32xf32>, vector<8x32xf32> -> vector<16x32xf32>
    %c1_150 = arith.constant 1 : index
    %c0_151 = arith.constant 0 : index
    %c0_152 = arith.constant 0 : index
    %437 = vector.load %arg7[%c1_150, %c0_151, %c0_152] : memref<2x32x32xf32, #tpu.memory_space<vmem>>, vector<1x32x32xf32>
    %438 = vector.shape_cast %437 : vector<1x32x32xf32> to vector<32x32xf32>
    %cst_153 = arith.constant dense<0.000000e+00> : vector<16x32xf32>
    %439 = tpu.matmul %436, %438, %cst_153 {dimension_numbers = #tpu.dot_dimension_numbers<[1], [0], [0], [1], [0, 0, 1, 1], [], []>} : vector<16x32xf32>, vector<32x32xf32>, vector<16x32xf32> -> vector<16x32xf32>
    %c1_154 = arith.constant 1 : index
    %c0_155 = arith.constant 0 : index
    %c0_156 = arith.constant 0 : index
    %440 = vector.load %arg8[%c1_154, %c0_155, %c0_156] : memref<2x1x32xf32, #tpu.memory_space<vmem>>, vector<1x1x32xf32>
    %441 = vector.shape_cast %440 : vector<1x1x32xf32> to vector<1x32xf32>
    %442 = vector.broadcast %441 : vector<1x32xf32> to vector<16x32xf32>
    %443 = arith.addf %439, %442 : vector<16x32xf32>
    %444 = arith.addf %443, %272 : vector<16x32xf32>
    %c1_157 = arith.constant 1 : index
    %c0_158 = arith.constant 0 : index
    %c0_159 = arith.constant 0 : index
    %445 = vector.load %arg9[%c1_157, %c0_158, %c0_159] : memref<2x1x32xf32, #tpu.memory_space<vmem>>, vector<1x1x32xf32>
    %446 = vector.shape_cast %445 : vector<1x1x32xf32> to vector<1x32xf32>
    %c1_160 = arith.constant 1 : index
    %c0_161 = arith.constant 0 : index
    %c0_162 = arith.constant 0 : index
    %447 = vector.load %arg10[%c1_160, %c0_161, %c0_162] : memref<2x1x32xf32, #tpu.memory_space<vmem>>, vector<1x1x32xf32>
    %448 = vector.shape_cast %447 : vector<1x1x32xf32> to vector<1x32xf32>
    %cst_163 = arith.constant dense<0.000000e+00> : vector<16xf32>
    %449 = vector.multi_reduction <add>, %444, %cst_163 [1] : vector<16x32xf32> to vector<16xf32>
    %450 = vector.shape_cast %449 : vector<16xf32> to vector<16x1xf32>
    %cst_164 = arith.constant 3.200000e+01 : f32
    %451 = vector.broadcast %cst_164 : f32 to vector<16x1xf32>
    %452 = arith.divf %450, %451 : vector<16x1xf32>
    %453 = vector.broadcast %452 : vector<16x1xf32> to vector<16x32xf32>
    %454 = arith.subf %444, %453 : vector<16x32xf32>
    %455 = arith.mulf %454, %454 : vector<16x32xf32>
    %cst_165 = arith.constant dense<0.000000e+00> : vector<16xf32>
    %456 = vector.multi_reduction <add>, %455, %cst_165 [1] : vector<16x32xf32> to vector<16xf32>
    %457 = vector.shape_cast %456 : vector<16xf32> to vector<16x1xf32>
    %cst_166 = arith.constant 3.200000e+01 : f32
    %458 = vector.broadcast %cst_166 : f32 to vector<16x1xf32>
    %459 = arith.divf %457, %458 : vector<16x1xf32>
    %460 = vector.broadcast %452 : vector<16x1xf32> to vector<16x32xf32>
    %461 = arith.subf %444, %460 : vector<16x32xf32>
    %cst_167 = arith.constant 9.99999996E-13 : f32
    %462 = vector.broadcast %cst_167 : f32 to vector<16x1xf32>
    %463 = arith.addf %459, %462 : vector<16x1xf32>
    %464 = math.rsqrt %463 : vector<16x1xf32>
    %465 = vector.broadcast %464 : vector<16x1xf32> to vector<16x32xf32>
    %466 = arith.mulf %461, %465 : vector<16x32xf32>
    %467 = vector.broadcast %446 : vector<1x32xf32> to vector<16x32xf32>
    %468 = arith.mulf %466, %467 : vector<16x32xf32>
    %469 = vector.broadcast %448 : vector<1x32xf32> to vector<16x32xf32>
    %470 = arith.addf %468, %469 : vector<16x32xf32>
    %c1_168 = arith.constant 1 : index
    %c0_169 = arith.constant 0 : index
    %c0_170 = arith.constant 0 : index
    %471 = vector.load %arg11[%c1_168, %c0_169, %c0_170] : memref<2x32x64xf32, #tpu.memory_space<vmem>>, vector<1x32x64xf32>
    %472 = vector.shape_cast %471 : vector<1x32x64xf32> to vector<32x64xf32>
    %cst_171 = arith.constant dense<0.000000e+00> : vector<16x64xf32>
    %473 = tpu.matmul %470, %472, %cst_171 {dimension_numbers = #tpu.dot_dimension_numbers<[1], [0], [0], [1], [0, 0, 1, 1], [], []>} : vector<16x32xf32>, vector<32x64xf32>, vector<16x64xf32> -> vector<16x64xf32>
    %c1_172 = arith.constant 1 : index
    %c0_173 = arith.constant 0 : index
    %c0_174 = arith.constant 0 : index
    %474 = vector.load %arg12[%c1_172, %c0_173, %c0_174] : memref<2x1x64xf32, #tpu.memory_space<vmem>>, vector<1x1x64xf32>
    %475 = vector.shape_cast %474 : vector<1x1x64xf32> to vector<1x64xf32>
    %476 = vector.broadcast %475 : vector<1x64xf32> to vector<16x64xf32>
    %477 = arith.addf %473, %476 : vector<16x64xf32>
    %cst_175 = arith.constant 5.000000e-01 : f32
    %478 = vector.broadcast %cst_175 : f32 to vector<16x64xf32>
    %479 = arith.mulf %478, %477 : vector<16x64xf32>
    %cst_176 = arith.constant 0.707106769 : f32
    %480 = vector.broadcast %cst_176 : f32 to vector<16x64xf32>
    %481 = arith.mulf %477, %480 : vector<16x64xf32>
    %482 = math.erf %481 : vector<16x64xf32>
    %cst_177 = arith.constant 1.000000e+00 : f32
    %483 = vector.broadcast %cst_177 : f32 to vector<16x64xf32>
    %484 = arith.addf %483, %482 : vector<16x64xf32>
    %485 = arith.mulf %479, %484 : vector<16x64xf32>
    %c1_178 = arith.constant 1 : index
    %c0_179 = arith.constant 0 : index
    %c0_180 = arith.constant 0 : index
    %486 = vector.load %arg13[%c1_178, %c0_179, %c0_180] : memref<2x64x32xf32, #tpu.memory_space<vmem>>, vector<1x64x32xf32>
    %487 = vector.shape_cast %486 : vector<1x64x32xf32> to vector<64x32xf32>
    %cst_181 = arith.constant dense<0.000000e+00> : vector<16x32xf32>
    %488 = tpu.matmul %485, %487, %cst_181 {dimension_numbers = #tpu.dot_dimension_numbers<[1], [0], [0], [1], [0, 0, 1, 1], [], []>} : vector<16x64xf32>, vector<64x32xf32>, vector<16x32xf32> -> vector<16x32xf32>
    %c1_182 = arith.constant 1 : index
    %c0_183 = arith.constant 0 : index
    %c0_184 = arith.constant 0 : index
    %489 = vector.load %arg14[%c1_182, %c0_183, %c0_184] : memref<2x1x32xf32, #tpu.memory_space<vmem>>, vector<1x1x32xf32>
    %490 = vector.shape_cast %489 : vector<1x1x32xf32> to vector<1x32xf32>
    %491 = vector.broadcast %490 : vector<1x32xf32> to vector<16x32xf32>
    %492 = arith.addf %488, %491 : vector<16x32xf32>
    %493 = arith.addf %492, %470 : vector<16x32xf32>
    %c1_185 = arith.constant 1 : index
    %c0_186 = arith.constant 0 : index
    %c0_187 = arith.constant 0 : index
    %494 = vector.load %arg15[%c1_185, %c0_186, %c0_187] : memref<2x1x32xf32, #tpu.memory_space<vmem>>, vector<1x1x32xf32>
    %495 = vector.shape_cast %494 : vector<1x1x32xf32> to vector<1x32xf32>
    %c1_188 = arith.constant 1 : index
    %c0_189 = arith.constant 0 : index
    %c0_190 = arith.constant 0 : index
    %496 = vector.load %arg16[%c1_188, %c0_189, %c0_190] : memref<2x1x32xf32, #tpu.memory_space<vmem>>, vector<1x1x32xf32>
    %497 = vector.shape_cast %496 : vector<1x1x32xf32> to vector<1x32xf32>
    %cst_191 = arith.constant dense<0.000000e+00> : vector<16xf32>
    %498 = vector.multi_reduction <add>, %493, %cst_191 [1] : vector<16x32xf32> to vector<16xf32>
    %499 = vector.shape_cast %498 : vector<16xf32> to vector<16x1xf32>
    %cst_192 = arith.constant 3.200000e+01 : f32
    %500 = vector.broadcast %cst_192 : f32 to vector<16x1xf32>
    %501 = arith.divf %499, %500 : vector<16x1xf32>
    %502 = vector.broadcast %501 : vector<16x1xf32> to vector<16x32xf32>
    %503 = arith.subf %493, %502 : vector<16x32xf32>
    %504 = arith.mulf %503, %503 : vector<16x32xf32>
    %cst_193 = arith.constant dense<0.000000e+00> : vector<16xf32>
    %505 = vector.multi_reduction <add>, %504, %cst_193 [1] : vector<16x32xf32> to vector<16xf32>
    %506 = vector.shape_cast %505 : vector<16xf32> to vector<16x1xf32>
    %cst_194 = arith.constant 3.200000e+01 : f32
    %507 = vector.broadcast %cst_194 : f32 to vector<16x1xf32>
    %508 = arith.divf %506, %507 : vector<16x1xf32>
    %509 = vector.broadcast %501 : vector<16x1xf32> to vector<16x32xf32>
    %510 = arith.subf %493, %509 : vector<16x32xf32>
    %cst_195 = arith.constant 9.99999996E-13 : f32
    %511 = vector.broadcast %cst_195 : f32 to vector<16x1xf32>
    %512 = arith.addf %508, %511 : vector<16x1xf32>
    %513 = math.rsqrt %512 : vector<16x1xf32>
    %514 = vector.broadcast %513 : vector<16x1xf32> to vector<16x32xf32>
    %515 = arith.mulf %510, %514 : vector<16x32xf32>
    %516 = vector.broadcast %495 : vector<1x32xf32> to vector<16x32xf32>
    %517 = arith.mulf %515, %516 : vector<16x32xf32>
    %518 = vector.broadcast %497 : vector<1x32xf32> to vector<16x32xf32>
    %519 = arith.addf %517, %518 : vector<16x32xf32>
    %520 = vector.extract_strided_slice %519 {offsets = [0, 0], sizes = [1, 32], strides = [1, 1]} : vector<16x32xf32> to vector<1x32xf32>
    %521 = vector.extract_strided_slice %519 {offsets = [8, 0], sizes = [1, 32], strides = [1, 1]} : vector<16x32xf32> to vector<1x32xf32>
    %522 = tpu.concatenate %520, %521 in 0 : vector<1x32xf32>, vector<1x32xf32> -> vector<2x32xf32>
    %c0_196 = arith.constant 0 : index
    %c0_197 = arith.constant 0 : index
    %523 = vector.load %arg17[%c0_196, %c0_197] : memref<32x128xf32, #tpu.memory_space<vmem>>, vector<32x128xf32>
    %cst_198 = arith.constant dense<0.000000e+00> : vector<2x128xf32>
    %524 = tpu.matmul %522, %523, %cst_198 {dimension_numbers = #tpu.dot_dimension_numbers<[1], [0], [0], [1], [0, 0, 1, 1], [], []>} : vector<2x32xf32>, vector<32x128xf32>, vector<2x128xf32> -> vector<2x128xf32>
    %c0_199 = arith.constant 0 : index
    %c0_200 = arith.constant 0 : index
    %525 = vector.load %arg18[%c0_199, %c0_200] : memref<1x128xf32, #tpu.memory_space<vmem>>, vector<1x128xf32>
    %526 = vector.broadcast %525 : vector<1x128xf32> to vector<2x128xf32>
    %527 = arith.addf %524, %526 : vector<2x128xf32>
    %c0_201 = arith.constant 0 : index
    %c0_202 = arith.constant 0 : index
    %528 = vector.load %arg19[%c0_201, %c0_202] : memref<2x128xf32, #tpu.memory_space<vmem>>, vector<2x128xf32>
    tpu.vector_store %arg19[%c0_201, %c0_202], %527 {strides = array<i32>} : memref<2x128xf32, #tpu.memory_space<vmem>>, vector<2x128xf32>,
    return
  }
  func.func @transform_0(%arg0: i32) -> (i32, i32) {
    %c0_i32 = arith.constant 0 : i32
    %c0_i32_0 = arith.constant 0 : i32
    %c0_i32_1 = arith.constant 0 : i32
    return %c0_i32, %c0_i32_0 : i32, i32
  }
  func.func @transform_1(%arg0: i32) -> (i32, i32) {
    %c0_i32 = arith.constant 0 : i32
    %c0_i32_0 = arith.constant 0 : i32
    %c0_i32_1 = arith.constant 0 : i32
    return %c0_i32, %c0_i32_0 : i32, i32
  }
  func.func @transform_2(%arg0: i32) -> (i32, i32) {
    %c0_i32 = arith.constant 0 : i32
    %c0_i32_0 = arith.constant 0 : i32
    %c0_i32_1 = arith.constant 0 : i32
    return %c0_i32, %c0_i32_0 : i32, i32
  }
  func.func @transform_3(%arg0: i32) -> (i32, i32) {
    %c0_i32 = arith.constant 0 : i32
    %c0_i32_0 = arith.constant 0 : i32
    %c0_i32_1 = arith.constant 0 : i32
    return %c0_i32, %c0_i32_0 : i32, i32
  }
  func.func @transform_4(%arg0: i32) -> (i32, i32, i32) {
    %c0_i32 = arith.constant 0 : i32
    %c0_i32_0 = arith.constant 0 : i32
    %c0_i32_1 = arith.constant 0 : i32
    %c0_i32_2 = arith.constant 0 : i32
    return %c0_i32, %c0_i32_0, %c0_i32_1 : i32, i32, i32
  }
  func.func @transform_5(%arg0: i32) -> (i32, i32, i32) {
    %c0_i32 = arith.constant 0 : i32
    %c0_i32_0 = arith.constant 0 : i32
    %c0_i32_1 = arith.constant 0 : i32
    %c0_i32_2 = arith.constant 0 : i32
    return %c0_i32, %c0_i32_0, %c0_i32_1 : i32, i32, i32
  }
  func.func @transform_6(%arg0: i32) -> (i32, i32, i32) {
    %c0_i32 = arith.constant 0 : i32
    %c0_i32_0 = arith.constant 0 : i32
    %c0_i32_1 = arith.constant 0 : i32
    %c0_i32_2 = arith.constant 0 : i32
    return %c0_i32, %c0_i32_0, %c0_i32_1 : i32, i32, i32
  }
  func.func @transform_7(%arg0: i32) -> (i32, i32, i32) {
    %c0_i32 = arith.constant 0 : i32
    %c0_i32_0 = arith.constant 0 : i32
    %c0_i32_1 = arith.constant 0 : i32
    %c0_i32_2 = arith.constant 0 : i32
    return %c0_i32, %c0_i32_0, %c0_i32_1 : i32, i32, i32
  }
  func.func @transform_8(%arg0: i32) -> (i32, i32, i32) {
    %c0_i32 = arith.constant 0 : i32
    %c0_i32_0 = arith.constant 0 : i32
    %c0_i32_1 = arith.constant 0 : i32
    %c0_i32_2 = arith.constant 0 : i32
    return %c0_i32, %c0_i32_0, %c0_i32_1 : i32, i32, i32
  }
  func.func @transform_9(%arg0: i32) -> (i32, i32, i32) {
    %c0_i32 = arith.constant 0 : i32
    %c0_i32_0 = arith.constant 0 : i32
    %c0_i32_1 = arith.constant 0 : i32
    %c0_i32_2 = arith.constant 0 : i32
    return %c0_i32, %c0_i32_0, %c0_i32_1 : i32, i32, i32
  }
  func.func @transform_10(%arg0: i32) -> (i32, i32, i32) {
    %c0_i32 = arith.constant 0 : i32
    %c0_i32_0 = arith.constant 0 : i32
    %c0_i32_1 = arith.constant 0 : i32
    %c0_i32_2 = arith.constant 0 : i32
    return %c0_i32, %c0_i32_0, %c0_i32_1 : i32, i32, i32
  }
  func.func @transform_11(%arg0: i32) -> (i32, i32, i32) {
    %c0_i32 = arith.constant 0 : i32
    %c0_i32_0 = arith.constant 0 : i32
    %c0_i32_1 = arith.constant 0 : i32
    %c0_i32_2 = arith.constant 0 : i32
    return %c0_i32, %c0_i32_0, %c0_i32_1 : i32, i32, i32
  }
  func.func @transform_12(%arg0: i32) -> (i32, i32, i32) {
    %c0_i32 = arith.constant 0 : i32
    %c0_i32_0 = arith.constant 0 : i32
    %c0_i32_1 = arith.constant 0 : i32
    %c0_i32_2 = arith.constant 0 : i32
    return %c0_i32, %c0_i32_0, %c0_i32_1 : i32, i32, i32
  }
  func.func @transform_13(%arg0: i32) -> (i32, i32, i32) {
    %c0_i32 = arith.constant 0 : i32
    %c0_i32_0 = arith.constant 0 : i32
    %c0_i32_1 = arith.constant 0 : i32
    %c0_i32_2 = arith.constant 0 : i32
    return %c0_i32, %c0_i32_0, %c0_i32_1 : i32, i32, i32
  }
  func.func @transform_14(%arg0: i32) -> (i32, i32, i32) {
    %c0_i32 = arith.constant 0 : i32
    %c0_i32_0 = arith.constant 0 : i32
    %c0_i32_1 = arith.constant 0 : i32
    %c0_i32_2 = arith.constant 0 : i32
    return %c0_i32, %c0_i32_0, %c0_i32_1 : i32, i32, i32
  }
  func.func @transform_15(%arg0: i32) -> (i32, i32, i32) {
    %c0_i32 = arith.constant 0 : i32
    %c0_i32_0 = arith.constant 0 : i32
    %c0_i32_1 = arith.constant 0 : i32
    %c0_i32_2 = arith.constant 0 : i32
    return %c0_i32, %c0_i32_0, %c0_i32_1 : i32, i32, i32
  }
  func.func @transform_16(%arg0: i32) -> (i32, i32) {
    %c0_i32 = arith.constant 0 : i32
    %c0_i32_0 = arith.constant 0 : i32
    %c0_i32_1 = arith.constant 0 : i32
    return %c0_i32, %c0_i32_0 : i32, i32
  }
  func.func @transform_17(%arg0: i32) -> (i32, i32) {
    %c0_i32 = arith.constant 0 : i32
    %c0_i32_0 = arith.constant 0 : i32
    %c0_i32_1 = arith.constant 0 : i32
    return %c0_i32, %c0_i32_0 : i32, i32
  }
  func.func @transform_18(%arg0: i32) -> (i32, i32) {
    %c0_i32 = arith.constant 0 : i32
    %c0_i32_0 = arith.constant 0 : i32
    %c0_i32_1 = arith.constant 0 : i32
    return %c0_i32, %c0_i32_0 : i32, i32
  }
}

</mosaic_0001>

<llo_original>
// kernel: bert_cls_forward.1
$region0: #{bert_cls_forward.1}
  #allocation0 [shape = 'u32[]', space=smem, size = 0x4, offset = 0x4, fixed_abs, tag = 'smem constant byte address 0x4 - core index']
  #allocation1 [shape = 'u32[144,128]{1,0:T(1,128)}', space=vmem, size = 0x12000, scoped, tag = 'internal scratch']
  %s0 = inlined_call_operand.vmem [shape: f32[16,32], index: 0, kind: input, shape index: {}]
  %s1 = inlined_call_operand.vmem [shape: f32[2,8], index: 1, kind: input, shape index: {}]
  %s2 = inlined_call_operand.vmem [shape: f32[1,32], index: 2, kind: input, shape index: {}]
  %s3 = inlined_call_operand.vmem [shape: f32[1,32], index: 3, kind: input, shape index: {}]
  %s4 = inlined_call_operand.vmem [shape: f32[2,32,96], index: 4, kind: input, shape index: {}]
  %s5 = inlined_call_operand.vmem [shape: f32[2,1,96], index: 5, kind: input, shape index: {}]
  %s6 = inlined_call_operand.vmem [shape: f32[2,32,32], index: 6, kind: input, shape index: {}]
  %s7 = inlined_call_operand.vmem [shape: f32[2,1,32], index: 7, kind: input, shape index: {}]
  %s8 = inlined_call_operand.vmem [shape: f32[2,1,32], index: 8, kind: input, shape index: {}]
  %s9 = inlined_call_operand.vmem [shape: f32[2,1,32], index: 9, kind: input, shape index: {}]
  %s10 = inlined_call_operand.vmem [shape: f32[2,32,64], index: 10, kind: input, shape index: {}]
  %s11 = inlined_call_operand.vmem [shape: f32[2,1,64], index: 11, kind: input, shape index: {}]
  %s12 = inlined_call_operand.vmem [shape: f32[2,64,32], index: 12, kind: input, shape index: {}]
  %s13 = inlined_call_operand.vmem [shape: f32[2,1,32], index: 13, kind: input, shape index: {}]
  %s14 = inlined_call_operand.vmem [shape: f32[2,1,32], index: 14, kind: input, shape index: {}]
  %s15 = inlined_call_operand.vmem [shape: f32[2,1,32], index: 15, kind: input, shape index: {}]
  %s16 = inlined_call_operand.vmem [shape: f32[32,128], index: 16, kind: input, shape index: {}]
  %s17 = inlined_call_operand.vmem [shape: f32[1,128], index: 17, kind: input, shape index: {}]
  %s18 = inlined_call_operand.hbm [shape: f32[2,128], index: 18, kind: output, shape index: {}]
  %s19 = sld [smem:[#allocation0]]
  $region82: #{bert_cls_forward.1} parent=0
    _
  %s21 = ssub.s32 1, %s19
  %s22 = scalar_select 0, %s21, %s19
  $region1: #{bert_cls_forward.1} parent=0
    #allocation2 [shape = 'u8[1024]{0}', space=vmem, size = 0x400, scoped, tag = 'output window, operand 0, single buffered']
    #allocation3 [shape = 's32[1]{0}', space=sflag, size = 0x4, scoped, tag = 'scoped memory for bert_cls_forward.1']
    %23 = vsyncpa [#allocation3], 0
    // Predicated region
    $region2: #{bert_cls_forward.1} parent=1 // pred_check
      _
    $region3: #{bert_cls_forward.1} parent=1 // pred_check_branch
      %25 = sbr.rel (0) target = $region5
    $region4: #{bert_cls_forward.1} parent=1 // pred_region
      _
    $region5: #{bert_cls_forward.1} parent=1 // pred_fallthru
      _
    // Predicated region
    $region6: #{bert_cls_forward.1} parent=1 // pred_check
      _
    $region7: #{bert_cls_forward.1} parent=1 // pred_check_branch
      %27 = sbr.rel (0) target = $region9
    $region8: #{bert_cls_forward.1} parent=1 // pred_region
      _
    $region9: #{bert_cls_forward.1} parent=1 // pred_fallthru
      _
    // Predicated region
    $region10: #{bert_cls_forward.1} parent=1 // pred_check
      _
    $region11: #{bert_cls_forward.1} parent=1 // pred_check_branch
      %29 = sbr.rel (0) target = $region13
    $region12: #{bert_cls_forward.1} parent=1 // pred_region
      _
    $region13: #{bert_cls_forward.1} parent=1 // pred_fallthru
      _
    // Predicated region
    $region14: #{bert_cls_forward.1} parent=1 // pred_check
      _
    $region15: #{bert_cls_forward.1} parent=1 // pred_check_branch
      %31 = sbr.rel (0) target = $region17
    $region16: #{bert_cls_forward.1} parent=1 // pred_region
      _
    $region17: #{bert_cls_forward.1} parent=1 // pred_fallthru
      _
    // Predicated region
    $region18: #{bert_cls_forward.1} parent=1 // pred_check
      _
    $region19: #{bert_cls_forward.1} parent=1 // pred_check_branch
      %33 = sbr.rel (0) target = $region21
    $region20: #{bert_cls_forward.1} parent=1 // pred_region
      _
    $region21: #{bert_cls_forward.1} parent=1 // pred_fallthru
      _
    // Predicated region
    $region22: #{bert_cls_forward.1} parent=1 // pred_check
      _
    $region23: #{bert_cls_forward.1} parent=1 // pred_check_branch
      %35 = sbr.rel (0) target = $region25
    $region24: #{bert_cls_forward.1} parent=1 // pred_region
      _
    $region25: #{bert_cls_forward.1} parent=1 // pred_fallthru
      _
    // Predicated region
    $region26: #{bert_cls_forward.1} parent=1 // pred_check
      _
    $region27: #{bert_cls_forward.1} parent=1 // pred_check_branch
      %37 = sbr.rel (0) target = $region29
    $region28: #{bert_cls_forward.1} parent=1 // pred_region
      _
    $region29: #{bert_cls_forward.1} parent=1 // pred_fallthru
      _
    // Predicated region
    $region30: #{bert_cls_forward.1} parent=1 // pred_check
      _
    $region31: #{bert_cls_forward.1} parent=1 // pred_check_branch
      %39 = sbr.rel (0) target = $region33
    $region32: #{bert_cls_forward.1} parent=1 // pred_region
      _
    $region33: #{bert_cls_forward.1} parent=1 // pred_fallthru
      _
    // Predicated region
    $region34: #{bert_cls_forward.1} parent=1 // pred_check
      _
    $region35: #{bert_cls_forward.1} parent=1 // pred_check_branch
      %41 = sbr.rel (0) target = $region37
    $region36: #{bert_cls_forward.1} parent=1 // pred_region
      _
    $region37: #{bert_cls_forward.1} parent=1 // pred_fallthru
      _
    // Predicated region
    $region38: #{bert_cls_forward.1} parent=1 // pred_check
      _
    $region39: #{bert_cls_forward.1} parent=1 // pred_check_branch
      %43 = sbr.rel (0) target = $region41
    $region40: #{bert_cls_forward.1} parent=1 // pred_region
      _
    $region41: #{bert_cls_forward.1} parent=1 // pred_fallthru
      _
    // Predicated region
    $region42: #{bert_cls_forward.1} parent=1 // pred_check
      _
    $region43: #{bert_cls_forward.1} parent=1 // pred_check_branch
      %45 = sbr.rel (0) target = $region45
    $region44: #{bert_cls_forward.1} parent=1 // pred_region
      _
    $region45: #{bert_cls_forward.1} parent=1 // pred_fallthru
      _
    // Predicated region
    $region46: #{bert_cls_forward.1} parent=1 // pred_check
      _
    $region47: #{bert_cls_forward.1} parent=1 // pred_check_branch
      %47 = sbr.rel (0) target = $region49
    $region48: #{bert_cls_forward.1} parent=1 // pred_region
      _
    $region49: #{bert_cls_forward.1} parent=1 // pred_fallthru
      _
    // Predicated region
    $region50: #{bert_cls_forward.1} parent=1 // pred_check
      _
    $region51: #{bert_cls_forward.1} parent=1 // pred_check_branch
      %49 = sbr.rel (0) target = $region53
    $region52: #{bert_cls_forward.1} parent=1 // pred_region
      _
    $region53: #{bert_cls_forward.1} parent=1 // pred_fallthru
      _
    // Predicated region
    $region54: #{bert_cls_forward.1} parent=1 // pred_check
      _
    $region55: #{bert_cls_forward.1} parent=1 // pred_check_branch
      %51 = sbr.rel (0) target = $region57
    $region56: #{bert_cls_forward.1} parent=1 // pred_region
      _
    $region57: #{bert_cls_forward.1} parent=1 // pred_fallthru
      _
    // Predicated region
    $region58: #{bert_cls_forward.1} parent=1 // pred_check
      _
    $region59: #{bert_cls_forward.1} parent=1 // pred_check_branch
      %53 = sbr.rel (0) target = $region61
    $region60: #{bert_cls_forward.1} parent=1 // pred_region
      _
    $region61: #{bert_cls_forward.1} parent=1 // pred_fallthru
      _
    // Predicated region
    $region62: #{bert_cls_forward.1} parent=1 // pred_check
      _
    $region63: #{bert_cls_forward.1} parent=1 // pred_check_branch
      %55 = sbr.rel (0) target = $region65
    $region64: #{bert_cls_forward.1} parent=1 // pred_region
      _
    $region65: #{bert_cls_forward.1} parent=1 // pred_fallthru
      _
    // Predicated region
    $region66: #{bert_cls_forward.1} parent=1 // pred_check
      _
    $region67: #{bert_cls_forward.1} parent=1 // pred_check_branch
      %57 = sbr.rel (0) target = $region69
    $region68: #{bert_cls_forward.1} parent=1 // pred_region
      _
    $region69: #{bert_cls_forward.1} parent=1 // pred_fallthru
      _
    // Predicated region
    $region70: #{bert_cls_forward.1} parent=1 // pred_check
      _
    $region71: #{bert_cls_forward.1} parent=1 // pred_check_branch
      %59 = sbr.rel (0) target = $region73
    $region72: #{bert_cls_forward.1} parent=1 // pred_region
      _
    $region73: #{bert_cls_forward.1} parent=1 // pred_fallthru
      _
    %v60 = vld [vmem:[%s1] sm:$0x3]
    %v61 = vld [vmem:[%s0] sm:$0xff]
    %v62 = vld [vmem:[%s0 + $0x8] sm:$0xff]
    %v63 = vld [vmem:[%s2] sm:$0x1]
    %v64 = vld [vmem:[%s3] sm:$0x1]
    %vm65 = vcmask 261120
    %v66 = vsel %vm65, %v61, 0.0
    %67 = vadd.xlane.f32.xlu0 %v66
    %v68 = vpop.xlane.xlu0 %67
    %v69 = vsel %vm65, %v62, 0.0
    %70 = vadd.xlane.f32.xlu0 %v69
    %v71 = vpop.xlane.xlu0 %70
    %v72 = vrcp.pop 32.0
    %v73 = vmul.f32 %v68, %v72
    %v74 = vmul.f32 %v71, %v72
    %v75 = vsub.f32 %v61, %v73
    %v76 = vsub.f32 %v62, %v74
    %v77 = vmul.f32 %v75, %v75
    %v78 = vmul.f32 %v76, %v76
    %v79 = vsel %vm65, %v77, 0.0
    %80 = vadd.xlane.f32.xlu0 %v79
    %v81 = vpop.xlane.xlu0 %80
    %v82 = vsel %vm65, %v78, 0.0
    %83 = vadd.xlane.f32.xlu0 %v82
    %v84 = vpop.xlane.xlu0 %83
    %v85 = vmul.f32 %v81, %v72
    %v86 = vmul.f32 %v84, %v72
    %v87 = vadd.f32 %v85, 1e-12
    %v88 = vadd.f32 %v86, 1e-12
    %v89 = vrsqrt.pop %v87
    %v90 = vrsqrt.pop %v88
    %v91 = vmul.f32 %v75, %v89
    %v92 = vmul.f32 %v76, %v90
    %v94 = vlaneseq
    %v95 = vshrl.u32 %v94, 7
    %v96 = vsub.s32 0, %v95
    %v97 = vrot.slane %v63, %v96
    %v99 = vmul.f32 %v91, %v97
    %v100 = vmul.f32 %v92, %v97
    %v102 = vlaneseq
    %v103 = vshrl.u32 %v102, 7
    %v104 = vsub.s32 0, %v103
    %v105 = vrot.slane %v64, %v104
    %v107 = vadd.f32 %v99, %v105
    %v108 = vadd.f32 %v100, %v105
    %v109 = vld [vmem:[%s4] sm:$0xff]
    %v110 = vld [vmem:[%s4 + $0x8] sm:$0xff]
    %v111 = vld [vmem:[%s4 + $0x10] sm:$0xff]
    %v112 = vld [vmem:[%s4 + $0x18] sm:$0xff]
    %v113 = vld [vmem:[%s5] sm:$0x1]
    %v115 = vlaneseq
    %v116 = vshrl.u32 %v115, 7
    %v117 = vsub.s32 0, %v116
    %v118 = vrot.slane %v113, %v117
    %v121 = vsel %vm65, %v107, 0
    %v124 = vsel %vm65, %v108, 0
    %126 = vmatprep.subr.mxu0 0.0
    %127 = vmatpush1.msra.mxu0 %v109
    %128 = vmatprep.subr.mxu0 0.0
    %129 = vmatpush1.msra.mxu0 %v110
    %130 = vmatprep.subr.mxu0 0.0
    %131 = vmatpush1.msra.mxu0 %v111
    %132 = vmatprep.subr.mxu0 0.0
    %133 = vmatpush1.msra.mxu0 %v112
    %134 = vmatprep.subr.mxu0 0.0
    %135 = vmatpush1.msra.mxu0 0.0
    %136 = vmatprep.subr.mxu0 0.0
    %137 = vmatpush1.msra.mxu0 0.0
    %138 = vmatprep.subr.mxu0 0.0
    %139 = vmatpush1.msra.mxu0 0.0
    %140 = vmatprep.subr.mxu0 0.0
    %141 = vmatpush1.msra.mxu0 0.0
    %142 = vmatprep.subr.mxu0 0.0
    %143 = vmatpush1.msra.mxu0 0.0
    %144 = vmatprep.subr.mxu0 0.0
    %145 = vmatpush1.msra.mxu0 0.0
    %146 = vmatprep.subr.mxu0 0.0
    %147 = vmatpush1.msra.mxu0 0.0
    %148 = vmatprep.subr.mxu0 0.0
    %149 = vmatpush1.msra.mxu0 0.0
    %150 = vmatprep.subr.mxu0 0.0
    %151 = vmatpush1.msra.mxu0 0.0
    %152 = vmatprep.subr.mxu0 0.0
    %153 = vmatpush1.msra.mxu0 0.0
    %154 = vmatprep.subr.mxu0 0.0
    %155 = vmatpush1.msra.mxu0 0.0
    %156 = vmatprep.subr.mxu0 0.0
    %157 = vmatpush1.msra.mxu0 0.0
    %158 = vmatprep.subr.mxu0 0.0
    %159 = vmatpush1.msra.mxu0 0.0
    %160 = vmatprep.subr.mxu0 0.0
    %161 = vmatpush1.msra.mxu0 0.0
    %162 = vmatprep.subr.mxu0 0.0
    %163 = vmatpush1.msra.mxu0 0.0
    %164 = vmatprep.subr.mxu0 0.0
    %165 = vmatpush1.msra.mxu0 0.0
    %166 = vmatprep.subr.mxu0 0.0
    %167 = vmatpush1.msra.mxu0 0.0
    %168 = vmatprep.subr.mxu0 0.0
    %169 = vmatpush1.msra.mxu0 0.0
    %170 = vmatprep.subr.mxu0 0.0
    %171 = vmatpush1.msra.mxu0 0.0
    %172 = vmatprep.subr.mxu0 0.0
    %173 = vmatpush1.msra.mxu0 0.0
    %174 = vmatprep.subr.mxu0 0.0
    %175 = vmatpush1.msra.mxu0 0.0
    %176 = vmatprep.subr.mxu0 0.0
    %177 = vmatpush1.msra.mxu0 0.0
    %178 = vmatprep.subr.mxu0 0.0
    %179 = vmatpush1.msra.mxu0 0.0
    %180 = vmatprep.subr.mxu0 0.0
    %181 = vmatpush1.msra.mxu0 0.0
    %182 = vmatprep.subr.mxu0 0.0
    %183 = vmatpush1.msra.mxu0 0.0
    %184 = vmatprep.subr.mxu0 0.0
    %185 = vmatpush1.msra.mxu0 0.0
    %186 = vmatprep.subr.mxu0 0.0
    %187 = vmatpush1.msra.mxu0 0.0
    %188 = vmatprep.subr.mxu0 0.0
    %189 = vmatpush1.msra.mxu0 0.0
    %190 = vmatprep.mubr.f32.mxu0 0.0
    %191 = vmatmul.mubr.f32.gmra.mrb[0].mxu0 %v121
    %v192 = vpop.f32.mrb[0].mxu0
    %v193 = vadd.f32 %v118, %v192
    %v194 = vpop.f32.mrb[0].mxu0
    %195 = vmatprep.mubr.f32.mxu0 0.0
    %196 = vmatmul.mubr.f32.gmra.mrb[0].mxu0 %v124
    %v197 = vpop.f32.mrb[0].mxu0
    %v198 = vadd.f32 %v118, %v197
    %v199 = vpop.f32.mrb[0].mxu0
    %200 = vdwg.mxu0
    %202 = vrot.lane.b32.xlu0 %v193, 96
    %v203 = vpop.permute.xlu0 %202
    %vm204 = vcmask 64512
    %v205 = vsel %vm204, %v193, 0
    %v207 = vsel %vm204, %v203, 0
    %209 = vmatprep.subr.mxu0 0.0
    %210 = vmatpush1.xpose.msra.mxu0 %v207
    %211 = vmatprep.subr.mxu0 0.0
    %212 = vmatpush1.xpose.msra.mxu0 0.0
    %213 = vmatprep.subr.mxu0 0.0
    %214 = vmatpush1.xpose.msra.mxu0 0.0
    %215 = vmatprep.subr.mxu0 0.0
    %216 = vmatpush1.xpose.msra.mxu0 0.0
    %217 = vmatprep.subr.mxu0 0.0
    %218 = vmatpush1.xpose.msra.mxu0 0.0
    %219 = vmatprep.subr.mxu0 0.0
    %220 = vmatpush1.xpose.msra.mxu0 0.0
    %221 = vmatprep.subr.mxu0 0.0
    %222 = vmatpush1.xpose.msra.mxu0 0.0
    %223 = vmatprep.subr.mxu0 0.0
    %224 = vmatpush1.xpose.msra.mxu0 0.0
    %225 = vmatprep.subr.mxu0 0.0
    %226 = vmatpush1.xpose.msra.mxu0 0.0
    %227 = vmatprep.subr.mxu0 0.0
    %228 = vmatpush1.xpose.msra.mxu0 0.0
    %229 = vmatprep.subr.mxu0 0.0
    %230 = vmatpush1.xpose.msra.mxu0 0.0
    %231 = vmatprep.subr.mxu0 0.0
    %232 = vmatpush1.xpose.msra.mxu0 0.0
    %233 = vmatprep.subr.mxu0 0.0
    %234 = vmatpush1.xpose.msra.mxu0 0.0
    %235 = vmatprep.subr.mxu0 0.0
    %236 = vmatpush1.xpose.msra.mxu0 0.0
    %237 = vmatprep.subr.mxu0 0.0
    %238 = vmatpush1.xpose.msra.mxu0 0.0
    %239 = vmatprep.subr.mxu0 0.0
    %240 = vmatpush1.xpose.msra.mxu0 0.0
    %241 = vmatprep.subr.mxu0 0.0
    %242 = vmatpush1.xpose.msra.mxu0 0.0
    %243 = vmatprep.subr.mxu0 0.0
    %244 = vmatpush1.xpose.msra.mxu0 0.0
    %245 = vmatprep.subr.mxu0 0.0
    %246 = vmatpush1.xpose.msra.mxu0 0.0
    %247 = vmatprep.subr.mxu0 0.0
    %248 = vmatpush1.xpose.msra.mxu0 0.0
    %249 = vmatprep.subr.mxu0 0.0
    %250 = vmatpush1.xpose.msra.mxu0 0.0
    %251 = vmatprep.subr.mxu0 0.0
    %252 = vmatpush1.xpose.msra.mxu0 0.0
    %253 = vmatprep.subr.mxu0 0.0
    %254 = vmatpush1.xpose.msra.mxu0 0.0
    %255 = vmatprep.subr.mxu0 0.0
    %256 = vmatpush1.xpose.msra.mxu0 0.0
    %257 = vmatprep.subr.mxu0 0.0
    %258 = vmatpush1.xpose.msra.mxu0 0.0
    %259 = vmatprep.subr.mxu0 0.0
    %260 = vmatpush1.xpose.msra.mxu0 0.0
    %261 = vmatprep.subr.mxu0 0.0
    %262 = vmatpush1.xpose.msra.mxu0 0.0
    %263 = vmatprep.subr.mxu0 0.0
    %264 = vmatpush1.xpose.msra.mxu0 0.0
    %265 = vmatprep.subr.mxu0 0.0
    %266 = vmatpush1.xpose.msra.mxu0 0.0
    %267 = vmatprep.subr.mxu0 0.0
    %268 = vmatpush1.xpose.msra.mxu0 0.0
    %269 = vmatprep.subr.mxu0 0.0
    %270 = vmatpush1.xpose.msra.mxu0 0.0
    %271 = vmatprep.subr.mxu0 0.0
    %272 = vmatpush1.xpose.msra.mxu0 0.0
    %273 = vmatprep.mubr.f32.mxu0 0.0
    %274 = vmatmul.mubr.f32.gmra.mrb[0].mxu0 %v205
    %v275 = vpop.f32.mrb[0].mxu0
    %v276 = vadd.f32 0.0, %v275
    %v277 = vpop.f32.mrb[0].mxu0
    %278 = vdwg.mxu0
    %v279 = vmul.f32 %v276, 0.35355338
    %v280 = vlaneseq
    %v281 = vshrl.u32 %v280, 7
    %v282 = vsub.s32 0, %v281
    %v283 = vrot.slane %v60, %v282
    %v284 = vadd.f32 %v279, %v283
    %v285 = vsel %vm204, %v284, -inf
    %286 = vmax.xlane.f32.xlu0 %v285
    %v287 = vpop.xlane.xlu0 %286
    %v288 = vsub.f32 %v284, %v287
    %v289 = vmul.f32 %v288, 1.442695
    %v290 = vpow.pop %v289
    %v291 = vsel %vm204, %v290, 0.0
    %292 = vadd.xlane.f32.xlu0 %v291
    %v293 = vpop.xlane.xlu0 %292
    %v294 = vrcp.pop %v293
    %v295 = vmul.f32 %v290, %v294
    %296 = vrot.lane.b32.xlu0 %v193, 64
    %v297 = vpop.permute.xlu0 %296
    %v300 = vsel %vm204, %v295, 0
    %302 = vmatprep.subr.mxu0 0.0
    %303 = vmatpush1.msra.mxu0 %v297
    %304 = vmatprep.subr.mxu0 0.0
    %305 = vmatpush1.msra.mxu0 0.0
    %306 = vmatprep.subr.mxu0 0.0
    %307 = vmatpush1.msra.mxu0 0.0
    %308 = vmatprep.subr.mxu0 0.0
    %309 = vmatpush1.msra.mxu0 0.0
    %310 = vmatprep.subr.mxu0 0.0
    %311 = vmatpush1.msra.mxu0 0.0
    %312 = vmatprep.subr.mxu0 0.0
    %313 = vmatpush1.msra.mxu0 0.0
    %314 = vmatprep.subr.mxu0 0.0
    %315 = vmatpush1.msra.mxu0 0.0
    %316 = vmatprep.subr.mxu0 0.0
    %317 = vmatpush1.msra.mxu0 0.0
    %318 = vmatprep.subr.mxu0 0.0
    %319 = vmatpush1.msra.mxu0 0.0
    %320 = vmatprep.subr.mxu0 0.0
    %321 = vmatpush1.msra.mxu0 0.0
    %322 = vmatprep.subr.mxu0 0.0
    %323 = vmatpush1.msra.mxu0 0.0
    %324 = vmatprep.subr.mxu0 0.0
    %325 = vmatpush1.msra.mxu0 0.0
    %326 = vmatprep.subr.mxu0 0.0
    %327 = vmatpush1.msra.mxu0 0.0
    %328 = vmatprep.subr.mxu0 0.0
    %329 = vmatpush1.msra.mxu0 0.0
    %330 = vmatprep.subr.mxu0 0.0
    %331 = vmatpush1.msra.mxu0 0.0
    %332 = vmatprep.subr.mxu0 0.0
    %333 = vmatpush1.msra.mxu0 0.0
    %334 = vmatprep.subr.mxu0 0.0
    %335 = vmatpush1.msra.mxu0 0.0
    %336 = vmatprep.subr.mxu0 0.0
    %337 = vmatpush1.msra.mxu0 0.0
    %338 = vmatprep.subr.mxu0 0.0
    %339 = vmatpush1.msra.mxu0 0.0
    %340 = vmatprep.subr.mxu0 0.0
    %341 = vmatpush1.msra.mxu0 0.0
    %342 = vmatprep.subr.mxu0 0.0
    %343 = vmatpush1.msra.mxu0 0.0
    %344 = vmatprep.subr.mxu0 0.0
    %345 = vmatpush1.msra.mxu0 0.0
    %346 = vmatprep.subr.mxu0 0.0
    %347 = vmatpush1.msra.mxu0 0.0
    %348 = vmatprep.subr.mxu0 0.0
    %349 = vmatpush1.msra.mxu0 0.0
    %350 = vmatprep.subr.mxu0 0.0
    %351 = vmatpush1.msra.mxu0 0.0
    %352 = vmatprep.subr.mxu0 0.0
    %353 = vmatpush1.msra.mxu0 0.0
    %354 = vmatprep.subr.mxu0 0.0
    %355 = vmatpush1.msra.mxu0 0.0
    %356 = vmatprep.subr.mxu0 0.0
    %357 = vmatpush1.msra.mxu0 0.0
    %358 = vmatprep.subr.mxu0 0.0
    %359 = vmatpush1.msra.mxu0 0.0
    %360 = vmatprep.subr.mxu0 0.0
    %361 = vmatpush1.msra.mxu0 0.0
    %362 = vmatprep.subr.mxu0 0.0
    %363 = vmatpush1.msra.mxu0 0.0
    %364 = vmatprep.subr.mxu0 0.0
    %365 = vmatpush1.msra.mxu0 0.0
    %366 = vmatprep.mubr.f32.mxu0 0.0
    %367 = vmatmul.mubr.f32.gmra.mrb[0].mxu0 %v300
    %v368 = vpop.f32.mrb[0].mxu0
    %v369 = vadd.f32 0.0, %v368
    %v370 = vpop.f32.mrb[0].mxu0
    %371 = vdwg.mxu0
    %372 = vrot.lane.b32.xlu0 %v193, 120
    %v373 = vpop.permute.xlu0 %372
    %374 = vrot.lane.b32.xlu0 %v193, 88
    %v375 = vpop.permute.xlu0 %374
    %v376 = vsel %vm204, %v373, 0
    %v378 = vsel %vm204, %v375, 0
    %380 = vmatprep.subr.mxu0 0.0
    %381 = vmatpush1.xpose.msra.mxu0 %v378
    %382 = vmatprep.subr.mxu0 0.0
    %383 = vmatpush1.xpose.msra.mxu0 0.0
    %384 = vmatprep.subr.mxu0 0.0
    %385 = vmatpush1.xpose.msra.mxu0 0.0
    %386 = vmatprep.subr.mxu0 0.0
    %387 = vmatpush1.xpose.msra.mxu0 0.0
    %388 = vmatprep.subr.mxu0 0.0
    %389 = vmatpush1.xpose.msra.mxu0 0.0
    %390 = vmatprep.subr.mxu0 0.0
    %391 = vmatpush1.xpose.msra.mxu0 0.0
    %392 = vmatprep.subr.mxu0 0.0
    %393 = vmatpush1.xpose.msra.mxu0 0.0
    %394 = vmatprep.subr.mxu0 0.0
    %395 = vmatpush1.xpose.msra.mxu0 0.0
    %396 = vmatprep.subr.mxu0 0.0
    %397 = vmatpush1.xpose.msra.mxu0 0.0
    %398 = vmatprep.subr.mxu0 0.0
    %399 = vmatpush1.xpose.msra.mxu0 0.0
    %400 = vmatprep.subr.mxu0 0.0
    %401 = vmatpush1.xpose.msra.mxu0 0.0
    %402 = vmatprep.subr.mxu0 0.0
    %403 = vmatpush1.xpose.msra.mxu0 0.0
    %404 = vmatprep.subr.mxu0 0.0
    %405 = vmatpush1.xpose.msra.mxu0 0.0
    %406 = vmatprep.subr.mxu0 0.0
    %407 = vmatpush1.xpose.msra.mxu0 0.0
    %408 = vmatprep.subr.mxu0 0.0
    %409 = vmatpush1.xpose.msra.mxu0 0.0
    %410 = vmatprep.subr.mxu0 0.0
    %411 = vmatpush1.xpose.msra.mxu0 0.0
    %412 = vmatprep.subr.mxu0 0.0
    %413 = vmatpush1.xpose.msra.mxu0 0.0
    %414 = vmatprep.subr.mxu0 0.0
    %415 = vmatpush1.xpose.msra.mxu0 0.0
    %416 = vmatprep.subr.mxu0 0.0
    %417 = vmatpush1.xpose.msra.mxu0 0.0
    %418 = vmatprep.subr.mxu0 0.0
    %419 = vmatpush1.xpose.msra.mxu0 0.0
    %420 = vmatprep.subr.mxu0 0.0
    %421 = vmatpush1.xpose.msra.mxu0 0.0
    %422 = vmatprep.subr.mxu0 0.0
    %423 = vmatpush1.xpose.msra.mxu0 0.0
    %424 = vmatprep.subr.mxu0 0.0
    %425 = vmatpush1.xpose.msra.mxu0 0.0
    %426 = vmatprep.subr.mxu0 0.0
    %427 = vmatpush1.xpose.msra.mxu0 0.0
    %428 = vmatprep.subr.mxu0 0.0
    %429 = vmatpush1.xpose.msra.mxu0 0.0
    %430 = vmatprep.subr.mxu0 0.0
    %431 = vmatpush1.xpose.msra.mxu0 0.0
    %432 = vmatprep.subr.mxu0 0.0
    %433 = vmatpush1.xpose.msra.mxu0 0.0
    %434 = vmatprep.subr.mxu0 0.0
    %435 = vmatpush1.xpose.msra.mxu0 0.0
    %436 = vmatprep.subr.mxu0 0.0
    %437 = vmatpush1.xpose.msra.mxu0 0.0
    %438 = vmatprep.subr.mxu0 0.0
    %439 = vmatpush1.xpose.msra.mxu0 0.0
    %440 = vmatprep.subr.mxu0 0.0
    %441 = vmatpush1.xpose.msra.mxu0 0.0
    %442 = vmatprep.subr.mxu0 0.0
    %443 = vmatpush1.xpose.msra.mxu0 0.0
    %444 = vmatprep.mubr.f32.mxu0 0.0
    %445 = vmatmul.mubr.f32.gmra.mrb[0].mxu0 %v376
    %v446 = vpop.f32.mrb[0].mxu0
    %v447 = vadd.f32 0.0, %v446
    %v448 = vpop.f32.mrb[0].mxu0
    %449 = vdwg.mxu0
    %v450 = vmul.f32 %v447, 0.35355338
    %v451 = vadd.f32 %v450, %v283
    %v452 = vsel %vm204, %v451, -inf
    %453 = vmax.xlane.f32.xlu0 %v452
    %v454 = vpop.xlane.xlu0 %453
    %v455 = vsub.f32 %v451, %v454
    %v456 = vmul.f32 %v455, 1.442695
    %v457 = vpow.pop %v456
    %v458 = vsel %vm204, %v457, 0.0
    %459 = vadd.xlane.f32.xlu0 %v458
    %v460 = vpop.xlane.xlu0 %459
    %v461 = vrcp.pop %v460
    %v462 = vmul.f32 %v457, %v461
    %463 = vrot.lane.b32.xlu0 %v193, 56
    %v464 = vpop.permute.xlu0 %463
    %v467 = vsel %vm204, %v462, 0
    %469 = vmatprep.subr.mxu0 0.0
    %470 = vmatpush1.msra.mxu0 %v464
    %471 = vmatprep.subr.mxu0 0.0
    %472 = vmatpush1.msra.mxu0 0.0
    %473 = vmatprep.subr.mxu0 0.0
    %474 = vmatpush1.msra.mxu0 0.0
    %475 = vmatprep.subr.mxu0 0.0
    %476 = vmatpush1.msra.mxu0 0.0
    %477 = vmatprep.subr.mxu0 0.0
    %478 = vmatpush1.msra.mxu0 0.0
    %479 = vmatprep.subr.mxu0 0.0
    %480 = vmatpush1.msra.mxu0 0.0
    %481 = vmatprep.subr.mxu0 0.0
    %482 = vmatpush1.msra.mxu0 0.0
    %483 = vmatprep.subr.mxu0 0.0
    %484 = vmatpush1.msra.mxu0 0.0
    %485 = vmatprep.subr.mxu0 0.0
    %486 = vmatpush1.msra.mxu0 0.0
    %487 = vmatprep.subr.mxu0 0.0
    %488 = vmatpush1.msra.mxu0 0.0
    %489 = vmatprep.subr.mxu0 0.0
    %490 = vmatpush1.msra.mxu0 0.0
    %491 = vmatprep.subr.mxu0 0.0
    %492 = vmatpush1.msra.mxu0 0.0
    %493 = vmatprep.subr.mxu0 0.0
    %494 = vmatpush1.msra.mxu0 0.0
    %495 = vmatprep.subr.mxu0 0.0
    %496 = vmatpush1.msra.mxu0 0.0
    %497 = vmatprep.subr.mxu0 0.0
    %498 = vmatpush1.msra.mxu0 0.0
    %499 = vmatprep.subr.mxu0 0.0
    %500 = vmatpush1.msra.mxu0 0.0
    %501 = vmatprep.subr.mxu0 0.0
    %502 = vmatpush1.msra.mxu0 0.0
    %503 = vmatprep.subr.mxu0 0.0
    %504 = vmatpush1.msra.mxu0 0.0
    %505 = vmatprep.subr.mxu0 0.0
    %506 = vmatpush1.msra.mxu0 0.0
    %507 = vmatprep.subr.mxu0 0.0
    %508 = vmatpush1.msra.mxu0 0.0
    %509 = vmatprep.subr.mxu0 0.0
    %510 = vmatpush1.msra.mxu0 0.0
    %511 = vmatprep.subr.mxu0 0.0
    %512 = vmatpush1.msra.mxu0 0.0
    %513 = vmatprep.subr.mxu0 0.0
    %514 = vmatpush1.msra.mxu0 0.0
    %515 = vmatprep.subr.mxu0 0.0
    %516 = vmatpush1.msra.mxu0 0.0
    %517 = vmatprep.subr.mxu0 0.0
    %518 = vmatpush1.msra.mxu0 0.0
    %519 = vmatprep.subr.mxu0 0.0
    %520 = vmatpush1.msra.mxu0 0.0
    %521 = vmatprep.subr.mxu0 0.0
    %522 = vmatpush1.msra.mxu0 0.0
    %523 = vmatprep.subr.mxu0 0.0
    %524 = vmatpush1.msra.mxu0 0.0
    %525 = vmatprep.subr.mxu0 0.0
    %526 = vmatpush1.msra.mxu0 0.0
    %527 = vmatprep.subr.mxu0 0.0
    %528 = vmatpush1.msra.mxu0 0.0
    %529 = vmatprep.subr.mxu0 0.0
    %530 = vmatpush1.msra.mxu0 0.0
    %531 = vmatprep.subr.mxu0 0.0
    %532 = vmatpush1.msra.mxu0 0.0
    %533 = vmatprep.mubr.f32.mxu0 0.0
    %534 = vmatmul.mubr.f32.gmra.mrb[0].mxu0 %v467
    %v535 = vpop.f32.mrb[0].mxu0
    %v536 = vadd.f32 0.0, %v535
    %v537 = vpop.f32.mrb[0].mxu0
    %538 = vdwg.mxu0
    %539 = vrot.lane.b32.xlu0 %v193, 112
    %v540 = vpop.permute.xlu0 %539
    %541 = vrot.lane.b32.xlu0 %v193, 80
    %v542 = vpop.permute.xlu0 %541
    %v543 = vsel %vm204, %v540, 0
    %v545 = vsel %vm204, %v542, 0
    %547 = vmatprep.subr.mxu0 0.0
    %548 = vmatpush1.xpose.msra.mxu0 %v545
    %549 = vmatprep.subr.mxu0 0.0
    %550 = vmatpush1.xpose.msra.mxu0 0.0
    %551 = vmatprep.subr.mxu0 0.0
    %552 = vmatpush1.xpose.msra.mxu0 0.0
    %553 = vmatprep.subr.mxu0 0.0
    %554 = vmatpush1.xpose.msra.mxu0 0.0
    %555 = vmatprep.subr.mxu0 0.0
    %556 = vmatpush1.xpose.msra.mxu0 0.0
    %557 = vmatprep.subr.mxu0 0.0
    %558 = vmatpush1.xpose.msra.mxu0 0.0
    %559 = vmatprep.subr.mxu0 0.0
    %560 = vmatpush1.xpose.msra.mxu0 0.0
    %561 = vmatprep.subr.mxu0 0.0
    %562 = vmatpush1.xpose.msra.mxu0 0.0
    %563 = vmatprep.subr.mxu0 0.0
    %564 = vmatpush1.xpose.msra.mxu0 0.0
    %565 = vmatprep.subr.mxu0 0.0
    %566 = vmatpush1.xpose.msra.mxu0 0.0
    %567 = vmatprep.subr.mxu0 0.0
    %568 = vmatpush1.xpose.msra.mxu0 0.0
    %569 = vmatprep.subr.mxu0 0.0
    %570 = vmatpush1.xpose.msra.mxu0 0.0
    %571 = vmatprep.subr.mxu0 0.0
    %572 = vmatpush1.xpose.msra.mxu0 0.0
    %573 = vmatprep.subr.mxu0 0.0
    %574 = vmatpush1.xpose.msra.mxu0 0.0
    %575 = vmatprep.subr.mxu0 0.0
    %576 = vmatpush1.xpose.msra.mxu0 0.0
    %577 = vmatprep.subr.mxu0 0.0
    %578 = vmatpush1.xpose.msra.mxu0 0.0
    %579 = vmatprep.subr.mxu0 0.0
    %580 = vmatpush1.xpose.msra.mxu0 0.0
    %581 = vmatprep.subr.mxu0 0.0
    %582 = vmatpush1.xpose.msra.mxu0 0.0
    %583 = vmatprep.subr.mxu0 0.0
    %584 = vmatpush1.xpose.msra.mxu0 0.0
    %585 = vmatprep.subr.mxu0 0.0
    %586 = vmatpush1.xpose.msra.mxu0 0.0
    %587 = vmatprep.subr.mxu0 0.0
    %588 = vmatpush1.xpose.msra.mxu0 0.0
    %589 = vmatprep.subr.mxu0 0.0
    %590 = vmatpush1.xpose.msra.mxu0 0.0
    %591 = vmatprep.subr.mxu0 0.0
    %592 = vmatpush1.xpose.msra.mxu0 0.0
    %593 = vmatprep.subr.mxu0 0.0
    %594 = vmatpush1.xpose.msra.mxu0 0.0
    %595 = vmatprep.subr.mxu0 0.0
    %596 = vmatpush1.xpose.msra.mxu0 0.0
    %597 = vmatprep.subr.mxu0 0.0
    %598 = vmatpush1.xpose.msra.mxu0 0.0
    %599 = vmatprep.subr.mxu0 0.0
    %600 = vmatpush1.xpose.msra.mxu0 0.0
    %601 = vmatprep.subr.mxu0 0.0
    %602 = vmatpush1.xpose.msra.mxu0 0.0
    %603 = vmatprep.subr.mxu0 0.0
    %604 = vmatpush1.xpose.msra.mxu0 0.0
    %605 = vmatprep.subr.mxu0 0.0
    %606 = vmatpush1.xpose.msra.mxu0 0.0
    %607 = vmatprep.subr.mxu0 0.0
    %608 = vmatpush1.xpose.msra.mxu0 0.0
    %609 = vmatprep.subr.mxu0 0.0
    %610 = vmatpush1.xpose.msra.mxu0 0.0
    %611 = vmatprep.mubr.f32.mxu0 0.0
    %612 = vmatmul.mubr.f32.gmra.mrb[0].mxu0 %v543
    %v613 = vpop.f32.mrb[0].mxu0
    %v614 = vadd.f32 0.0, %v613
    %v615 = vpop.f32.mrb[0].mxu0
    %616 = vdwg.mxu0
    %v617 = vmul.f32 %v614, 0.35355338
    %v618 = vadd.f32 %v617, %v283
    %v619 = vsel %vm204, %v618, -inf
    %620 = vmax.xlane.f32.xlu0 %v619
    %v621 = vpop.xlane.xlu0 %620
    %v622 = vsub.f32 %v618, %v621
    %v623 = vmul.f32 %v622, 1.442695
    %v624 = vpow.pop %v623
    %v625 = vsel %vm204, %v624, 0.0
    %626 = vadd.xlane.f32.xlu0 %v625
    %v627 = vpop.xlane.xlu0 %626
    %v628 = vrcp.pop %v627
    %v629 = vmul.f32 %v624, %v628
    %630 = vrot.lane.b32.xlu0 %v193, 48
    %v631 = vpop.permute.xlu0 %630
    %v634 = vsel %vm204, %v629, 0
    %636 = vmatprep.subr.mxu0 0.0
    %637 = vmatpush1.msra.mxu0 %v631
    %638 = vmatprep.subr.mxu0 0.0
    %639 = vmatpush1.msra.mxu0 0.0
    %640 = vmatprep.subr.mxu0 0.0
    %641 = vmatpush1.msra.mxu0 0.0
    %642 = vmatprep.subr.mxu0 0.0
    %643 = vmatpush1.msra.mxu0 0.0
    %644 = vmatprep.subr.mxu0 0.0
    %645 = vmatpush1.msra.mxu0 0.0
    %646 = vmatprep.subr.mxu0 0.0
    %647 = vmatpush1.msra.mxu0 0.0
    %648 = vmatprep.subr.mxu0 0.0
    %649 = vmatpush1.msra.mxu0 0.0
    %650 = vmatprep.subr.mxu0 0.0
    %651 = vmatpush1.msra.mxu0 0.0
    %652 = vmatprep.subr.mxu0 0.0
    %653 = vmatpush1.msra.mxu0 0.0
    %654 = vmatprep.subr.mxu0 0.0
    %655 = vmatpush1.msra.mxu0 0.0
    %656 = vmatprep.subr.mxu0 0.0
    %657 = vmatpush1.msra.mxu0 0.0
    %658 = vmatprep.subr.mxu0 0.0
    %659 = vmatpush1.msra.mxu0 0.0
    %660 = vmatprep.subr.mxu0 0.0
    %661 = vmatpush1.msra.mxu0 0.0
    %662 = vmatprep.subr.mxu0 0.0
    %663 = vmatpush1.msra.mxu0 0.0
    %664 = vmatprep.subr.mxu0 0.0
    %665 = vmatpush1.msra.mxu0 0.0
    %666 = vmatprep.subr.mxu0 0.0
    %667 = vmatpush1.msra.mxu0 0.0
    %668 = vmatprep.subr.mxu0 0.0
    %669 = vmatpush1.msra.mxu0 0.0
    %670 = vmatprep.subr.mxu0 0.0
    %671 = vmatpush1.msra.mxu0 0.0
    %672 = vmatprep.subr.mxu0 0.0
    %673 = vmatpush1.msra.mxu0 0.0
    %674 = vmatprep.subr.mxu0 0.0
    %675 = vmatpush1.msra.mxu0 0.0
    %676 = vmatprep.subr.mxu0 0.0
    %677 = vmatpush1.msra.mxu0 0.0
    %678 = vmatprep.subr.mxu0 0.0
    %679 = vmatpush1.msra.mxu0 0.0
    %680 = vmatprep.subr.mxu0 0.0
    %681 = vmatpush1.msra.mxu0 0.0
    %682 = vmatprep.subr.mxu0 0.0
    %683 = vmatpush1.msra.mxu0 0.0
    %684 = vmatprep.subr.mxu0 0.0
    %685 = vmatpush1.msra.mxu0 0.0
    %686 = vmatprep.subr.mxu0 0.0
    %687 = vmatpush1.msra.mxu0 0.0
    %688 = vmatprep.subr.mxu0 0.0
    %689 = vmatpush1.msra.mxu0 0.0
    %690 = vmatprep.subr.mxu0 0.0
    %691 = vmatpush1.msra.mxu0 0.0
    %692 = vmatprep.subr.mxu0 0.0
    %693 = vmatpush1.msra.mxu0 0.0
    %694 = vmatprep.subr.mxu0 0.0
    %695 = vmatpush1.msra.mxu0 0.0
    %696 = vmatprep.subr.mxu0 0.0
    %697 = vmatpush1.msra.mxu0 0.0
    %698 = vmatprep.subr.mxu0 0.0
    %699 = vmatpush1.msra.mxu0 0.0
    %700 = vmatprep.mubr.f32.mxu0 0.0
    %701 = vmatmul.mubr.f32.gmra.mrb[0].mxu0 %v634
    %v702 = vpop.f32.mrb[0].mxu0
    %v703 = vadd.f32 0.0, %v702
    %v704 = vpop.f32.mrb[0].mxu0
    %705 = vdwg.mxu0
    %706 = vrot.lane.b32.xlu0 %v193, 104
    %v707 = vpop.permute.xlu0 %706
    %708 = vrot.lane.b32.xlu0 %v193, 72
    %v709 = vpop.permute.xlu0 %708
    %v710 = vsel %vm204, %v707, 0
    %v712 = vsel %vm204, %v709, 0
    %714 = vmatprep.subr.mxu0 0.0
    %715 = vmatpush1.xpose.msra.mxu0 %v712
    %716 = vmatprep.subr.mxu0 0.0
    %717 = vmatpush1.xpose.msra.mxu0 0.0
    %718 = vmatprep.subr.mxu0 0.0
    %719 = vmatpush1.xpose.msra.mxu0 0.0
    %720 = vmatprep.subr.mxu0 0.0
    %721 = vmatpush1.xpose.msra.mxu0 0.0
    %722 = vmatprep.subr.mxu0 0.0
    %723 = vmatpush1.xpose.msra.mxu0 0.0
    %724 = vmatprep.subr.mxu0 0.0
    %725 = vmatpush1.xpose.msra.mxu0 0.0
    %726 = vmatprep.subr.mxu0 0.0
    %727 = vmatpush1.xpose.msra.mxu0 0.0
    %728 = vmatprep.subr.mxu0 0.0
    %729 = vmatpush1.xpose.msra.mxu0 0.0
    %730 = vmatprep.subr.mxu0 0.0
    %731 = vmatpush1.xpose.msra.mxu0 0.0
    %732 = vmatprep.subr.mxu0 0.0
    %733 = vmatpush1.xpose.msra.mxu0 0.0
    %734 = vmatprep.subr.mxu0 0.0
    %735 = vmatpush1.xpose.msra.mxu0 0.0
    %736 = vmatprep.subr.mxu0 0.0
    %737 = vmatpush1.xpose.msra.mxu0 0.0
    %738 = vmatprep.subr.mxu0 0.0
    %739 = vmatpush1.xpose.msra.mxu0 0.0
    %740 = vmatprep.subr.mxu0 0.0
    %741 = vmatpush1.xpose.msra.mxu0 0.0
    %742 = vmatprep.subr.mxu0 0.0
    %743 = vmatpush1.xpose.msra.mxu0 0.0
    %744 = vmatprep.subr.mxu0 0.0
    %745 = vmatpush1.xpose.msra.mxu0 0.0
    %746 = vmatprep.subr.mxu0 0.0
    %747 = vmatpush1.xpose.msra.mxu0 0.0
    %748 = vmatprep.subr.mxu0 0.0
    %749 = vmatpush1.xpose.msra.mxu0 0.0
    %750 = vmatprep.subr.mxu0 0.0
    %751 = vmatpush1.xpose.msra.mxu0 0.0
    %752 = vmatprep.subr.mxu0 0.0
    %753 = vmatpush1.xpose.msra.mxu0 0.0
    %754 = vmatprep.subr.mxu0 0.0
    %755 = vmatpush1.xpose.msra.mxu0 0.0
    %756 = vmatprep.subr.mxu0 0.0
    %757 = vmatpush1.xpose.msra.mxu0 0.0
    %758 = vmatprep.subr.mxu0 0.0
    %759 = vmatpush1.xpose.msra.mxu0 0.0
    %760 = vmatprep.subr.mxu0 0.0
    %761 = vmatpush1.xpose.msra.mxu0 0.0
    %762 = vmatprep.subr.mxu0 0.0
    %763 = vmatpush1.xpose.msra.mxu0 0.0
    %764 = vmatprep.subr.mxu0 0.0
    %765 = vmatpush1.xpose.msra.mxu0 0.0
    %766 = vmatprep.subr.mxu0 0.0
    %767 = vmatpush1.xpose.msra.mxu0 0.0
    %768 = vmatprep.subr.mxu0 0.0
    %769 = vmatpush1.xpose.msra.mxu0 0.0
    %770 = vmatprep.subr.mxu0 0.0
    %771 = vmatpush1.xpose.msra.mxu0 0.0
    %772 = vmatprep.subr.mxu0 0.0
    %773 = vmatpush1.xpose.msra.mxu0 0.0
    %774 = vmatprep.subr.mxu0 0.0
    %775 = vmatpush1.xpose.msra.mxu0 0.0
    %776 = vmatprep.subr.mxu0 0.0
    %777 = vmatpush1.xpose.msra.mxu0 0.0
    %778 = vmatprep.mubr.f32.mxu0 0.0
    %779 = vmatmul.mubr.f32.gmra.mrb[0].mxu0 %v710
    %v780 = vpop.f32.mrb[0].mxu0
    %v781 = vadd.f32 0.0, %v780
    %v782 = vpop.f32.mrb[0].mxu0
    %783 = vdwg.mxu0
    %v784 = vmul.f32 %v781, 0.35355338
    %v785 = vadd.f32 %v784, %v283
    %v786 = vsel %vm204, %v785, -inf
    %787 = vmax.xlane.f32.xlu0 %v786
    %v788 = vpop.xlane.xlu0 %787
    %v789 = vsub.f32 %v785, %v788
    %v790 = vmul.f32 %v789, 1.442695
    %v791 = vpow.pop %v790
    %v792 = vsel %vm204, %v791, 0.0
    %793 = vadd.xlane.f32.xlu0 %v792
    %v794 = vpop.xlane.xlu0 %793
    %v795 = vrcp.pop %v794
    %v796 = vmul.f32 %v791, %v795
    %797 = vrot.lane.b32.xlu0 %v193, 40
    %v798 = vpop.permute.xlu0 %797
    %v801 = vsel %vm204, %v796, 0
    %803 = vmatprep.subr.mxu0 0.0
    %804 = vmatpush1.msra.mxu0 %v798
    %805 = vmatprep.subr.mxu0 0.0
    %806 = vmatpush1.msra.mxu0 0.0
    %807 = vmatprep.subr.mxu0 0.0
    %808 = vmatpush1.msra.mxu0 0.0
    %809 = vmatprep.subr.mxu0 0.0
    %810 = vmatpush1.msra.mxu0 0.0
    %811 = vmatprep.subr.mxu0 0.0
    %812 = vmatpush1.msra.mxu0 0.0
    %813 = vmatprep.subr.mxu0 0.0
    %814 = vmatpush1.msra.mxu0 0.0
    %815 = vmatprep.subr.mxu0 0.0
    %816 = vmatpush1.msra.mxu0 0.0
    %817 = vmatprep.subr.mxu0 0.0
    %818 = vmatpush1.msra.mxu0 0.0
    %819 = vmatprep.subr.mxu0 0.0
    %820 = vmatpush1.msra.mxu0 0.0
    %821 = vmatprep.subr.mxu0 0.0
    %822 = vmatpush1.msra.mxu0 0.0
    %823 = vmatprep.subr.mxu0 0.0
    %824 = vmatpush1.msra.mxu0 0.0
    %825 = vmatprep.subr.mxu0 0.0
    %826 = vmatpush1.msra.mxu0 0.0
    %827 = vmatprep.subr.mxu0 0.0
    %828 = vmatpush1.msra.mxu0 0.0
    %829 = vmatprep.subr.mxu0 0.0
    %830 = vmatpush1.msra.mxu0 0.0
    %831 = vmatprep.subr.mxu0 0.0
    %832 = vmatpush1.msra.mxu0 0.0
    %833 = vmatprep.subr.mxu0 0.0
    %834 = vmatpush1.msra.mxu0 0.0
    %835 = vmatprep.subr.mxu0 0.0
    %836 = vmatpush1.msra.mxu0 0.0
    %837 = vmatprep.subr.mxu0 0.0
    %838 = vmatpush1.msra.mxu0 0.0
    %839 = vmatprep.subr.mxu0 0.0
    %840 = vmatpush1.msra.mxu0 0.0
    %841 = vmatprep.subr.mxu0 0.0
    %842 = vmatpush1.msra.mxu0 0.0
    %843 = vmatprep.subr.mxu0 0.0
    %844 = vmatpush1.msra.mxu0 0.0
    %845 = vmatprep.subr.mxu0 0.0
    %846 = vmatpush1.msra.mxu0 0.0
    %847 = vmatprep.subr.mxu0 0.0
    %848 = vmatpush1.msra.mxu0 0.0
    %849 = vmatprep.subr.mxu0 0.0
    %850 = vmatpush1.msra.mxu0 0.0
    %851 = vmatprep.subr.mxu0 0.0
    %852 = vmatpush1.msra.mxu0 0.0
    %853 = vmatprep.subr.mxu0 0.0
    %854 = vmatpush1.msra.mxu0 0.0
    %855 = vmatprep.subr.mxu0 0.0
    %856 = vmatpush1.msra.mxu0 0.0
    %857 = vmatprep.subr.mxu0 0.0
    %858 = vmatpush1.msra.mxu0 0.0
    %859 = vmatprep.subr.mxu0 0.0
    %860 = vmatpush1.msra.mxu0 0.0
    %861 = vmatprep.subr.mxu0 0.0
    %862 = vmatpush1.msra.mxu0 0.0
    %863 = vmatprep.subr.mxu0 0.0
    %864 = vmatpush1.msra.mxu0 0.0
    %865 = vmatprep.subr.mxu0 0.0
    %866 = vmatpush1.msra.mxu0 0.0
    %867 = vmatprep.mubr.f32.mxu0 0.0
    %868 = vmatmul.mubr.f32.gmra.mrb[0].mxu0 %v801
    %v869 = vpop.f32.mrb[0].mxu0
    %v870 = vadd.f32 0.0, %v869
    %v871 = vpop.f32.mrb[0].mxu0
    %872 = vdwg.mxu0
    %874 = vrot.lane.b32.xlu0 %v536, 8
    %v875 = vpop.permute.xlu0 %874
    %878 = vrot.lane.b32.xlu0 %v703, 16
    %v879 = vpop.permute.xlu0 %878
    %882 = vrot.lane.b32.xlu0 %v870, 24
    %v883 = vpop.permute.xlu0 %882
    %v885 = vsel %vm204, %v369, %v875
    %vm886 = vcmask 130048
    %v887 = vsel %vm886, %v885, %v879
    %vm888 = vcmask 195584
    %v889 = vsel %vm888, %v887, %v883
    %891 = vrot.lane.b32.xlu0 %v198, 96
    %v892 = vpop.permute.xlu0 %891
    %v893 = vsel %vm204, %v198, 0
    %v895 = vsel %vm204, %v892, 0
    %897 = vmatprep.subr.mxu0 0.0
    %898 = vmatpush1.xpose.msra.mxu0 %v895
    %899 = vmatprep.subr.mxu0 0.0
    %900 = vmatpush1.xpose.msra.mxu0 0.0
    %901 = vmatprep.subr.mxu0 0.0
    %902 = vmatpush1.xpose.msra.mxu0 0.0
    %903 = vmatprep.subr.mxu0 0.0
    %904 = vmatpush1.xpose.msra.mxu0 0.0
    %905 = vmatprep.subr.mxu0 0.0
    %906 = vmatpush1.xpose.msra.mxu0 0.0
    %907 = vmatprep.subr.mxu0 0.0
    %908 = vmatpush1.xpose.msra.mxu0 0.0
    %909 = vmatprep.subr.mxu0 0.0
    %910 = vmatpush1.xpose.msra.mxu0 0.0
    %911 = vmatprep.subr.mxu0 0.0
    %912 = vmatpush1.xpose.msra.mxu0 0.0
    %913 = vmatprep.subr.mxu0 0.0
    %914 = vmatpush1.xpose.msra.mxu0 0.0
    %915 = vmatprep.subr.mxu0 0.0
    %916 = vmatpush1.xpose.msra.mxu0 0.0
    %917 = vmatprep.subr.mxu0 0.0
    %918 = vmatpush1.xpose.msra.mxu0 0.0
    %919 = vmatprep.subr.mxu0 0.0
    %920 = vmatpush1.xpose.msra.mxu0 0.0
    %921 = vmatprep.subr.mxu0 0.0
    %922 = vmatpush1.xpose.msra.mxu0 0.0
    %923 = vmatprep.subr.mxu0 0.0
    %924 = vmatpush1.xpose.msra.mxu0 0.0
    %925 = vmatprep.subr.mxu0 0.0
    %926 = vmatpush1.xpose.msra.mxu0 0.0
    %927 = vmatprep.subr.mxu0 0.0
    %928 = vmatpush1.xpose.msra.mxu0 0.0
    %929 = vmatprep.subr.mxu0 0.0
    %930 = vmatpush1.xpose.msra.mxu0 0.0
    %931 = vmatprep.subr.mxu0 0.0
    %932 = vmatpush1.xpose.msra.mxu0 0.0
    %933 = vmatprep.subr.mxu0 0.0
    %934 = vmatpush1.xpose.msra.mxu0 0.0
    %935 = vmatprep.subr.mxu0 0.0
    %936 = vmatpush1.xpose.msra.mxu0 0.0
    %937 = vmatprep.subr.mxu0 0.0
    %938 = vmatpush1.xpose.msra.mxu0 0.0
    %939 = vmatprep.subr.mxu0 0.0
    %940 = vmatpush1.xpose.msra.mxu0 0.0
    %941 = vmatprep.subr.mxu0 0.0
    %942 = vmatpush1.xpose.msra.mxu0 0.0
    %943 = vmatprep.subr.mxu0 0.0
    %944 = vmatpush1.xpose.msra.mxu0 0.0
    %945 = vmatprep.subr.mxu0 0.0
    %946 = vmatpush1.xpose.msra.mxu0 0.0
    %947 = vmatprep.subr.mxu0 0.0
    %948 = vmatpush1.xpose.msra.mxu0 0.0
    %949 = vmatprep.subr.mxu0 0.0
    %950 = vmatpush1.xpose.msra.mxu0 0.0
    %951 = vmatprep.subr.mxu0 0.0
    %952 = vmatpush1.xpose.msra.mxu0 0.0
    %953 = vmatprep.subr.mxu0 0.0
    %954 = vmatpush1.xpose.msra.mxu0 0.0
    %955 = vmatprep.subr.mxu0 0.0
    %956 = vmatpush1.xpose.msra.mxu0 0.0
    %957 = vmatprep.subr.mxu0 0.0
    %958 = vmatpush1.xpose.msra.mxu0 0.0
    %959 = vmatprep.subr.mxu0 0.0
    %960 = vmatpush1.xpose.msra.mxu0 0.0
    %961 = vmatprep.mubr.f32.mxu0 0.0
    %962 = vmatmul.mubr.f32.gmra.mrb[0].mxu0 %v893
    %v963 = vpop.f32.mrb[0].mxu0
    %v964 = vadd.f32 0.0, %v963
    %v965 = vpop.f32.mrb[0].mxu0
    %966 = vdwg.mxu0
    %v967 = vmul.f32 %v964, 0.35355338
    %v968 = vlaneseq
    %v969 = vshrl.u32 %v968, 7
    %v970 = vsub.s32 1, %v969
    %v971 = vrot.slane %v60, %v970
    %v972 = vadd.f32 %v967, %v971
    %v973 = vsel %vm204, %v972, -inf
    %974 = vmax.xlane.f32.xlu0 %v973
    %v975 = vpop.xlane.xlu0 %974
    %v976 = vsub.f32 %v972, %v975
    %v977 = vmul.f32 %v976, 1.442695
    %v978 = vpow.pop %v977
    %v979 = vsel %vm204, %v978, 0.0
    %980 = vadd.xlane.f32.xlu0 %v979
    %v981 = vpop.xlane.xlu0 %980
    %v982 = vrcp.pop %v981
    %v983 = vmul.f32 %v978, %v982
    %984 = vrot.lane.b32.xlu0 %v198, 64
    %v985 = vpop.permute.xlu0 %984
    %v988 = vsel %vm204, %v983, 0
    %990 = vmatprep.subr.mxu0 0.0
    %991 = vmatpush1.msra.mxu0 %v985
    %992 = vmatprep.subr.mxu0 0.0
    %993 = vmatpush1.msra.mxu0 0.0
    %994 = vmatprep.subr.mxu0 0.0
    %995 = vmatpush1.msra.mxu0 0.0
    %996 = vmatprep.subr.mxu0 0.0
    %997 = vmatpush1.msra.mxu0 0.0
    %998 = vmatprep.subr.mxu0 0.0
    %999 = vmatpush1.msra.mxu0 0.0
    %1000 = vmatprep.subr.mxu0 0.0
    %1001 = vmatpush1.msra.mxu0 0.0
    %1002 = vmatprep.subr.mxu0 0.0
    %1003 = vmatpush1.msra.mxu0 0.0
    %1004 = vmatprep.subr.mxu0 0.0
    %1005 = vmatpush1.msra.mxu0 0.0
    %1006 = vmatprep.subr.mxu0 0.0
    %1007 = vmatpush1.msra.mxu0 0.0
    %1008 = vmatprep.subr.mxu0 0.0
    %1009 = vmatpush1.msra.mxu0 0.0
    %1010 = vmatprep.subr.mxu0 0.0
    %1011 = vmatpush1.msra.mxu0 0.0
    %1012 = vmatprep.subr.mxu0 0.0
    %1013 = vmatpush1.msra.mxu0 0.0
    %1014 = vmatprep.subr.mxu0 0.0
    %1015 = vmatpush1.msra.mxu0 0.0
    %1016 = vmatprep.subr.mxu0 0.0
    %1017 = vmatpush1.msra.mxu0 0.0
    %1018 = vmatprep.subr.mxu0 0.0
    %1019 = vmatpush1.msra.mxu0 0.0
    %1020 = vmatprep.subr.mxu0 0.0
    %1021 = vmatpush1.msra.mxu0 0.0
    %1022 = vmatprep.subr.mxu0 0.0
    %1023 = vmatpush1.msra.mxu0 0.0
    %1024 = vmatprep.subr.mxu0 0.0
    %1025 = vmatpush1.msra.mxu0 0.0
    %1026 = vmatprep.subr.mxu0 0.0
    %1027 = vmatpush1.msra.mxu0 0.0
    %1028 = vmatprep.subr.mxu0 0.0
    %1029 = vmatpush1.msra.mxu0 0.0
    %1030 = vmatprep.subr.mxu0 0.0
    %1031 = vmatpush1.msra.mxu0 0.0
    %1032 = vmatprep.subr.mxu0 0.0
    %1033 = vmatpush1.msra.mxu0 0.0
    %1034 = vmatprep.subr.mxu0 0.0
    %1035 = vmatpush1.msra.mxu0 0.0
    %1036 = vmatprep.subr.mxu0 0.0
    %1037 = vmatpush1.msra.mxu0 0.0
    %1038 = vmatprep.subr.mxu0 0.0
    %1039 = vmatpush1.msra.mxu0 0.0
    %1040 = vmatprep.subr.mxu0 0.0
    %1041 = vmatpush1.msra.mxu0 0.0
    %1042 = vmatprep.subr.mxu0 0.0
    %1043 = vmatpush1.msra.mxu0 0.0
    %1044 = vmatprep.subr.mxu0 0.0
    %1045 = vmatpush1.msra.mxu0 0.0
    %1046 = vmatprep.subr.mxu0 0.0
    %1047 = vmatpush1.msra.mxu0 0.0
    %1048 = vmatprep.subr.mxu0 0.0
    %1049 = vmatpush1.msra.mxu0 0.0
    %1050 = vmatprep.subr.mxu0 0.0
    %1051 = vmatpush1.msra.mxu0 0.0
    %1052 = vmatprep.subr.mxu0 0.0
    %1053 = vmatpush1.msra.mxu0 0.0
    %1054 = vmatprep.mubr.f32.mxu0 0.0
    %1055 = vmatmul.mubr.f32.gmra.mrb[0].mxu0 %v988
    %v1056 = vpop.f32.mrb[0].mxu0
    %v1057 = vadd.f32 0.0, %v1056
    %v1058 = vpop.f32.mrb[0].mxu0
    %1059 = vdwg.mxu0
    %1060 = vrot.lane.b32.xlu0 %v198, 120
    %v1061 = vpop.permute.xlu0 %1060
    %1062 = vrot.lane.b32.xlu0 %v198, 88
    %v1063 = vpop.permute.xlu0 %1062
    %v1064 = vsel %vm204, %v1061, 0
    %v1066 = vsel %vm204, %v1063, 0
    %1068 = vmatprep.subr.mxu0 0.0
    %1069 = vmatpush1.xpose.msra.mxu0 %v1066
    %1070 = vmatprep.subr.mxu0 0.0
    %1071 = vmatpush1.xpose.msra.mxu0 0.0
    %1072 = vmatprep.subr.mxu0 0.0
    %1073 = vmatpush1.xpose.msra.mxu0 0.0
    %1074 = vmatprep.subr.mxu0 0.0
    %1075 = vmatpush1.xpose.msra.mxu0 0.0
    %1076 = vmatprep.subr.mxu0 0.0
    %1077 = vmatpush1.xpose.msra.mxu0 0.0
    %1078 = vmatprep.subr.mxu0 0.0
    %1079 = vmatpush1.xpose.msra.mxu0 0.0
    %1080 = vmatprep.subr.mxu0 0.0
    %1081 = vmatpush1.xpose.msra.mxu0 0.0
    %1082 = vmatprep.subr.mxu0 0.0
    %1083 = vmatpush1.xpose.msra.mxu0 0.0
    %1084 = vmatprep.subr.mxu0 0.0
    %1085 = vmatpush1.xpose.msra.mxu0 0.0
    %1086 = vmatprep.subr.mxu0 0.0
    %1087 = vmatpush1.xpose.msra.mxu0 0.0
    %1088 = vmatprep.subr.mxu0 0.0
    %1089 = vmatpush1.xpose.msra.mxu0 0.0
    %1090 = vmatprep.subr.mxu0 0.0
    %1091 = vmatpush1.xpose.msra.mxu0 0.0
    %1092 = vmatprep.subr.mxu0 0.0
    %1093 = vmatpush1.xpose.msra.mxu0 0.0
    %1094 = vmatprep.subr.mxu0 0.0
    %1095 = vmatpush1.xpose.msra.mxu0 0.0
    %1096 = vmatprep.subr.mxu0 0.0
    %1097 = vmatpush1.xpose.msra.mxu0 0.0
    %1098 = vmatprep.subr.mxu0 0.0
    %1099 = vmatpush1.xpose.msra.mxu0 0.0
    %1100 = vmatprep.subr.mxu0 0.0
    %1101 = vmatpush1.xpose.msra.mxu0 0.0
    %1102 = vmatprep.subr.mxu0 0.0
    %1103 = vmatpush1.xpose.msra.mxu0 0.0
    %1104 = vmatprep.subr.mxu0 0.0
    %1105 = vmatpush1.xpose.msra.mxu0 0.0
    %1106 = vmatprep.subr.mxu0 0.0
    %1107 = vmatpush1.xpose.msra.mxu0 0.0
    %1108 = vmatprep.subr.mxu0 0.0
    %1109 = vmatpush1.xpose.msra.mxu0 0.0
    %1110 = vmatprep.subr.mxu0 0.0
    %1111 = vmatpush1.xpose.msra.mxu0 0.0
    %1112 = vmatprep.subr.mxu0 0.0
    %1113 = vmatpush1.xpose.msra.mxu0 0.0
    %1114 = vmatprep.subr.mxu0 0.0
    %1115 = vmatpush1.xpose.msra.mxu0 0.0
    %1116 = vmatprep.subr.mxu0 0.0
    %1117 = vmatpush1.xpose.msra.mxu0 0.0
    %1118 = vmatprep.subr.mxu0 0.0
    %1119 = vmatpush1.xpose.msra.mxu0 0.0
    %1120 = vmatprep.subr.mxu0 0.0
    %1121 = vmatpush1.xpose.msra.mxu0 0.0
    %1122 = vmatprep.subr.mxu0 0.0
    %1123 = vmatpush1.xpose.msra.mxu0 0.0
    %1124 = vmatprep.subr.mxu0 0.0
    %1125 = vmatpush1.xpose.msra.mxu0 0.0
    %1126 = vmatprep.subr.mxu0 0.0
    %1127 = vmatpush1.xpose.msra.mxu0 0.0
    %1128 = vmatprep.subr.mxu0 0.0
    %1129 = vmatpush1.xpose.msra.mxu0 0.0
    %1130 = vmatprep.subr.mxu0 0.0
    %1131 = vmatpush1.xpose.msra.mxu0 0.0
    %1132 = vmatprep.mubr.f32.mxu0 0.0
    %1133 = vmatmul.mubr.f32.gmra.mrb[0].mxu0 %v1064
    %v1134 = vpop.f32.mrb[0].mxu0
    %v1135 = vadd.f32 0.0, %v1134
    %v1136 = vpop.f32.mrb[0].mxu0
    %1137 = vdwg.mxu0
    %v1138 = vmul.f32 %v1135, 0.35355338
    %v1139 = vadd.f32 %v1138, %v971
    %v1140 = vsel %vm204, %v1139, -inf
    %1141 = vmax.xlane.f32.xlu0 %v1140
    %v1142 = vpop.xlane.xlu0 %1141
    %v1143 = vsub.f32 %v1139, %v1142
    %v1144 = vmul.f32 %v1143, 1.442695
    %v1145 = vpow.pop %v1144
    %v1146 = vsel %vm204, %v1145, 0.0
    %1147 = vadd.xlane.f32.xlu0 %v1146
    %v1148 = vpop.xlane.xlu0 %1147
    %v1149 = vrcp.pop %v1148
    %v1150 = vmul.f32 %v1145, %v1149
    %1151 = vrot.lane.b32.xlu0 %v198, 56
    %v1152 = vpop.permute.xlu0 %1151
    %v1155 = vsel %vm204, %v1150, 0
    %1157 = vmatprep.subr.mxu0 0.0
    %1158 = vmatpush1.msra.mxu0 %v1152
    %1159 = vmatprep.subr.mxu0 0.0
    %1160 = vmatpush1.msra.mxu0 0.0
    %1161 = vmatprep.subr.mxu0 0.0
    %1162 = vmatpush1.msra.mxu0 0.0
    %1163 = vmatprep.subr.mxu0 0.0
    %1164 = vmatpush1.msra.mxu0 0.0
    %1165 = vmatprep.subr.mxu0 0.0
    %1166 = vmatpush1.msra.mxu0 0.0
    %1167 = vmatprep.subr.mxu0 0.0
    %1168 = vmatpush1.msra.mxu0 0.0
    %1169 = vmatprep.subr.mxu0 0.0
    %1170 = vmatpush1.msra.mxu0 0.0
    %1171 = vmatprep.subr.mxu0 0.0
    %1172 = vmatpush1.msra.mxu0 0.0
    %1173 = vmatprep.subr.mxu0 0.0
    %1174 = vmatpush1.msra.mxu0 0.0
    %1175 = vmatprep.subr.mxu0 0.0
    %1176 = vmatpush1.msra.mxu0 0.0
    %1177 = vmatprep.subr.mxu0 0.0
    %1178 = vmatpush1.msra.mxu0 0.0
    %1179 = vmatprep.subr.mxu0 0.0
    %1180 = vmatpush1.msra.mxu0 0.0
    %1181 = vmatprep.subr.mxu0 0.0
    %1182 = vmatpush1.msra.mxu0 0.0
    %1183 = vmatprep.subr.mxu0 0.0
    %1184 = vmatpush1.msra.mxu0 0.0
    %1185 = vmatprep.subr.mxu0 0.0
    %1186 = vmatpush1.msra.mxu0 0.0
    %1187 = vmatprep.subr.mxu0 0.0
    %1188 = vmatpush1.msra.mxu0 0.0
    %1189 = vmatprep.subr.mxu0 0.0
    %1190 = vmatpush1.msra.mxu0 0.0
    %1191 = vmatprep.subr.mxu0 0.0
    %1192 = vmatpush1.msra.mxu0 0.0
    %1193 = vmatprep.subr.mxu0 0.0
    %1194 = vmatpush1.msra.mxu0 0.0
    %1195 = vmatprep.subr.mxu0 0.0
    %1196 = vmatpush1.msra.mxu0 0.0
    %1197 = vmatprep.subr.mxu0 0.0
    %1198 = vmatpush1.msra.mxu0 0.0
    %1199 = vmatprep.subr.mxu0 0.0
    %1200 = vmatpush1.msra.mxu0 0.0
    %1201 = vmatprep.subr.mxu0 0.0
    %1202 = vmatpush1.msra.mxu0 0.0
    %1203 = vmatprep.subr.mxu0 0.0
    %1204 = vmatpush1.msra.mxu0 0.0
    %1205 = vmatprep.subr.mxu0 0.0
    %1206 = vmatpush1.msra.mxu0 0.0
    %1207 = vmatprep.subr.mxu0 0.0
    %1208 = vmatpush1.msra.mxu0 0.0
    %1209 = vmatprep.subr.mxu0 0.0
    %1210 = vmatpush1.msra.mxu0 0.0
    %1211 = vmatprep.subr.mxu0 0.0
    %1212 = vmatpush1.msra.mxu0 0.0
    %1213 = vmatprep.subr.mxu0 0.0
    %1214 = vmatpush1.msra.mxu0 0.0
    %1215 = vmatprep.subr.mxu0 0.0
    %1216 = vmatpush1.msra.mxu0 0.0
    %1217 = vmatprep.subr.mxu0 0.0
    %1218 = vmatpush1.msra.mxu0 0.0
    %1219 = vmatprep.subr.mxu0 0.0
    %1220 = vmatpush1.msra.mxu0 0.0
    %1221 = vmatprep.mubr.f32.mxu0 0.0
    %1222 = vmatmul.mubr.f32.gmra.mrb[0].mxu0 %v1155
    %v1223 = vpop.f32.mrb[0].mxu0
    %v1224 = vadd.f32 0.0, %v1223
    %v1225 = vpop.f32.mrb[0].mxu0
    %1226 = vdwg.mxu0
    %1227 = vrot.lane.b32.xlu0 %v198, 112
    %v1228 = vpop.permute.xlu0 %1227
    %1229 = vrot.lane.b32.xlu0 %v198, 80
    %v1230 = vpop.permute.xlu0 %1229
    %v1231 = vsel %vm204, %v1228, 0
    %v1233 = vsel %vm204, %v1230, 0
    %1235 = vmatprep.subr.mxu0 0.0
    %1236 = vmatpush1.xpose.msra.mxu0 %v1233
    %1237 = vmatprep.subr.mxu0 0.0
    %1238 = vmatpush1.xpose.msra.mxu0 0.0
    %1239 = vmatprep.subr.mxu0 0.0
    %1240 = vmatpush1.xpose.msra.mxu0 0.0
    %1241 = vmatprep.subr.mxu0 0.0
    %1242 = vmatpush1.xpose.msra.mxu0 0.0
    %1243 = vmatprep.subr.mxu0 0.0
    %1244 = vmatpush1.xpose.msra.mxu0 0.0
    %1245 = vmatprep.subr.mxu0 0.0
    %1246 = vmatpush1.xpose.msra.mxu0 0.0
    %1247 = vmatprep.subr.mxu0 0.0
    %1248 = vmatpush1.xpose.msra.mxu0 0.0
    %1249 = vmatprep.subr.mxu0 0.0
    %1250 = vmatpush1.xpose.msra.mxu0 0.0
    %1251 = vmatprep.subr.mxu0 0.0
    %1252 = vmatpush1.xpose.msra.mxu0 0.0
    %1253 = vmatprep.subr.mxu0 0.0
    %1254 = vmatpush1.xpose.msra.mxu0 0.0
    %1255 = vmatprep.subr.mxu0 0.0
    %1256 = vmatpush1.xpose.msra.mxu0 0.0
    %1257 = vmatprep.subr.mxu0 0.0
    %1258 = vmatpush1.xpose.msra.mxu0 0.0
    %1259 = vmatprep.subr.mxu0 0.0
    %1260 = vmatpush1.xpose.msra.mxu0 0.0
    %1261 = vmatprep.subr.mxu0 0.0
    %1262 = vmatpush1.xpose.msra.mxu0 0.0
    %1263 = vmatprep.subr.mxu0 0.0
    %1264 = vmatpush1.xpose.msra.mxu0 0.0
    %1265 = vmatprep.subr.mxu0 0.0
    %1266 = vmatpush1.xpose.msra.mxu0 0.0
    %1267 = vmatprep.subr.mxu0 0.0
    %1268 = vmatpush1.xpose.msra.mxu0 0.0
    %1269 = vmatprep.subr.mxu0 0.0
    %1270 = vmatpush1.xpose.msra.mxu0 0.0
    %1271 = vmatprep.subr.mxu0 0.0
    %1272 = vmatpush1.xpose.msra.mxu0 0.0
    %1273 = vmatprep.subr.mxu0 0.0
    %1274 = vmatpush1.xpose.msra.mxu0 0.0
    %1275 = vmatprep.subr.mxu0 0.0
    %1276 = vmatpush1.xpose.msra.mxu0 0.0
    %1277 = vmatprep.subr.mxu0 0.0
    %1278 = vmatpush1.xpose.msra.mxu0 0.0
    %1279 = vmatprep.subr.mxu0 0.0
    %1280 = vmatpush1.xpose.msra.mxu0 0.0
    %1281 = vmatprep.subr.mxu0 0.0
    %1282 = vmatpush1.xpose.msra.mxu0 0.0
    %1283 = vmatprep.subr.mxu0 0.0
    %1284 = vmatpush1.xpose.msra.mxu0 0.0
    %1285 = vmatprep.subr.mxu0 0.0
    %1286 = vmatpush1.xpose.msra.mxu0 0.0
    %1287 = vmatprep.subr.mxu0 0.0
    %1288 = vmatpush1.xpose.msra.mxu0 0.0
    %1289 = vmatprep.subr.mxu0 0.0
    %1290 = vmatpush1.xpose.msra.mxu0 0.0
    %1291 = vmatprep.subr.mxu0 0.0
    %1292 = vmatpush1.xpose.msra.mxu0 0.0
    %1293 = vmatprep.subr.mxu0 0.0
    %1294 = vmatpush1.xpose.msra.mxu0 0.0
    %1295 = vmatprep.subr.mxu0 0.0
    %1296 = vmatpush1.xpose.msra.mxu0 0.0
    %1297 = vmatprep.subr.mxu0 0.0
    %1298 = vmatpush1.xpose.msra.mxu0 0.0
    %1299 = vmatprep.mubr.f32.mxu0 0.0
    %1300 = vmatmul.mubr.f32.gmra.mrb[0].mxu0 %v1231
    %v1301 = vpop.f32.mrb[0].mxu0
    %v1302 = vadd.f32 0.0, %v1301
    %v1303 = vpop.f32.mrb[0].mxu0
    %1304 = vdwg.mxu0
    %v1305 = vmul.f32 %v1302, 0.35355338
    %v1306 = vadd.f32 %v1305, %v971
    %v1307 = vsel %vm204, %v1306, -inf
    %1308 = vmax.xlane.f32.xlu0 %v1307
    %v1309 = vpop.xlane.xlu0 %1308
    %v1310 = vsub.f32 %v1306, %v1309
    %v1311 = vmul.f32 %v1310, 1.442695
    %v1312 = vpow.pop %v1311
    %v1313 = vsel %vm204, %v1312, 0.0
    %1314 = vadd.xlane.f32.xlu0 %v1313
    %v1315 = vpop.xlane.xlu0 %1314
    %v1316 = vrcp.pop %v1315
    %v1317 = vmul.f32 %v1312, %v1316
    %1318 = vrot.lane.b32.xlu0 %v198, 48
    %v1319 = vpop.permute.xlu0 %1318
    %v1322 = vsel %vm204, %v1317, 0
    %1324 = vmatprep.subr.mxu0 0.0
    %1325 = vmatpush1.msra.mxu0 %v1319
    %1326 = vmatprep.subr.mxu0 0.0
    %1327 = vmatpush1.msra.mxu0 0.0
    %1328 = vmatprep.subr.mxu0 0.0
    %1329 = vmatpush1.msra.mxu0 0.0
    %1330 = vmatprep.subr.mxu0 0.0
    %1331 = vmatpush1.msra.mxu0 0.0
    %1332 = vmatprep.subr.mxu0 0.0
    %1333 = vmatpush1.msra.mxu0 0.0
    %1334 = vmatprep.subr.mxu0 0.0
    %1335 = vmatpush1.msra.mxu0 0.0
    %1336 = vmatprep.subr.mxu0 0.0
    %1337 = vmatpush1.msra.mxu0 0.0
    %1338 = vmatprep.subr.mxu0 0.0
    %1339 = vmatpush1.msra.mxu0 0.0
    %1340 = vmatprep.subr.mxu0 0.0
    %1341 = vmatpush1.msra.mxu0 0.0
    %1342 = vmatprep.subr.mxu0 0.0
    %1343 = vmatpush1.msra.mxu0 0.0
    %1344 = vmatprep.subr.mxu0 0.0
    %1345 = vmatpush1.msra.mxu0 0.0
    %1346 = vmatprep.subr.mxu0 0.0
    %1347 = vmatpush1.msra.mxu0 0.0
    %1348 = vmatprep.subr.mxu0 0.0
    %1349 = vmatpush1.msra.mxu0 0.0
    %1350 = vmatprep.subr.mxu0 0.0
    %1351 = vmatpush1.msra.mxu0 0.0
    %1352 = vmatprep.subr.mxu0 0.0
    %1353 = vmatpush1.msra.mxu0 0.0
    %1354 = vmatprep.subr.mxu0 0.0
    %1355 = vmatpush1.msra.mxu0 0.0
    %1356 = vmatprep.subr.mxu0 0.0
    %1357 = vmatpush1.msra.mxu0 0.0
    %1358 = vmatprep.subr.mxu0 0.0
    %1359 = vmatpush1.msra.mxu0 0.0
    %1360 = vmatprep.subr.mxu0 0.0
    %1361 = vmatpush1.msra.mxu0 0.0
    %1362 = vmatprep.subr.mxu0 0.0
    %1363 = vmatpush1.msra.mxu0 0.0
    %1364 = vmatprep.subr.mxu0 0.0
    %1365 = vmatpush1.msra.mxu0 0.0
    %1366 = vmatprep.subr.mxu0 0.0
    %1367 = vmatpush1.msra.mxu0 0.0
    %1368 = vmatprep.subr.mxu0 0.0
    %1369 = vmatpush1.msra.mxu0 0.0
    %1370 = vmatprep.subr.mxu0 0.0
    %1371 = vmatpush1.msra.mxu0 0.0
    %1372 = vmatprep.subr.mxu0 0.0
    %1373 = vmatpush1.msra.mxu0 0.0
    %1374 = vmatprep.subr.mxu0 0.0
    %1375 = vmatpush1.msra.mxu0 0.0
    %1376 = vmatprep.subr.mxu0 0.0
    %1377 = vmatpush1.msra.mxu0 0.0
    %1378 = vmatprep.subr.mxu0 0.0
    %1379 = vmatpush1.msra.mxu0 0.0
    %1380 = vmatprep.subr.mxu0 0.0
    %1381 = vmatpush1.msra.mxu0 0.0
    %1382 = vmatprep.subr.mxu0 0.0
    %1383 = vmatpush1.msra.mxu0 0.0
    %1384 = vmatprep.subr.mxu0 0.0
    %1385 = vmatpush1.msra.mxu0 0.0
    %1386 = vmatprep.subr.mxu0 0.0
    %1387 = vmatpush1.msra.mxu0 0.0
    %1388 = vmatprep.mubr.f32.mxu0 0.0
    %1389 = vmatmul.mubr.f32.gmra.mrb[0].mxu0 %v1322
    %v1390 = vpop.f32.mrb[0].mxu0
    %v1391 = vadd.f32 0.0, %v1390
    %v1392 = vpop.f32.mrb[0].mxu0
    %1393 = vdwg.mxu0
    %1394 = vrot.lane.b32.xlu0 %v198, 104
    %v1395 = vpop.permute.xlu0 %1394
    %1396 = vrot.lane.b32.xlu0 %v198, 72
    %v1397 = vpop.permute.xlu0 %1396
    %v1398 = vsel %vm204, %v1395, 0
    %v1400 = vsel %vm204, %v1397, 0
    %1402 = vmatprep.subr.mxu0 0.0
    %1403 = vmatpush1.xpose.msra.mxu0 %v1400
    %1404 = vmatprep.subr.mxu0 0.0
    %1405 = vmatpush1.xpose.msra.mxu0 0.0
    %1406 = vmatprep.subr.mxu0 0.0
    %1407 = vmatpush1.xpose.msra.mxu0 0.0
    %1408 = vmatprep.subr.mxu0 0.0
    %1409 = vmatpush1.xpose.msra.mxu0 0.0
    %1410 = vmatprep.subr.mxu0 0.0
    %1411 = vmatpush1.xpose.msra.mxu0 0.0
    %1412 = vmatprep.subr.mxu0 0.0
    %1413 = vmatpush1.xpose.msra.mxu0 0.0
    %1414 = vmatprep.subr.mxu0 0.0
    %1415 = vmatpush1.xpose.msra.mxu0 0.0
    %1416 = vmatprep.subr.mxu0 0.0
    %1417 = vmatpush1.xpose.msra.mxu0 0.0
    %1418 = vmatprep.subr.mxu0 0.0
    %1419 = vmatpush1.xpose.msra.mxu0 0.0
    %1420 = vmatprep.subr.mxu0 0.0
    %1421 = vmatpush1.xpose.msra.mxu0 0.0
    %1422 = vmatprep.subr.mxu0 0.0
    %1423 = vmatpush1.xpose.msra.mxu0 0.0
    %1424 = vmatprep.subr.mxu0 0.0
    %1425 = vmatpush1.xpose.msra.mxu0 0.0
    %1426 = vmatprep.subr.mxu0 0.0
    %1427 = vmatpush1.xpose.msra.mxu0 0.0
    %1428 = vmatprep.subr.mxu0 0.0
    %1429 = vmatpush1.xpose.msra.mxu0 0.0
    %1430 = vmatprep.subr.mxu0 0.0
    %1431 = vmatpush1.xpose.msra.mxu0 0.0
    %1432 = vmatprep.subr.mxu0 0.0
    %1433 = vmatpush1.xpose.msra.mxu0 0.0
    %1434 = vmatprep.subr.mxu0 0.0
    %1435 = vmatpush1.xpose.msra.mxu0 0.0
    %1436 = vmatprep.subr.mxu0 0.0
    %1437 = vmatpush1.xpose.msra.mxu0 0.0
    %1438 = vmatprep.subr.mxu0 0.0
    %1439 = vmatpush1.xpose.msra.mxu0 0.0
    %1440 = vmatprep.subr.mxu0 0.0
    %1441 = vmatpush1.xpose.msra.mxu0 0.0
    %1442 = vmatprep.subr.mxu0 0.0
    %1443 = vmatpush1.xpose.msra.mxu0 0.0
    %1444 = vmatprep.subr.mxu0 0.0
    %1445 = vmatpush1.xpose.msra.mxu0 0.0
    %1446 = vmatprep.subr.mxu0 0.0
    %1447 = vmatpush1.xpose.msra.mxu0 0.0
    %1448 = vmatprep.subr.mxu0 0.0
    %1449 = vmatpush1.xpose.msra.mxu0 0.0
    %1450 = vmatprep.subr.mxu0 0.0
    %1451 = vmatpush1.xpose.msra.mxu0 0.0
    %1452 = vmatprep.subr.mxu0 0.0
    %1453 = vmatpush1.xpose.msra.mxu0 0.0
    %1454 = vmatprep.subr.mxu0 0.0
    %1455 = vmatpush1.xpose.msra.mxu0 0.0
    %1456 = vmatprep.subr.mxu0 0.0
    %1457 = vmatpush1.xpose.msra.mxu0 0.0
    %1458 = vmatprep.subr.mxu0 0.0
    %1459 = vmatpush1.xpose.msra.mxu0 0.0
    %1460 = vmatprep.subr.mxu0 0.0
    %1461 = vmatpush1.xpose.msra.mxu0 0.0
    %1462 = vmatprep.subr.mxu0 0.0
    %1463 = vmatpush1.xpose.msra.mxu0 0.0
    %1464 = vmatprep.subr.mxu0 0.0
    %1465 = vmatpush1.xpose.msra.mxu0 0.0
    %1466 = vmatprep.mubr.f32.mxu0 0.0
    %1467 = vmatmul.mubr.f32.gmra.mrb[0].mxu0 %v1398
    %v1468 = vpop.f32.mrb[0].mxu0
    %v1469 = vadd.f32 0.0, %v1468
    %v1470 = vpop.f32.mrb[0].mxu0
    %1471 = vdwg.mxu0
    %v1472 = vmul.f32 %v1469, 0.35355338
    %v1473 = vadd.f32 %v1472, %v971
    %v1474 = vsel %vm204, %v1473, -inf
    %1475 = vmax.xlane.f32.xlu0 %v1474
    %v1476 = vpop.xlane.xlu0 %1475
    %v1477 = vsub.f32 %v1473, %v1476
    %v1478 = vmul.f32 %v1477, 1.442695
    %v1479 = vpow.pop %v1478
    %v1480 = vsel %vm204, %v1479, 0.0
    %1481 = vadd.xlane.f32.xlu0 %v1480
    %v1482 = vpop.xlane.xlu0 %1481
    %v1483 = vrcp.pop %v1482
    %v1484 = vmul.f32 %v1479, %v1483
    %1485 = vrot.lane.b32.xlu0 %v198, 40
    %v1486 = vpop.permute.xlu0 %1485
    %v1489 = vsel %vm204, %v1484, 0
    %1491 = vmatprep.subr.mxu0 0.0
    %1492 = vmatpush1.msra.mxu0 %v1486
    %1493 = vmatprep.subr.mxu0 0.0
    %1494 = vmatpush1.msra.mxu0 0.0
    %1495 = vmatprep.subr.mxu0 0.0
    %1496 = vmatpush1.msra.mxu0 0.0
    %1497 = vmatprep.subr.mxu0 0.0
    %1498 = vmatpush1.msra.mxu0 0.0
    %1499 = vmatprep.subr.mxu0 0.0
    %1500 = vmatpush1.msra.mxu0 0.0
    %1501 = vmatprep.subr.mxu0 0.0
    %1502 = vmatpush1.msra.mxu0 0.0
    %1503 = vmatprep.subr.mxu0 0.0
    %1504 = vmatpush1.msra.mxu0 0.0
    %1505 = vmatprep.subr.mxu0 0.0
    %1506 = vmatpush1.msra.mxu0 0.0
    %1507 = vmatprep.subr.mxu0 0.0
    %1508 = vmatpush1.msra.mxu0 0.0
    %1509 = vmatprep.subr.mxu0 0.0
    %1510 = vmatpush1.msra.mxu0 0.0
    %1511 = vmatprep.subr.mxu0 0.0
    %1512 = vmatpush1.msra.mxu0 0.0
    %1513 = vmatprep.subr.mxu0 0.0
    %1514 = vmatpush1.msra.mxu0 0.0
    %1515 = vmatprep.subr.mxu0 0.0
    %1516 = vmatpush1.msra.mxu0 0.0
    %1517 = vmatprep.subr.mxu0 0.0
    %1518 = vmatpush1.msra.mxu0 0.0
    %1519 = vmatprep.subr.mxu0 0.0
    %1520 = vmatpush1.msra.mxu0 0.0
    %1521 = vmatprep.subr.mxu0 0.0
    %1522 = vmatpush1.msra.mxu0 0.0
    %1523 = vmatprep.subr.mxu0 0.0
    %1524 = vmatpush1.msra.mxu0 0.0
    %1525 = vmatprep.subr.mxu0 0.0
    %1526 = vmatpush1.msra.mxu0 0.0
    %1527 = vmatprep.subr.mxu0 0.0
    %1528 = vmatpush1.msra.mxu0 0.0
    %1529 = vmatprep.subr.mxu0 0.0
    %1530 = vmatpush1.msra.mxu0 0.0
    %1531 = vmatprep.subr.mxu0 0.0
    %1532 = vmatpush1.msra.mxu0 0.0
    %1533 = vmatprep.subr.mxu0 0.0
    %1534 = vmatpush1.msra.mxu0 0.0
    %1535 = vmatprep.subr.mxu0 0.0
    %1536 = vmatpush1.msra.mxu0 0.0
    %1537 = vmatprep.subr.mxu0 0.0
    %1538 = vmatpush1.msra.mxu0 0.0
    %1539 = vmatprep.subr.mxu0 0.0
    %1540 = vmatpush1.msra.mxu0 0.0
    %1541 = vmatprep.subr.mxu0 0.0
    %1542 = vmatpush1.msra.mxu0 0.0
    %1543 = vmatprep.subr.mxu0 0.0
    %1544 = vmatpush1.msra.mxu0 0.0
    %1545 = vmatprep.subr.mxu0 0.0
    %1546 = vmatpush1.msra.mxu0 0.0
    %1547 = vmatprep.subr.mxu0 0.0
    %1548 = vmatpush1.msra.mxu0 0.0
    %1549 = vmatprep.subr.mxu0 0.0
    %1550 = vmatpush1.msra.mxu0 0.0
    %1551 = vmatprep.subr.mxu0 0.0
    %1552 = vmatpush1.msra.mxu0 0.0
    %1553 = vmatprep.subr.mxu0 0.0
    %1554 = vmatpush1.msra.mxu0 0.0
    %1555 = vmatprep.mubr.f32.mxu0 0.0
    %1556 = vmatmul.mubr.f32.gmra.mrb[0].mxu0 %v1489
    %v1557 = vpop.f32.mrb[0].mxu0
    %v1558 = vadd.f32 0.0, %v1557
    %v1559 = vpop.f32.mrb[0].mxu0
    %1560 = vdwg.mxu0
    %1562 = vrot.lane.b32.xlu0 %v1224, 8
    %v1563 = vpop.permute.xlu0 %1562
    %1566 = vrot.lane.b32.xlu0 %v1391, 16
    %v1567 = vpop.permute.xlu0 %1566
    %1570 = vrot.lane.b32.xlu0 %v1558, 24
    %v1571 = vpop.permute.xlu0 %1570
    %v1573 = vsel %vm204, %v1057, %v1563
    %v1574 = vsel %vm886, %v1573, %v1567
    %v1575 = vsel %vm888, %v1574, %v1571
    %v1576 = vld [vmem:[%s6] sm:$0xff]
    %v1577 = vld [vmem:[%s6 + $0x8] sm:$0xff]
    %v1578 = vld [vmem:[%s6 + $0x10] sm:$0xff]
    %v1579 = vld [vmem:[%s6 + $0x18] sm:$0xff]
    %v1580 = vld [vmem:[%s7] sm:$0x1]
    %v1582 = vlaneseq
    %v1583 = vshrl.u32 %v1582, 7
    %v1584 = vsub.s32 0, %v1583
    %v1585 = vrot.slane %v1580, %v1584
    %v1588 = vsel %vm65, %v889, 0
    %v1591 = vsel %vm65, %v1575, 0
    %1593 = vmatprep.subr.mxu0 0.0
    %1594 = vmatpush1.msra.mxu0 %v1576
    %1595 = vmatprep.subr.mxu0 0.0
    %1596 = vmatpush1.msra.mxu0 %v1577
    %1597 = vmatprep.subr.mxu0 0.0
    %1598 = vmatpush1.msra.mxu0 %v1578
    %1599 = vmatprep.subr.mxu0 0.0
    %1600 = vmatpush1.msra.mxu0 %v1579
    %1601 = vmatprep.subr.mxu0 0.0
    %1602 = vmatpush1.msra.mxu0 0.0
    %1603 = vmatprep.subr.mxu0 0.0
    %1604 = vmatpush1.msra.mxu0 0.0
    %1605 = vmatprep.subr.mxu0 0.0
    %1606 = vmatpush1.msra.mxu0 0.0
    %1607 = vmatprep.subr.mxu0 0.0
    %1608 = vmatpush1.msra.mxu0 0.0
    %1609 = vmatprep.subr.mxu0 0.0
    %1610 = vmatpush1.msra.mxu0 0.0
    %1611 = vmatprep.subr.mxu0 0.0
    %1612 = vmatpush1.msra.mxu0 0.0
    %1613 = vmatprep.subr.mxu0 0.0
    %1614 = vmatpush1.msra.mxu0 0.0
    %1615 = vmatprep.subr.mxu0 0.0
    %1616 = vmatpush1.msra.mxu0 0.0
    %1617 = vmatprep.subr.mxu0 0.0
    %1618 = vmatpush1.msra.mxu0 0.0
    %1619 = vmatprep.subr.mxu0 0.0
    %1620 = vmatpush1.msra.mxu0 0.0
    %1621 = vmatprep.subr.mxu0 0.0
    %1622 = vmatpush1.msra.mxu0 0.0
    %1623 = vmatprep.subr.mxu0 0.0
    %1624 = vmatpush1.msra.mxu0 0.0
    %1625 = vmatprep.subr.mxu0 0.0
    %1626 = vmatpush1.msra.mxu0 0.0
    %1627 = vmatprep.subr.mxu0 0.0
    %1628 = vmatpush1.msra.mxu0 0.0
    %1629 = vmatprep.subr.mxu0 0.0
    %1630 = vmatpush1.msra.mxu0 0.0
    %1631 = vmatprep.subr.mxu0 0.0
    %1632 = vmatpush1.msra.mxu0 0.0
    %1633 = vmatprep.subr.mxu0 0.0
    %1634 = vmatpush1.msra.mxu0 0.0
    %1635 = vmatprep.subr.mxu0 0.0
    %1636 = vmatpush1.msra.mxu0 0.0
    %1637 = vmatprep.subr.mxu0 0.0
    %1638 = vmatpush1.msra.mxu0 0.0
    %1639 = vmatprep.subr.mxu0 0.0
    %1640 = vmatpush1.msra.mxu0 0.0
    %1641 = vmatprep.subr.mxu0 0.0
    %1642 = vmatpush1.msra.mxu0 0.0
    %1643 = vmatprep.subr.mxu0 0.0
    %1644 = vmatpush1.msra.mxu0 0.0
    %1645 = vmatprep.subr.mxu0 0.0
    %1646 = vmatpush1.msra.mxu0 0.0
    %1647 = vmatprep.subr.mxu0 0.0
    %1648 = vmatpush1.msra.mxu0 0.0
    %1649 = vmatprep.subr.mxu0 0.0
    %1650 = vmatpush1.msra.mxu0 0.0
    %1651 = vmatprep.subr.mxu0 0.0
    %1652 = vmatpush1.msra.mxu0 0.0
    %1653 = vmatprep.subr.mxu0 0.0
    %1654 = vmatpush1.msra.mxu0 0.0
    %1655 = vmatprep.subr.mxu0 0.0
    %1656 = vmatpush1.msra.mxu0 0.0
    %1657 = vmatprep.mubr.f32.mxu0 0.0
    %1658 = vmatmul.mubr.f32.gmra.mrb[0].mxu0 %v1588
    %v1659 = vpop.f32.mrb[0].mxu0
    %v1660 = vadd.f32 %v1585, %v1659
    %v1661 = vpop.f32.mrb[0].mxu0
    %1662 = vmatprep.mubr.f32.mxu0 0.0
    %1663 = vmatmul.mubr.f32.gmra.mrb[0].mxu0 %v1591
    %v1664 = vpop.f32.mrb[0].mxu0
    %v1665 = vadd.f32 %v1585, %v1664
    %v1666 = vpop.f32.mrb[0].mxu0
    %1667 = vdwg.mxu0
    %v1668 = vadd.f32 %v1660, %v107
    %v1669 = vadd.f32 %v1665, %v108
    %v1670 = vld [vmem:[%s8] sm:$0x1]
    %v1671 = vld [vmem:[%s9] sm:$0x1]
    %v1672 = vsel %vm65, %v1668, 0.0
    %1673 = vadd.xlane.f32.xlu0 %v1672
    %v1674 = vpop.xlane.xlu0 %1673
    %v1675 = vsel %vm65, %v1669, 0.0
    %1676 = vadd.xlane.f32.xlu0 %v1675
    %v1677 = vpop.xlane.xlu0 %1676
    %v1678 = vmul.f32 %v1674, %v72
    %v1679 = vmul.f32 %v1677, %v72
    %v1680 = vsub.f32 %v1668, %v1678
    %v1681 = vsub.f32 %v1669, %v1679
    %v1682 = vmul.f32 %v1680, %v1680
    %v1683 = vmul.f32 %v1681, %v1681
    %v1684 = vsel %vm65, %v1682, 0.0
    %1685 = vadd.xlane.f32.xlu0 %v1684
    %v1686 = vpop.xlane.xlu0 %1685
    %v1687 = vsel %vm65, %v1683, 0.0
    %1688 = vadd.xlane.f32.xlu0 %v1687
    %v1689 = vpop.xlane.xlu0 %1688
    %v1690 = vmul.f32 %v1686, %v72
    %v1691 = vmul.f32 %v1689, %v72
    %v1692 = vadd.f32 %v1690, 1e-12
    %v1693 = vadd.f32 %v1691, 1e-12
    %v1694 = vrsqrt.pop %v1692
    %v1695 = vrsqrt.pop %v1693
    %v1696 = vmul.f32 %v1680, %v1694
    %v1697 = vmul.f32 %v1681, %v1695
    %v1699 = vlaneseq
    %v1700 = vshrl.u32 %v1699, 7
    %v1701 = vsub.s32 0, %v1700
    %v1702 = vrot.slane %v1670, %v1701
    %v1704 = vmul.f32 %v1696, %v1702
    %v1705 = vmul.f32 %v1697, %v1702
    %v1707 = vlaneseq
    %v1708 = vshrl.u32 %v1707, 7
    %v1709 = vsub.s32 0, %v1708
    %v1710 = vrot.slane %v1671, %v1709
    %v1712 = vadd.f32 %v1704, %v1710
    %v1713 = vadd.f32 %v1705, %v1710
    %v1714 = vld [vmem:[%s10] sm:$0xff]
    %v1715 = vld [vmem:[%s10 + $0x8] sm:$0xff]
    %v1716 = vld [vmem:[%s10 + $0x10] sm:$0xff]
    %v1717 = vld [vmem:[%s10 + $0x18] sm:$0xff]
    %v1718 = vld [vmem:[%s11] sm:$0x1]
    %v1720 = vlaneseq
    %v1721 = vshrl.u32 %v1720, 7
    %v1722 = vsub.s32 0, %v1721
    %v1723 = vrot.slane %v1718, %v1722
    %v1726 = vsel %vm65, %v1712, 0
    %v1729 = vsel %vm65, %v1713, 0
    %1731 = vmatprep.subr.mxu0 0.0
    %1732 = vmatpush1.msra.mxu0 %v1714
    %1733 = vmatprep.subr.mxu0 0.0
    %1734 = vmatpush1.msra.mxu0 %v1715
    %1735 = vmatprep.subr.mxu0 0.0
    %1736 = vmatpush1.msra.mxu0 %v1716
    %1737 = vmatprep.subr.mxu0 0.0
    %1738 = vmatpush1.msra.mxu0 %v1717
    %1739 = vmatprep.subr.mxu0 0.0
    %1740 = vmatpush1.msra.mxu0 0.0
    %1741 = vmatprep.subr.mxu0 0.0
    %1742 = vmatpush1.msra.mxu0 0.0
    %1743 = vmatprep.subr.mxu0 0.0
    %1744 = vmatpush1.msra.mxu0 0.0
    %1745 = vmatprep.subr.mxu0 0.0
    %1746 = vmatpush1.msra.mxu0 0.0
    %1747 = vmatprep.subr.mxu0 0.0
    %1748 = vmatpush1.msra.mxu0 0.0
    %1749 = vmatprep.subr.mxu0 0.0
    %1750 = vmatpush1.msra.mxu0 0.0
    %1751 = vmatprep.subr.mxu0 0.0
    %1752 = vmatpush1.msra.mxu0 0.0
    %1753 = vmatprep.subr.mxu0 0.0
    %1754 = vmatpush1.msra.mxu0 0.0
    %1755 = vmatprep.subr.mxu0 0.0
    %1756 = vmatpush1.msra.mxu0 0.0
    %1757 = vmatprep.subr.mxu0 0.0
    %1758 = vmatpush1.msra.mxu0 0.0
    %1759 = vmatprep.subr.mxu0 0.0
    %1760 = vmatpush1.msra.mxu0 0.0
    %1761 = vmatprep.subr.mxu0 0.0
    %1762 = vmatpush1.msra.mxu0 0.0
    %1763 = vmatprep.subr.mxu0 0.0
    %1764 = vmatpush1.msra.mxu0 0.0
    %1765 = vmatprep.subr.mxu0 0.0
    %1766 = vmatpush1.msra.mxu0 0.0
    %1767 = vmatprep.subr.mxu0 0.0
    %1768 = vmatpush1.msra.mxu0 0.0
    %1769 = vmatprep.subr.mxu0 0.0
    %1770 = vmatpush1.msra.mxu0 0.0
    %1771 = vmatprep.subr.mxu0 0.0
    %1772 = vmatpush1.msra.mxu0 0.0
    %1773 = vmatprep.subr.mxu0 0.0
    %1774 = vmatpush1.msra.mxu0 0.0
    %1775 = vmatprep.subr.mxu0 0.0
    %1776 = vmatpush1.msra.mxu0 0.0
    %1777 = vmatprep.subr.mxu0 0.0
    %1778 = vmatpush1.msra.mxu0 0.0
    %1779 = vmatprep.subr.mxu0 0.0
    %1780 = vmatpush1.msra.mxu0 0.0
    %1781 = vmatprep.subr.mxu0 0.0
    %1782 = vmatpush1.msra.mxu0 0.0
    %1783 = vmatprep.subr.mxu0 0.0
    %1784 = vmatpush1.msra.mxu0 0.0
    %1785 = vmatprep.subr.mxu0 0.0
    %1786 = vmatpush1.msra.mxu0 0.0
    %1787 = vmatprep.subr.mxu0 0.0
    %1788 = vmatpush1.msra.mxu0 0.0
    %1789 = vmatprep.subr.mxu0 0.0
    %1790 = vmatpush1.msra.mxu0 0.0
    %1791 = vmatprep.subr.mxu0 0.0
    %1792 = vmatpush1.msra.mxu0 0.0
    %1793 = vmatprep.subr.mxu0 0.0
    %1794 = vmatpush1.msra.mxu0 0.0
    %1795 = vmatprep.mubr.f32.mxu0 0.0
    %1796 = vmatmul.mubr.f32.gmra.mrb[0].mxu0 %v1726
    %v1797 = vpop.f32.mrb[0].mxu0
    %v1798 = vadd.f32 %v1723, %v1797
    %v1799 = vpop.f32.mrb[0].mxu0
    %1800 = vmatprep.mubr.f32.mxu0 0.0
    %1801 = vmatmul.mubr.f32.gmra.mrb[0].mxu0 %v1729
    %v1802 = vpop.f32.mrb[0].mxu0
    %v1803 = vadd.f32 %v1723, %v1802
    %v1804 = vpop.f32.mrb[0].mxu0
    %1805 = vdwg.mxu0
    %v1806 = vmul.f32 %v1798, 0.5
    %v1807 = vmul.f32 %v1803, 0.5
    %v1808 = vmul.f32 %v1798, 0.70710677
    %v1809 = vmul.f32 %v1803, 0.70710677
    %v1810 = verf.f32.pop %v1808
    %v1811 = verf.f32.pop %v1809
    %v1812 = vadd.f32 %v1810, 1.0
    %v1813 = vadd.f32 %v1811, 1.0
    %v1814 = vmul.f32 %v1806, %v1812
    %v1815 = vmul.f32 %v1807, %v1813
    %v1816 = vld [vmem:[%s12] sm:$0xff]
    %v1817 = vld [vmem:[%s12 + $0x8] sm:$0xff]
    %v1818 = vld [vmem:[%s12 + $0x10] sm:$0xff]
    %v1819 = vld [vmem:[%s12 + $0x18] sm:$0xff]
    %v1820 = vld [vmem:[%s12 + $0x20] sm:$0xff]
    %v1821 = vld [vmem:[%s12 + $0x28] sm:$0xff]
    %v1822 = vld [vmem:[%s12 + $0x30] sm:$0xff]
    %v1823 = vld [vmem:[%s12 + $0x38] sm:$0xff]
    %v1824 = vld [vmem:[%s13] sm:$0x1]
    %v1826 = vlaneseq
    %v1827 = vshrl.u32 %v1826, 7
    %v1828 = vsub.s32 0, %v1827
    %v1829 = vrot.slane %v1824, %v1828
    %vm1831 = vcmask 523264
    %v1833 = vsel %vm1831, %v1814, 0
    %v1836 = vsel %vm1831, %v1815, 0
    %1838 = vmatprep.subr.mxu0 0.0
    %1839 = vmatpush1.msra.mxu0 %v1816
    %1840 = vmatprep.subr.mxu0 0.0
    %1841 = vmatpush1.msra.mxu0 %v1817
    %1842 = vmatprep.subr.mxu0 0.0
    %1843 = vmatpush1.msra.mxu0 %v1818
    %1844 = vmatprep.subr.mxu0 0.0
    %1845 = vmatpush1.msra.mxu0 %v1819
    %1846 = vmatprep.subr.mxu0 0.0
    %1847 = vmatpush1.msra.mxu0 %v1820
    %1848 = vmatprep.subr.mxu0 0.0
    %1849 = vmatpush1.msra.mxu0 %v1821
    %1850 = vmatprep.subr.mxu0 0.0
    %1851 = vmatpush1.msra.mxu0 %v1822
    %1852 = vmatprep.subr.mxu0 0.0
    %1853 = vmatpush1.msra.mxu0 %v1823
    %1854 = vmatprep.subr.mxu0 0.0
    %1855 = vmatpush1.msra.mxu0 0.0
    %1856 = vmatprep.subr.mxu0 0.0
    %1857 = vmatpush1.msra.mxu0 0.0
    %1858 = vmatprep.subr.mxu0 0.0
    %1859 = vmatpush1.msra.mxu0 0.0
    %1860 = vmatprep.subr.mxu0 0.0
    %1861 = vmatpush1.msra.mxu0 0.0
    %1862 = vmatprep.subr.mxu0 0.0
    %1863 = vmatpush1.msra.mxu0 0.0
    %1864 = vmatprep.subr.mxu0 0.0
    %1865 = vmatpush1.msra.mxu0 0.0
    %1866 = vmatprep.subr.mxu0 0.0
    %1867 = vmatpush1.msra.mxu0 0.0
    %1868 = vmatprep.subr.mxu0 0.0
    %1869 = vmatpush1.msra.mxu0 0.0
    %1870 = vmatprep.subr.mxu0 0.0
    %1871 = vmatpush1.msra.mxu0 0.0
    %1872 = vmatprep.subr.mxu0 0.0
    %1873 = vmatpush1.msra.mxu0 0.0
    %1874 = vmatprep.subr.mxu0 0.0
    %1875 = vmatpush1.msra.mxu0 0.0
    %1876 = vmatprep.subr.mxu0 0.0
    %1877 = vmatpush1.msra.mxu0 0.0
    %1878 = vmatprep.subr.mxu0 0.0
    %1879 = vmatpush1.msra.mxu0 0.0
    %1880 = vmatprep.subr.mxu0 0.0
    %1881 = vmatpush1.msra.mxu0 0.0
    %1882 = vmatprep.subr.mxu0 0.0
    %1883 = vmatpush1.msra.mxu0 0.0
    %1884 = vmatprep.subr.mxu0 0.0
    %1885 = vmatpush1.msra.mxu0 0.0
    %1886 = vmatprep.subr.mxu0 0.0
    %1887 = vmatpush1.msra.mxu0 0.0
    %1888 = vmatprep.subr.mxu0 0.0
    %1889 = vmatpush1.msra.mxu0 0.0
    %1890 = vmatprep.subr.mxu0 0.0
    %1891 = vmatpush1.msra.mxu0 0.0
    %1892 = vmatprep.subr.mxu0 0.0
    %1893 = vmatpush1.msra.mxu0 0.0
    %1894 = vmatprep.subr.mxu0 0.0
    %1895 = vmatpush1.msra.mxu0 0.0
    %1896 = vmatprep.subr.mxu0 0.0
    %1897 = vmatpush1.msra.mxu0 0.0
    %1898 = vmatprep.subr.mxu0 0.0
    %1899 = vmatpush1.msra.mxu0 0.0
    %1900 = vmatprep.subr.mxu0 0.0
    %1901 = vmatpush1.msra.mxu0 0.0
    %1902 = vmatprep.mubr.f32.mxu0 0.0
    %1903 = vmatmul.mubr.f32.gmra.mrb[0].mxu0 %v1833
    %v1904 = vpop.f32.mrb[0].mxu0
    %v1905 = vadd.f32 %v1829, %v1904
    %v1906 = vpop.f32.mrb[0].mxu0
    %1907 = vmatprep.mubr.f32.mxu0 0.0
    %1908 = vmatmul.mubr.f32.gmra.mrb[0].mxu0 %v1836
    %v1909 = vpop.f32.mrb[0].mxu0
    %v1910 = vadd.f32 %v1829, %v1909
    %v1911 = vpop.f32.mrb[0].mxu0
    %1912 = vdwg.mxu0
    %v1913 = vadd.f32 %v1905, %v1712
    %v1914 = vadd.f32 %v1910, %v1713
    %v1915 = vld [vmem:[%s14] sm:$0x1]
    %v1916 = vld [vmem:[%s15] sm:$0x1]
    %v1917 = vsel %vm65, %v1913, 0.0
    %1918 = vadd.xlane.f32.xlu0 %v1917
    %v1919 = vpop.xlane.xlu0 %1918
    %v1920 = vsel %vm65, %v1914, 0.0
    %1921 = vadd.xlane.f32.xlu0 %v1920
    %v1922 = vpop.xlane.xlu0 %1921
    %v1923 = vmul.f32 %v1919, %v72
    %v1924 = vmul.f32 %v1922, %v72
    %v1925 = vsub.f32 %v1913, %v1923
    %v1926 = vsub.f32 %v1914, %v1924
    %v1927 = vmul.f32 %v1925, %v1925
    %v1928 = vmul.f32 %v1926, %v1926
    %v1929 = vsel %vm65, %v1927, 0.0
    %1930 = vadd.xlane.f32.xlu0 %v1929
    %v1931 = vpop.xlane.xlu0 %1930
    %v1932 = vsel %vm65, %v1928, 0.0
    %1933 = vadd.xlane.f32.xlu0 %v1932
    %v1934 = vpop.xlane.xlu0 %1933
    %v1935 = vmul.f32 %v1931, %v72
    %v1936 = vmul.f32 %v1934, %v72
    %v1937 = vadd.f32 %v1935, 1e-12
    %v1938 = vadd.f32 %v1936, 1e-12
    %v1939 = vrsqrt.pop %v1937
    %v1940 = vrsqrt.pop %v1938
    %v1941 = vmul.f32 %v1925, %v1939
    %v1942 = vmul.f32 %v1926, %v1940
    %v1944 = vlaneseq
    %v1945 = vshrl.u32 %v1944, 7
    %v1946 = vsub.s32 0, %v1945
    %v1947 = vrot.slane %v1915, %v1946
    %v1949 = vmul.f32 %v1941, %v1947
    %v1950 = vmul.f32 %v1942, %v1947
    %v1952 = vlaneseq
    %v1953 = vshrl.u32 %v1952, 7
    %v1954 = vsub.s32 0, %v1953
    %v1955 = vrot.slane %v1916, %v1954
    %v1957 = vadd.f32 %v1949, %v1955
    %v1958 = vadd.f32 %v1950, %v1955
    %s1959 = scalar_lea.vmem %s4, 32
    %v1960 = vld [vmem:[%s1959] sm:$0xff]
    %v1961 = vld [vmem:[%s1959 + $0x8] sm:$0xff]
    %v1962 = vld [vmem:[%s1959 + $0x10] sm:$0xff]
    %v1963 = vld [vmem:[%s1959 + $0x18] sm:$0xff]
    %s1964 = scalar_lea.vmem %s5, 1
    %v1965 = vld [vmem:[%s1964] sm:$0x1]
    %v1967 = vlaneseq
    %v1968 = vshrl.u32 %v1967, 7
    %v1969 = vsub.s32 0, %v1968
    %v1970 = vrot.slane %v1965, %v1969
    %v1973 = vsel %vm65, %v1957, 0
    %v1976 = vsel %vm65, %v1958, 0
    %1978 = vmatprep.subr.mxu0 0.0
    %1979 = vmatpush1.msra.mxu0 %v1960
    %1980 = vmatprep.subr.mxu0 0.0
    %1981 = vmatpush1.msra.mxu0 %v1961
    %1982 = vmatprep.subr.mxu0 0.0
    %1983 = vmatpush1.msra.mxu0 %v1962
    %1984 = vmatprep.subr.mxu0 0.0
    %1985 = vmatpush1.msra.mxu0 %v1963
    %1986 = vmatprep.subr.mxu0 0.0
    %1987 = vmatpush1.msra.mxu0 0.0
    %1988 = vmatprep.subr.mxu0 0.0
    %1989 = vmatpush1.msra.mxu0 0.0
    %1990 = vmatprep.subr.mxu0 0.0
    %1991 = vmatpush1.msra.mxu0 0.0
    %1992 = vmatprep.subr.mxu0 0.0
    %1993 = vmatpush1.msra.mxu0 0.0
    %1994 = vmatprep.subr.mxu0 0.0
    %1995 = vmatpush1.msra.mxu0 0.0
    %1996 = vmatprep.subr.mxu0 0.0
    %1997 = vmatpush1.msra.mxu0 0.0
    %1998 = vmatprep.subr.mxu0 0.0
    %1999 = vmatpush1.msra.mxu0 0.0
    %2000 = vmatprep.subr.mxu0 0.0
    %2001 = vmatpush1.msra.mxu0 0.0
    %2002 = vmatprep.subr.mxu0 0.0
    %2003 = vmatpush1.msra.mxu0 0.0
    %2004 = vmatprep.subr.mxu0 0.0
    %2005 = vmatpush1.msra.mxu0 0.0
    %2006 = vmatprep.subr.mxu0 0.0
    %2007 = vmatpush1.msra.mxu0 0.0
    %2008 = vmatprep.subr.mxu0 0.0
    %2009 = vmatpush1.msra.mxu0 0.0
    %2010 = vmatprep.subr.mxu0 0.0
    %2011 = vmatpush1.msra.mxu0 0.0
    %2012 = vmatprep.subr.mxu0 0.0
    %2013 = vmatpush1.msra.mxu0 0.0
    %2014 = vmatprep.subr.mxu0 0.0
    %2015 = vmatpush1.msra.mxu0 0.0
    %2016 = vmatprep.subr.mxu0 0.0
    %2017 = vmatpush1.msra.mxu0 0.0
    %2018 = vmatprep.subr.mxu0 0.0
    %2019 = vmatpush1.msra.mxu0 0.0
    %2020 = vmatprep.subr.mxu0 0.0
    %2021 = vmatpush1.msra.mxu0 0.0
    %2022 = vmatprep.subr.mxu0 0.0
    %2023 = vmatpush1.msra.mxu0 0.0
    %2024 = vmatprep.subr.mxu0 0.0
    %2025 = vmatpush1.msra.mxu0 0.0
    %2026 = vmatprep.subr.mxu0 0.0
    %2027 = vmatpush1.msra.mxu0 0.0
    %2028 = vmatprep.subr.mxu0 0.0
    %2029 = vmatpush1.msra.mxu0 0.0
    %2030 = vmatprep.subr.mxu0 0.0
    %2031 = vmatpush1.msra.mxu0 0.0
    %2032 = vmatprep.subr.mxu0 0.0
    %2033 = vmatpush1.msra.mxu0 0.0
    %2034 = vmatprep.subr.mxu0 0.0
    %2035 = vmatpush1.msra.mxu0 0.0
    %2036 = vmatprep.subr.mxu0 0.0
    %2037 = vmatpush1.msra.mxu0 0.0
    %2038 = vmatprep.subr.mxu0 0.0
    %2039 = vmatpush1.msra.mxu0 0.0
    %2040 = vmatprep.subr.mxu0 0.0
    %2041 = vmatpush1.msra.mxu0 0.0
    %2042 = vmatprep.mubr.f32.mxu0 0.0
    %2043 = vmatmul.mubr.f32.gmra.mrb[0].mxu0 %v1973
    %v2044 = vpop.f32.mrb[0].mxu0
    %v2045 = vadd.f32 %v1970, %v2044
    %v2046 = vpop.f32.mrb[0].mxu0
    %2047 = vmatprep.mubr.f32.mxu0 0.0
    %2048 = vmatmul.mubr.f32.gmra.mrb[0].mxu0 %v1976
    %v2049 = vpop.f32.mrb[0].mxu0
    %v2050 = vadd.f32 %v1970, %v2049
    %v2051 = vpop.f32.mrb[0].mxu0
    %2052 = vdwg.mxu0
    %2054 = vrot.lane.b32.xlu0 %v2045, 96
    %v2055 = vpop.permute.xlu0 %2054
    %v2056 = vsel %vm204, %v2045, 0
    %v2058 = vsel %vm204, %v2055, 0
    %2060 = vmatprep.subr.mxu0 0.0
    %2061 = vmatpush1.xpose.msra.mxu0 %v2058
    %2062 = vmatprep.subr.mxu0 0.0
    %2063 = vmatpush1.xpose.msra.mxu0 0.0
    %2064 = vmatprep.subr.mxu0 0.0
    %2065 = vmatpush1.xpose.msra.mxu0 0.0
    %2066 = vmatprep.subr.mxu0 0.0
    %2067 = vmatpush1.xpose.msra.mxu0 0.0
    %2068 = vmatprep.subr.mxu0 0.0
    %2069 = vmatpush1.xpose.msra.mxu0 0.0
    %2070 = vmatprep.subr.mxu0 0.0
    %2071 = vmatpush1.xpose.msra.mxu0 0.0
    %2072 = vmatprep.subr.mxu0 0.0
    %2073 = vmatpush1.xpose.msra.mxu0 0.0
    %2074 = vmatprep.subr.mxu0 0.0
    %2075 = vmatpush1.xpose.msra.mxu0 0.0
    %2076 = vmatprep.subr.mxu0 0.0
    %2077 = vmatpush1.xpose.msra.mxu0 0.0
    %2078 = vmatprep.subr.mxu0 0.0
    %2079 = vmatpush1.xpose.msra.mxu0 0.0
    %2080 = vmatprep.subr.mxu0 0.0
    %2081 = vmatpush1.xpose.msra.mxu0 0.0
    %2082 = vmatprep.subr.mxu0 0.0
    %2083 = vmatpush1.xpose.msra.mxu0 0.0
    %2084 = vmatprep.subr.mxu0 0.0
    %2085 = vmatpush1.xpose.msra.mxu0 0.0
    %2086 = vmatprep.subr.mxu0 0.0
    %2087 = vmatpush1.xpose.msra.mxu0 0.0
    %2088 = vmatprep.subr.mxu0 0.0
    %2089 = vmatpush1.xpose.msra.mxu0 0.0
    %2090 = vmatprep.subr.mxu0 0.0
    %2091 = vmatpush1.xpose.msra.mxu0 0.0
    %2092 = vmatprep.subr.mxu0 0.0
    %2093 = vmatpush1.xpose.msra.mxu0 0.0
    %2094 = vmatprep.subr.mxu0 0.0
    %2095 = vmatpush1.xpose.msra.mxu0 0.0
    %2096 = vmatprep.subr.mxu0 0.0
    %2097 = vmatpush1.xpose.msra.mxu0 0.0
    %2098 = vmatprep.subr.mxu0 0.0
    %2099 = vmatpush1.xpose.msra.mxu0 0.0
    %2100 = vmatprep.subr.mxu0 0.0
    %2101 = vmatpush1.xpose.msra.mxu0 0.0
    %2102 = vmatprep.subr.mxu0 0.0
    %2103 = vmatpush1.xpose.msra.mxu0 0.0
    %2104 = vmatprep.subr.mxu0 0.0
    %2105 = vmatpush1.xpose.msra.mxu0 0.0
    %2106 = vmatprep.subr.mxu0 0.0
    %2107 = vmatpush1.xpose.msra.mxu0 0.0
    %2108 = vmatprep.subr.mxu0 0.0
    %2109 = vmatpush1.xpose.msra.mxu0 0.0
    %2110 = vmatprep.subr.mxu0 0.0
    %2111 = vmatpush1.xpose.msra.mxu0 0.0
    %2112 = vmatprep.subr.mxu0 0.0
    %2113 = vmatpush1.xpose.msra.mxu0 0.0
    %2114 = vmatprep.subr.mxu0 0.0
    %2115 = vmatpush1.xpose.msra.mxu0 0.0
    %2116 = vmatprep.subr.mxu0 0.0
    %2117 = vmatpush1.xpose.msra.mxu0 0.0
    %2118 = vmatprep.subr.mxu0 0.0
    %2119 = vmatpush1.xpose.msra.mxu0 0.0
    %2120 = vmatprep.subr.mxu0 0.0
    %2121 = vmatpush1.xpose.msra.mxu0 0.0
    %2122 = vmatprep.subr.mxu0 0.0
    %2123 = vmatpush1.xpose.msra.mxu0 0.0
    %2124 = vmatprep.mubr.f32.mxu0 0.0
    %2125 = vmatmul.mubr.f32.gmra.mrb[0].mxu0 %v2056
    %v2126 = vpop.f32.mrb[0].mxu0
    %v2127 = vadd.f32 0.0, %v2126
    %v2128 = vpop.f32.mrb[0].mxu0
    %2129 = vdwg.mxu0
    %v2130 = vmul.f32 %v2127, 0.35355338
    %v2131 = vadd.f32 %v2130, %v283
    %v2132 = vsel %vm204, %v2131, -inf
    %2133 = vmax.xlane.f32.xlu0 %v2132
    %v2134 = vpop.xlane.xlu0 %2133
    %v2135 = vsub.f32 %v2131, %v2134
    %v2136 = vmul.f32 %v2135, 1.442695
    %v2137 = vpow.pop %v2136
    %v2138 = vsel %vm204, %v2137, 0.0
    %2139 = vadd.xlane.f32.xlu0 %v2138
    %v2140 = vpop.xlane.xlu0 %2139
    %v2141 = vrcp.pop %v2140
    %v2142 = vmul.f32 %v2137, %v2141
    %2143 = vrot.lane.b32.xlu0 %v2045, 64
    %v2144 = vpop.permute.xlu0 %2143
    %v2147 = vsel %vm204, %v2142, 0
    %2149 = vmatprep.subr.mxu0 0.0
    %2150 = vmatpush1.msra.mxu0 %v2144
    %2151 = vmatprep.subr.mxu0 0.0
    %2152 = vmatpush1.msra.mxu0 0.0
    %2153 = vmatprep.subr.mxu0 0.0
    %2154 = vmatpush1.msra.mxu0 0.0
    %2155 = vmatprep.subr.mxu0 0.0
    %2156 = vmatpush1.msra.mxu0 0.0
    %2157 = vmatprep.subr.mxu0 0.0
    %2158 = vmatpush1.msra.mxu0 0.0
    %2159 = vmatprep.subr.mxu0 0.0
    %2160 = vmatpush1.msra.mxu0 0.0
    %2161 = vmatprep.subr.mxu0 0.0
    %2162 = vmatpush1.msra.mxu0 0.0
    %2163 = vmatprep.subr.mxu0 0.0
    %2164 = vmatpush1.msra.mxu0 0.0
    %2165 = vmatprep.subr.mxu0 0.0
    %2166 = vmatpush1.msra.mxu0 0.0
    %2167 = vmatprep.subr.mxu0 0.0
    %2168 = vmatpush1.msra.mxu0 0.0
    %2169 = vmatprep.subr.mxu0 0.0
    %2170 = vmatpush1.msra.mxu0 0.0
    %2171 = vmatprep.subr.mxu0 0.0
    %2172 = vmatpush1.msra.mxu0 0.0
    %2173 = vmatprep.subr.mxu0 0.0
    %2174 = vmatpush1.msra.mxu0 0.0
    %2175 = vmatprep.subr.mxu0 0.0
    %2176 = vmatpush1.msra.mxu0 0.0
    %2177 = vmatprep.subr.mxu0 0.0
    %2178 = vmatpush1.msra.mxu0 0.0
    %2179 = vmatprep.subr.mxu0 0.0
    %2180 = vmatpush1.msra.mxu0 0.0
    %2181 = vmatprep.subr.mxu0 0.0
    %2182 = vmatpush1.msra.mxu0 0.0
    %2183 = vmatprep.subr.mxu0 0.0
    %2184 = vmatpush1.msra.mxu0 0.0
    %2185 = vmatprep.subr.mxu0 0.0
    %2186 = vmatpush1.msra.mxu0 0.0
    %2187 = vmatprep.subr.mxu0 0.0
    %2188 = vmatpush1.msra.mxu0 0.0
    %2189 = vmatprep.subr.mxu0 0.0
    %2190 = vmatpush1.msra.mxu0 0.0
    %2191 = vmatprep.subr.mxu0 0.0
    %2192 = vmatpush1.msra.mxu0 0.0
    %2193 = vmatprep.subr.mxu0 0.0
    %2194 = vmatpush1.msra.mxu0 0.0
    %2195 = vmatprep.subr.mxu0 0.0
    %2196 = vmatpush1.msra.mxu0 0.0
    %2197 = vmatprep.subr.mxu0 0.0
    %2198 = vmatpush1.msra.mxu0 0.0
    %2199 = vmatprep.subr.mxu0 0.0
    %2200 = vmatpush1.msra.mxu0 0.0
    %2201 = vmatprep.subr.mxu0 0.0
    %2202 = vmatpush1.msra.mxu0 0.0
    %2203 = vmatprep.subr.mxu0 0.0
    %2204 = vmatpush1.msra.mxu0 0.0
    %2205 = vmatprep.subr.mxu0 0.0
    %2206 = vmatpush1.msra.mxu0 0.0
    %2207 = vmatprep.subr.mxu0 0.0
    %2208 = vmatpush1.msra.mxu0 0.0
    %2209 = vmatprep.subr.mxu0 0.0
    %2210 = vmatpush1.msra.mxu0 0.0
    %2211 = vmatprep.subr.mxu0 0.0
    %2212 = vmatpush1.msra.mxu0 0.0
    %2213 = vmatprep.mubr.f32.mxu0 0.0
    %2214 = vmatmul.mubr.f32.gmra.mrb[0].mxu0 %v2147
    %v2215 = vpop.f32.mrb[0].mxu0
    %v2216 = vadd.f32 0.0, %v2215
    %v2217 = vpop.f32.mrb[0].mxu0
    %2218 = vdwg.mxu0
    %2219 = vrot.lane.b32.xlu0 %v2045, 120
    %v2220 = vpop.permute.xlu0 %2219
    %2221 = vrot.lane.b32.xlu0 %v2045, 88
    %v2222 = vpop.permute.xlu0 %2221
    %v2223 = vsel %vm204, %v2220, 0
    %v2225 = vsel %vm204, %v2222, 0
    %2227 = vmatprep.subr.mxu0 0.0
    %2228 = vmatpush1.xpose.msra.mxu0 %v2225
    %2229 = vmatprep.subr.mxu0 0.0
    %2230 = vmatpush1.xpose.msra.mxu0 0.0
    %2231 = vmatprep.subr.mxu0 0.0
    %2232 = vmatpush1.xpose.msra.mxu0 0.0
    %2233 = vmatprep.subr.mxu0 0.0
    %2234 = vmatpush1.xpose.msra.mxu0 0.0
    %2235 = vmatprep.subr.mxu0 0.0
    %2236 = vmatpush1.xpose.msra.mxu0 0.0
    %2237 = vmatprep.subr.mxu0 0.0
    %2238 = vmatpush1.xpose.msra.mxu0 0.0
    %2239 = vmatprep.subr.mxu0 0.0
    %2240 = vmatpush1.xpose.msra.mxu0 0.0
    %2241 = vmatprep.subr.mxu0 0.0
    %2242 = vmatpush1.xpose.msra.mxu0 0.0
    %2243 = vmatprep.subr.mxu0 0.0
    %2244 = vmatpush1.xpose.msra.mxu0 0.0
    %2245 = vmatprep.subr.mxu0 0.0
    %2246 = vmatpush1.xpose.msra.mxu0 0.0
    %2247 = vmatprep.subr.mxu0 0.0
    %2248 = vmatpush1.xpose.msra.mxu0 0.0
    %2249 = vmatprep.subr.mxu0 0.0
    %2250 = vmatpush1.xpose.msra.mxu0 0.0
    %2251 = vmatprep.subr.mxu0 0.0
    %2252 = vmatpush1.xpose.msra.mxu0 0.0
    %2253 = vmatprep.subr.mxu0 0.0
    %2254 = vmatpush1.xpose.msra.mxu0 0.0
    %2255 = vmatprep.subr.mxu0 0.0
    %2256 = vmatpush1.xpose.msra.mxu0 0.0
    %2257 = vmatprep.subr.mxu0 0.0
    %2258 = vmatpush1.xpose.msra.mxu0 0.0
    %2259 = vmatprep.subr.mxu0 0.0
    %2260 = vmatpush1.xpose.msra.mxu0 0.0
    %2261 = vmatprep.subr.mxu0 0.0
    %2262 = vmatpush1.xpose.msra.mxu0 0.0
    %2263 = vmatprep.subr.mxu0 0.0
    %2264 = vmatpush1.xpose.msra.mxu0 0.0
    %2265 = vmatprep.subr.mxu0 0.0
    %2266 = vmatpush1.xpose.msra.mxu0 0.0
    %2267 = vmatprep.subr.mxu0 0.0
    %2268 = vmatpush1.xpose.msra.mxu0 0.0
    %2269 = vmatprep.subr.mxu0 0.0
    %2270 = vmatpush1.xpose.msra.mxu0 0.0
    %2271 = vmatprep.subr.mxu0 0.0
    %2272 = vmatpush1.xpose.msra.mxu0 0.0
    %2273 = vmatprep.subr.mxu0 0.0
    %2274 = vmatpush1.xpose.msra.mxu0 0.0
    %2275 = vmatprep.subr.mxu0 0.0
    %2276 = vmatpush1.xpose.msra.mxu0 0.0
    %2277 = vmatprep.subr.mxu0 0.0
    %2278 = vmatpush1.xpose.msra.mxu0 0.0
    %2279 = vmatprep.subr.mxu0 0.0
    %2280 = vmatpush1.xpose.msra.mxu0 0.0
    %2281 = vmatprep.subr.mxu0 0.0
    %2282 = vmatpush1.xpose.msra.mxu0 0.0
    %2283 = vmatprep.subr.mxu0 0.0
    %2284 = vmatpush1.xpose.msra.mxu0 0.0
    %2285 = vmatprep.subr.mxu0 0.0
    %2286 = vmatpush1.xpose.msra.mxu0 0.0
    %2287 = vmatprep.subr.mxu0 0.0
    %2288 = vmatpush1.xpose.msra.mxu0 0.0
    %2289 = vmatprep.subr.mxu0 0.0
    %2290 = vmatpush1.xpose.msra.mxu0 0.0
    %2291 = vmatprep.mubr.f32.mxu0 0.0
    %2292 = vmatmul.mubr.f32.gmra.mrb[0].mxu0 %v2223
    %v2293 = vpop.f32.mrb[0].mxu0
    %v2294 = vadd.f32 0.0, %v2293
    %v2295 = vpop.f32.mrb[0].mxu0
    %2296 = vdwg.mxu0
    %v2297 = vmul.f32 %v2294, 0.35355338
    %v2298 = vadd.f32 %v2297, %v283
    %v2299 = vsel %vm204, %v2298, -inf
    %2300 = vmax.xlane.f32.xlu0 %v2299
    %v2301 = vpop.xlane.xlu0 %2300
    %v2302 = vsub.f32 %v2298, %v2301
    %v2303 = vmul.f32 %v2302, 1.442695
    %v2304 = vpow.pop %v2303
    %v2305 = vsel %vm204, %v2304, 0.0
    %2306 = vadd.xlane.f32.xlu0 %v2305
    %v2307 = vpop.xlane.xlu0 %2306
    %v2308 = vrcp.pop %v2307
    %v2309 = vmul.f32 %v2304, %v2308
    %2310 = vrot.lane.b32.xlu0 %v2045, 56
    %v2311 = vpop.permute.xlu0 %2310
    %v2314 = vsel %vm204, %v2309, 0
    %2316 = vmatprep.subr.mxu0 0.0
    %2317 = vmatpush1.msra.mxu0 %v2311
    %2318 = vmatprep.subr.mxu0 0.0
    %2319 = vmatpush1.msra.mxu0 0.0
    %2320 = vmatprep.subr.mxu0 0.0
    %2321 = vmatpush1.msra.mxu0 0.0
    %2322 = vmatprep.subr.mxu0 0.0
    %2323 = vmatpush1.msra.mxu0 0.0
    %2324 = vmatprep.subr.mxu0 0.0
    %2325 = vmatpush1.msra.mxu0 0.0
    %2326 = vmatprep.subr.mxu0 0.0
    %2327 = vmatpush1.msra.mxu0 0.0
    %2328 = vmatprep.subr.mxu0 0.0
    %2329 = vmatpush1.msra.mxu0 0.0
    %2330 = vmatprep.subr.mxu0 0.0
    %2331 = vmatpush1.msra.mxu0 0.0
    %2332 = vmatprep.subr.mxu0 0.0
    %2333 = vmatpush1.msra.mxu0 0.0
    %2334 = vmatprep.subr.mxu0 0.0
    %2335 = vmatpush1.msra.mxu0 0.0
    %2336 = vmatprep.subr.mxu0 0.0
    %2337 = vmatpush1.msra.mxu0 0.0
    %2338 = vmatprep.subr.mxu0 0.0
    %2339 = vmatpush1.msra.mxu0 0.0
    %2340 = vmatprep.subr.mxu0 0.0
    %2341 = vmatpush1.msra.mxu0 0.0
    %2342 = vmatprep.subr.mxu0 0.0
    %2343 = vmatpush1.msra.mxu0 0.0
    %2344 = vmatprep.subr.mxu0 0.0
    %2345 = vmatpush1.msra.mxu0 0.0
    %2346 = vmatprep.subr.mxu0 0.0
    %2347 = vmatpush1.msra.mxu0 0.0
    %2348 = vmatprep.subr.mxu0 0.0
    %2349 = vmatpush1.msra.mxu0 0.0
    %2350 = vmatprep.subr.mxu0 0.0
    %2351 = vmatpush1.msra.mxu0 0.0
    %2352 = vmatprep.subr.mxu0 0.0
    %2353 = vmatpush1.msra.mxu0 0.0
    %2354 = vmatprep.subr.mxu0 0.0
    %2355 = vmatpush1.msra.mxu0 0.0
    %2356 = vmatprep.subr.mxu0 0.0
    %2357 = vmatpush1.msra.mxu0 0.0
    %2358 = vmatprep.subr.mxu0 0.0
    %2359 = vmatpush1.msra.mxu0 0.0
    %2360 = vmatprep.subr.mxu0 0.0
    %2361 = vmatpush1.msra.mxu0 0.0
    %2362 = vmatprep.subr.mxu0 0.0
    %2363 = vmatpush1.msra.mxu0 0.0
    %2364 = vmatprep.subr.mxu0 0.0
    %2365 = vmatpush1.msra.mxu0 0.0
    %2366 = vmatprep.subr.mxu0 0.0
    %2367 = vmatpush1.msra.mxu0 0.0
    %2368 = vmatprep.subr.mxu0 0.0
    %2369 = vmatpush1.msra.mxu0 0.0
    %2370 = vmatprep.subr.mxu0 0.0
    %2371 = vmatpush1.msra.mxu0 0.0
    %2372 = vmatprep.subr.mxu0 0.0
    %2373 = vmatpush1.msra.mxu0 0.0
    %2374 = vmatprep.subr.mxu0 0.0
    %2375 = vmatpush1.msra.mxu0 0.0
    %2376 = vmatprep.subr.mxu0 0.0
    %2377 = vmatpush1.msra.mxu0 0.0
    %2378 = vmatprep.subr.mxu0 0.0
    %2379 = vmatpush1.msra.mxu0 0.0
    %2380 = vmatprep.mubr.f32.mxu0 0.0
    %2381 = vmatmul.mubr.f32.gmra.mrb[0].mxu0 %v2314
    %v2382 = vpop.f32.mrb[0].mxu0
    %v2383 = vadd.f32 0.0, %v2382
    %v2384 = vpop.f32.mrb[0].mxu0
    %2385 = vdwg.mxu0
    %2386 = vrot.lane.b32.xlu0 %v2045, 112
    %v2387 = vpop.permute.xlu0 %2386
    %2388 = vrot.lane.b32.xlu0 %v2045, 80
    %v2389 = vpop.permute.xlu0 %2388
    %v2390 = vsel %vm204, %v2387, 0
    %v2392 = vsel %vm204, %v2389, 0
    %2394 = vmatprep.subr.mxu0 0.0
    %2395 = vmatpush1.xpose.msra.mxu0 %v2392
    %2396 = vmatprep.subr.mxu0 0.0
    %2397 = vmatpush1.xpose.msra.mxu0 0.0
    %2398 = vmatprep.subr.mxu0 0.0
    %2399 = vmatpush1.xpose.msra.mxu0 0.0
    %2400 = vmatprep.subr.mxu0 0.0
    %2401 = vmatpush1.xpose.msra.mxu0 0.0
    %2402 = vmatprep.subr.mxu0 0.0
    %2403 = vmatpush1.xpose.msra.mxu0 0.0
    %2404 = vmatprep.subr.mxu0 0.0
    %2405 = vmatpush1.xpose.msra.mxu0 0.0
    %2406 = vmatprep.subr.mxu0 0.0
    %2407 = vmatpush1.xpose.msra.mxu0 0.0
    %2408 = vmatprep.subr.mxu0 0.0
    %2409 = vmatpush1.xpose.msra.mxu0 0.0
    %2410 = vmatprep.subr.mxu0 0.0
    %2411 = vmatpush1.xpose.msra.mxu0 0.0
    %2412 = vmatprep.subr.mxu0 0.0
    %2413 = vmatpush1.xpose.msra.mxu0 0.0
    %2414 = vmatprep.subr.mxu0 0.0
    %2415 = vmatpush1.xpose.msra.mxu0 0.0
    %2416 = vmatprep.subr.mxu0 0.0
    %2417 = vmatpush1.xpose.msra.mxu0 0.0
    %2418 = vmatprep.subr.mxu0 0.0
    %2419 = vmatpush1.xpose.msra.mxu0 0.0
    %2420 = vmatprep.subr.mxu0 0.0
    %2421 = vmatpush1.xpose.msra.mxu0 0.0
    %2422 = vmatprep.subr.mxu0 0.0
    %2423 = vmatpush1.xpose.msra.mxu0 0.0
    %2424 = vmatprep.subr.mxu0 0.0
    %2425 = vmatpush1.xpose.msra.mxu0 0.0
    %2426 = vmatprep.subr.mxu0 0.0
    %2427 = vmatpush1.xpose.msra.mxu0 0.0
    %2428 = vmatprep.subr.mxu0 0.0
    %2429 = vmatpush1.xpose.msra.mxu0 0.0
    %2430 = vmatprep.subr.mxu0 0.0
    %2431 = vmatpush1.xpose.msra.mxu0 0.0
    %2432 = vmatprep.subr.mxu0 0.0
    %2433 = vmatpush1.xpose.msra.mxu0 0.0
    %2434 = vmatprep.subr.mxu0 0.0
    %2435 = vmatpush1.xpose.msra.mxu0 0.0
    %2436 = vmatprep.subr.mxu0 0.0
    %2437 = vmatpush1.xpose.msra.mxu0 0.0
    %2438 = vmatprep.subr.mxu0 0.0
    %2439 = vmatpush1.xpose.msra.mxu0 0.0
    %2440 = vmatprep.subr.mxu0 0.0
    %2441 = vmatpush1.xpose.msra.mxu0 0.0
    %2442 = vmatprep.subr.mxu0 0.0
    %2443 = vmatpush1.xpose.msra.mxu0 0.0
    %2444 = vmatprep.subr.mxu0 0.0
    %2445 = vmatpush1.xpose.msra.mxu0 0.0
    %2446 = vmatprep.subr.mxu0 0.0
    %2447 = vmatpush1.xpose.msra.mxu0 0.0
    %2448 = vmatprep.subr.mxu0 0.0
    %2449 = vmatpush1.xpose.msra.mxu0 0.0
    %2450 = vmatprep.subr.mxu0 0.0
    %2451 = vmatpush1.xpose.msra.mxu0 0.0
    %2452 = vmatprep.subr.mxu0 0.0
    %2453 = vmatpush1.xpose.msra.mxu0 0.0
    %2454 = vmatprep.subr.mxu0 0.0
    %2455 = vmatpush1.xpose.msra.mxu0 0.0
    %2456 = vmatprep.subr.mxu0 0.0
    %2457 = vmatpush1.xpose.msra.mxu0 0.0
    %2458 = vmatprep.mubr.f32.mxu0 0.0
    %2459 = vmatmul.mubr.f32.gmra.mrb[0].mxu0 %v2390
    %v2460 = vpop.f32.mrb[0].mxu0
    %v2461 = vadd.f32 0.0, %v2460
    %v2462 = vpop.f32.mrb[0].mxu0
    %2463 = vdwg.mxu0
    %v2464 = vmul.f32 %v2461, 0.35355338
    %v2465 = vadd.f32 %v2464, %v283
    %v2466 = vsel %vm204, %v2465, -inf
    %2467 = vmax.xlane.f32.xlu0 %v2466
    %v2468 = vpop.xlane.xlu0 %2467
    %v2469 = vsub.f32 %v2465, %v2468
    %v2470 = vmul.f32 %v2469, 1.442695
    %v2471 = vpow.pop %v2470
    %v2472 = vsel %vm204, %v2471, 0.0
    %2473 = vadd.xlane.f32.xlu0 %v2472
    %v2474 = vpop.xlane.xlu0 %2473
    %v2475 = vrcp.pop %v2474
    %v2476 = vmul.f32 %v2471, %v2475
    %2477 = vrot.lane.b32.xlu0 %v2045, 48
    %v2478 = vpop.permute.xlu0 %2477
    %v2481 = vsel %vm204, %v2476, 0
    %2483 = vmatprep.subr.mxu0 0.0
    %2484 = vmatpush1.msra.mxu0 %v2478
    %2485 = vmatprep.subr.mxu0 0.0
    %2486 = vmatpush1.msra.mxu0 0.0
    %2487 = vmatprep.subr.mxu0 0.0
    %2488 = vmatpush1.msra.mxu0 0.0
    %2489 = vmatprep.subr.mxu0 0.0
    %2490 = vmatpush1.msra.mxu0 0.0
    %2491 = vmatprep.subr.mxu0 0.0
    %2492 = vmatpush1.msra.mxu0 0.0
    %2493 = vmatprep.subr.mxu0 0.0
    %2494 = vmatpush1.msra.mxu0 0.0
    %2495 = vmatprep.subr.mxu0 0.0
    %2496 = vmatpush1.msra.mxu0 0.0
    %2497 = vmatprep.subr.mxu0 0.0
    %2498 = vmatpush1.msra.mxu0 0.0
    %2499 = vmatprep.subr.mxu0 0.0
    %2500 = vmatpush1.msra.mxu0 0.0
    %2501 = vmatprep.subr.mxu0 0.0
    %2502 = vmatpush1.msra.mxu0 0.0
    %2503 = vmatprep.subr.mxu0 0.0
    %2504 = vmatpush1.msra.mxu0 0.0
    %2505 = vmatprep.subr.mxu0 0.0
    %2506 = vmatpush1.msra.mxu0 0.0
    %2507 = vmatprep.subr.mxu0 0.0
    %2508 = vmatpush1.msra.mxu0 0.0
    %2509 = vmatprep.subr.mxu0 0.0
    %2510 = vmatpush1.msra.mxu0 0.0
    %2511 = vmatprep.subr.mxu0 0.0
    %2512 = vmatpush1.msra.mxu0 0.0
    %2513 = vmatprep.subr.mxu0 0.0
    %2514 = vmatpush1.msra.mxu0 0.0
    %2515 = vmatprep.subr.mxu0 0.0
    %2516 = vmatpush1.msra.mxu0 0.0
    %2517 = vmatprep.subr.mxu0 0.0
    %2518 = vmatpush1.msra.mxu0 0.0
    %2519 = vmatprep.subr.mxu0 0.0
    %2520 = vmatpush1.msra.mxu0 0.0
    %2521 = vmatprep.subr.mxu0 0.0
    %2522 = vmatpush1.msra.mxu0 0.0
    %2523 = vmatprep.subr.mxu0 0.0
    %2524 = vmatpush1.msra.mxu0 0.0
    %2525 = vmatprep.subr.mxu0 0.0
    %2526 = vmatpush1.msra.mxu0 0.0
    %2527 = vmatprep.subr.mxu0 0.0
    %2528 = vmatpush1.msra.mxu0 0.0
    %2529 = vmatprep.subr.mxu0 0.0
    %2530 = vmatpush1.msra.mxu0 0.0
    %2531 = vmatprep.subr.mxu0 0.0
    %2532 = vmatpush1.msra.mxu0 0.0
    %2533 = vmatprep.subr.mxu0 0.0
    %2534 = vmatpush1.msra.mxu0 0.0
    %2535 = vmatprep.subr.mxu0 0.0
    %2536 = vmatpush1.msra.mxu0 0.0
    %2537 = vmatprep.subr.mxu0 0.0
    %2538 = vmatpush1.msra.mxu0 0.0
    %2539 = vmatprep.subr.mxu0 0.0
    %2540 = vmatpush1.msra.mxu0 0.0
    %2541 = vmatprep.subr.mxu0 0.0
    %2542 = vmatpush1.msra.mxu0 0.0
    %2543 = vmatprep.subr.mxu0 0.0
    %2544 = vmatpush1.msra.mxu0 0.0
    %2545 = vmatprep.subr.mxu0 0.0
    %2546 = vmatpush1.msra.mxu0 0.0
    %2547 = vmatprep.mubr.f32.mxu0 0.0
    %2548 = vmatmul.mubr.f32.gmra.mrb[0].mxu0 %v2481
    %v2549 = vpop.f32.mrb[0].mxu0
    %v2550 = vadd.f32 0.0, %v2549
    %v2551 = vpop.f32.mrb[0].mxu0
    %2552 = vdwg.mxu0
    %2553 = vrot.lane.b32.xlu0 %v2045, 104
    %v2554 = vpop.permute.xlu0 %2553
    %2555 = vrot.lane.b32.xlu0 %v2045, 72
    %v2556 = vpop.permute.xlu0 %2555
    %v2557 = vsel %vm204, %v2554, 0
    %v2559 = vsel %vm204, %v2556, 0
    %2561 = vmatprep.subr.mxu0 0.0
    %2562 = vmatpush1.xpose.msra.mxu0 %v2559
    %2563 = vmatprep.subr.mxu0 0.0
    %2564 = vmatpush1.xpose.msra.mxu0 0.0
    %2565 = vmatprep.subr.mxu0 0.0
    %2566 = vmatpush1.xpose.msra.mxu0 0.0
    %2567 = vmatprep.subr.mxu0 0.0
    %2568 = vmatpush1.xpose.msra.mxu0 0.0
    %2569 = vmatprep.subr.mxu0 0.0
    %2570 = vmatpush1.xpose.msra.mxu0 0.0
    %2571 = vmatprep.subr.mxu0 0.0
    %2572 = vmatpush1.xpose.msra.mxu0 0.0
    %2573 = vmatprep.subr.mxu0 0.0
    %2574 = vmatpush1.xpose.msra.mxu0 0.0
    %2575 = vmatprep.subr.mxu0 0.0
    %2576 = vmatpush1.xpose.msra.mxu0 0.0
    %2577 = vmatprep.subr.mxu0 0.0
    %2578 = vmatpush1.xpose.msra.mxu0 0.0
    %2579 = vmatprep.subr.mxu0 0.0
    %2580 = vmatpush1.xpose.msra.mxu0 0.0
    %2581 = vmatprep.subr.mxu0 0.0
    %2582 = vmatpush1.xpose.msra.mxu0 0.0
    %2583 = vmatprep.subr.mxu0 0.0
    %2584 = vmatpush1.xpose.msra.mxu0 0.0
    %2585 = vmatprep.subr.mxu0 0.0
    %2586 = vmatpush1.xpose.msra.mxu0 0.0
    %2587 = vmatprep.subr.mxu0 0.0
    %2588 = vmatpush1.xpose.msra.mxu0 0.0
    %2589 = vmatprep.subr.mxu0 0.0
    %2590 = vmatpush1.xpose.msra.mxu0 0.0
    %2591 = vmatprep.subr.mxu0 0.0
    %2592 = vmatpush1.xpose.msra.mxu0 0.0
    %2593 = vmatprep.subr.mxu0 0.0
    %2594 = vmatpush1.xpose.msra.mxu0 0.0
    %2595 = vmatprep.subr.mxu0 0.0
    %2596 = vmatpush1.xpose.msra.mxu0 0.0
    %2597 = vmatprep.subr.mxu0 0.0
    %2598 = vmatpush1.xpose.msra.mxu0 0.0
    %2599 = vmatprep.subr.mxu0 0.0
    %2600 = vmatpush1.xpose.msra.mxu0 0.0
    %2601 = vmatprep.subr.mxu0 0.0
    %2602 = vmatpush1.xpose.msra.mxu0 0.0
    %2603 = vmatprep.subr.mxu0 0.0
    %2604 = vmatpush1.xpose.msra.mxu0 0.0
    %2605 = vmatprep.subr.mxu0 0.0
    %2606 = vmatpush1.xpose.msra.mxu0 0.0
    %2607 = vmatprep.subr.mxu0 0.0
    %2608 = vmatpush1.xpose.msra.mxu0 0.0
    %2609 = vmatprep.subr.mxu0 0.0
    %2610 = vmatpush1.xpose.msra.mxu0 0.0
    %2611 = vmatprep.subr.mxu0 0.0
    %2612 = vmatpush1.xpose.msra.mxu0 0.0
    %2613 = vmatprep.subr.mxu0 0.0
    %2614 = vmatpush1.xpose.msra.mxu0 0.0
    %2615 = vmatprep.subr.mxu0 0.0
    %2616 = vmatpush1.xpose.msra.mxu0 0.0
    %2617 = vmatprep.subr.mxu0 0.0
    %2618 = vmatpush1.xpose.msra.mxu0 0.0
    %2619 = vmatprep.subr.mxu0 0.0
    %2620 = vmatpush1.xpose.msra.mxu0 0.0
    %2621 = vmatprep.subr.mxu0 0.0
    %2622 = vmatpush1.xpose.msra.mxu0 0.0
    %2623 = vmatprep.subr.mxu0 0.0
    %2624 = vmatpush1.xpose.msra.mxu0 0.0
    %2625 = vmatprep.mubr.f32.mxu0 0.0
    %2626 = vmatmul.mubr.f32.gmra.mrb[0].mxu0 %v2557
    %v2627 = vpop.f32.mrb[0].mxu0
    %v2628 = vadd.f32 0.0, %v2627
    %v2629 = vpop.f32.mrb[0].mxu0
    %2630 = vdwg.mxu0
    %v2631 = vmul.f32 %v2628, 0.35355338
    %v2632 = vadd.f32 %v2631, %v283
    %v2633 = vsel %vm204, %v2632, -inf
    %2634 = vmax.xlane.f32.xlu0 %v2633
    %v2635 = vpop.xlane.xlu0 %2634
    %v2636 = vsub.f32 %v2632, %v2635
    %v2637 = vmul.f32 %v2636, 1.442695
    %v2638 = vpow.pop %v2637
    %v2639 = vsel %vm204, %v2638, 0.0
    %2640 = vadd.xlane.f32.xlu0 %v2639
    %v2641 = vpop.xlane.xlu0 %2640
    %v2642 = vrcp.pop %v2641
    %v2643 = vmul.f32 %v2638, %v2642
    %2644 = vrot.lane.b32.xlu0 %v2045, 40
    %v2645 = vpop.permute.xlu0 %2644
    %v2648 = vsel %vm204, %v2643, 0
    %2650 = vmatprep.subr.mxu0 0.0
    %2651 = vmatpush1.msra.mxu0 %v2645
    %2652 = vmatprep.subr.mxu0 0.0
    %2653 = vmatpush1.msra.mxu0 0.0
    %2654 = vmatprep.subr.mxu0 0.0
    %2655 = vmatpush1.msra.mxu0 0.0
    %2656 = vmatprep.subr.mxu0 0.0
    %2657 = vmatpush1.msra.mxu0 0.0
    %2658 = vmatprep.subr.mxu0 0.0
    %2659 = vmatpush1.msra.mxu0 0.0
    %2660 = vmatprep.subr.mxu0 0.0
    %2661 = vmatpush1.msra.mxu0 0.0
    %2662 = vmatprep.subr.mxu0 0.0
    %2663 = vmatpush1.msra.mxu0 0.0
    %2664 = vmatprep.subr.mxu0 0.0
    %2665 = vmatpush1.msra.mxu0 0.0
    %2666 = vmatprep.subr.mxu0 0.0
    %2667 = vmatpush1.msra.mxu0 0.0
    %2668 = vmatprep.subr.mxu0 0.0
    %2669 = vmatpush1.msra.mxu0 0.0
    %2670 = vmatprep.subr.mxu0 0.0
    %2671 = vmatpush1.msra.mxu0 0.0
    %2672 = vmatprep.subr.mxu0 0.0
    %2673 = vmatpush1.msra.mxu0 0.0
    %2674 = vmatprep.subr.mxu0 0.0
    %2675 = vmatpush1.msra.mxu0 0.0
    %2676 = vmatprep.subr.mxu0 0.0
    %2677 = vmatpush1.msra.mxu0 0.0
    %2678 = vmatprep.subr.mxu0 0.0
    %2679 = vmatpush1.msra.mxu0 0.0
    %2680 = vmatprep.subr.mxu0 0.0
    %2681 = vmatpush1.msra.mxu0 0.0
    %2682 = vmatprep.subr.mxu0 0.0
    %2683 = vmatpush1.msra.mxu0 0.0
    %2684 = vmatprep.subr.mxu0 0.0
    %2685 = vmatpush1.msra.mxu0 0.0
    %2686 = vmatprep.subr.mxu0 0.0
    %2687 = vmatpush1.msra.mxu0 0.0
    %2688 = vmatprep.subr.mxu0 0.0
    %2689 = vmatpush1.msra.mxu0 0.0
    %2690 = vmatprep.subr.mxu0 0.0
    %2691 = vmatpush1.msra.mxu0 0.0
    %2692 = vmatprep.subr.mxu0 0.0
    %2693 = vmatpush1.msra.mxu0 0.0
    %2694 = vmatprep.subr.mxu0 0.0
    %2695 = vmatpush1.msra.mxu0 0.0
    %2696 = vmatprep.subr.mxu0 0.0
    %2697 = vmatpush1.msra.mxu0 0.0
    %2698 = vmatprep.subr.mxu0 0.0
    %2699 = vmatpush1.msra.mxu0 0.0
    %2700 = vmatprep.subr.mxu0 0.0
    %2701 = vmatpush1.msra.mxu0 0.0
    %2702 = vmatprep.subr.mxu0 0.0
    %2703 = vmatpush1.msra.mxu0 0.0
    %2704 = vmatprep.subr.mxu0 0.0
    %2705 = vmatpush1.msra.mxu0 0.0
    %2706 = vmatprep.subr.mxu0 0.0
    %2707 = vmatpush1.msra.mxu0 0.0
    %2708 = vmatprep.subr.mxu0 0.0
    %2709 = vmatpush1.msra.mxu0 0.0
    %2710 = vmatprep.subr.mxu0 0.0
    %2711 = vmatpush1.msra.mxu0 0.0
    %2712 = vmatprep.subr.mxu0 0.0
    %2713 = vmatpush1.msra.mxu0 0.0
    %2714 = vmatprep.mubr.f32.mxu0 0.0
    %2715 = vmatmul.mubr.f32.gmra.mrb[0].mxu0 %v2648
    %v2716 = vpop.f32.mrb[0].mxu0
    %v2717 = vadd.f32 0.0, %v2716
    %v2718 = vpop.f32.mrb[0].mxu0
    %2719 = vdwg.mxu0
    %2721 = vrot.lane.b32.xlu0 %v2383, 8
    %v2722 = vpop.permute.xlu0 %2721
    %2725 = vrot.lane.b32.xlu0 %v2550, 16
    %v2726 = vpop.permute.xlu0 %2725
    %2729 = vrot.lane.b32.xlu0 %v2717, 24
    %v2730 = vpop.permute.xlu0 %2729
    %v2732 = vsel %vm204, %v2216, %v2722
    %v2733 = vsel %vm886, %v2732, %v2726
    %v2734 = vsel %vm888, %v2733, %v2730
    %2736 = vrot.lane.b32.xlu0 %v2050, 96
    %v2737 = vpop.permute.xlu0 %2736
    %v2738 = vsel %vm204, %v2050, 0
    %v2740 = vsel %vm204, %v2737, 0
    %2742 = vmatprep.subr.mxu0 0.0
    %2743 = vmatpush1.xpose.msra.mxu0 %v2740
    %2744 = vmatprep.subr.mxu0 0.0
    %2745 = vmatpush1.xpose.msra.mxu0 0.0
    %2746 = vmatprep.subr.mxu0 0.0
    %2747 = vmatpush1.xpose.msra.mxu0 0.0
    %2748 = vmatprep.subr.mxu0 0.0
    %2749 = vmatpush1.xpose.msra.mxu0 0.0
    %2750 = vmatprep.subr.mxu0 0.0
    %2751 = vmatpush1.xpose.msra.mxu0 0.0
    %2752 = vmatprep.subr.mxu0 0.0
    %2753 = vmatpush1.xpose.msra.mxu0 0.0
    %2754 = vmatprep.subr.mxu0 0.0
    %2755 = vmatpush1.xpose.msra.mxu0 0.0
    %2756 = vmatprep.subr.mxu0 0.0
    %2757 = vmatpush1.xpose.msra.mxu0 0.0
    %2758 = vmatprep.subr.mxu0 0.0
    %2759 = vmatpush1.xpose.msra.mxu0 0.0
    %2760 = vmatprep.subr.mxu0 0.0
    %2761 = vmatpush1.xpose.msra.mxu0 0.0
    %2762 = vmatprep.subr.mxu0 0.0
    %2763 = vmatpush1.xpose.msra.mxu0 0.0
    %2764 = vmatprep.subr.mxu0 0.0
    %2765 = vmatpush1.xpose.msra.mxu0 0.0
    %2766 = vmatprep.subr.mxu0 0.0
    %2767 = vmatpush1.xpose.msra.mxu0 0.0
    %2768 = vmatprep.subr.mxu0 0.0
    %2769 = vmatpush1.xpose.msra.mxu0 0.0
    %2770 = vmatprep.subr.mxu0 0.0
    %2771 = vmatpush1.xpose.msra.mxu0 0.0
    %2772 = vmatprep.subr.mxu0 0.0
    %2773 = vmatpush1.xpose.msra.mxu0 0.0
    %2774 = vmatprep.subr.mxu0 0.0
    %2775 = vmatpush1.xpose.msra.mxu0 0.0
    %2776 = vmatprep.subr.mxu0 0.0
    %2777 = vmatpush1.xpose.msra.mxu0 0.0
    %2778 = vmatprep.subr.mxu0 0.0
    %2779 = vmatpush1.xpose.msra.mxu0 0.0
    %2780 = vmatprep.subr.mxu0 0.0
    %2781 = vmatpush1.xpose.msra.mxu0 0.0
    %2782 = vmatprep.subr.mxu0 0.0
    %2783 = vmatpush1.xpose.msra.mxu0 0.0
    %2784 = vmatprep.subr.mxu0 0.0
    %2785 = vmatpush1.xpose.msra.mxu0 0.0
    %2786 = vmatprep.subr.mxu0 0.0
    %2787 = vmatpush1.xpose.msra.mxu0 0.0
    %2788 = vmatprep.subr.mxu0 0.0
    %2789 = vmatpush1.xpose.msra.mxu0 0.0
    %2790 = vmatprep.subr.mxu0 0.0
    %2791 = vmatpush1.xpose.msra.mxu0 0.0
    %2792 = vmatprep.subr.mxu0 0.0
    %2793 = vmatpush1.xpose.msra.mxu0 0.0
    %2794 = vmatprep.subr.mxu0 0.0
    %2795 = vmatpush1.xpose.msra.mxu0 0.0
    %2796 = vmatprep.subr.mxu0 0.0
    %2797 = vmatpush1.xpose.msra.mxu0 0.0
    %2798 = vmatprep.subr.mxu0 0.0
    %2799 = vmatpush1.xpose.msra.mxu0 0.0
    %2800 = vmatprep.subr.mxu0 0.0
    %2801 = vmatpush1.xpose.msra.mxu0 0.0
    %2802 = vmatprep.subr.mxu0 0.0
    %2803 = vmatpush1.xpose.msra.mxu0 0.0
    %2804 = vmatprep.subr.mxu0 0.0
    %2805 = vmatpush1.xpose.msra.mxu0 0.0
    %2806 = vmatprep.mubr.f32.mxu0 0.0
    %2807 = vmatmul.mubr.f32.gmra.mrb[0].mxu0 %v2738
    %v2808 = vpop.f32.mrb[0].mxu0
    %v2809 = vadd.f32 0.0, %v2808
    %v2810 = vpop.f32.mrb[0].mxu0
    %2811 = vdwg.mxu0
    %v2812 = vmul.f32 %v2809, 0.35355338
    %v2813 = vadd.f32 %v2812, %v971
    %v2814 = vsel %vm204, %v2813, -inf
    %2815 = vmax.xlane.f32.xlu0 %v2814
    %v2816 = vpop.xlane.xlu0 %2815
    %v2817 = vsub.f32 %v2813, %v2816
    %v2818 = vmul.f32 %v2817, 1.442695
    %v2819 = vpow.pop %v2818
    %v2820 = vsel %vm204, %v2819, 0.0
    %2821 = vadd.xlane.f32.xlu0 %v2820
    %v2822 = vpop.xlane.xlu0 %2821
    %v2823 = vrcp.pop %v2822
    %v2824 = vmul.f32 %v2819, %v2823
    %2825 = vrot.lane.b32.xlu0 %v2050, 64
    %v2826 = vpop.permute.xlu0 %2825
    %v2829 = vsel %vm204, %v2824, 0
    %2831 = vmatprep.subr.mxu0 0.0
    %2832 = vmatpush1.msra.mxu0 %v2826
    %2833 = vmatprep.subr.mxu0 0.0
    %2834 = vmatpush1.msra.mxu0 0.0
    %2835 = vmatprep.subr.mxu0 0.0
    %2836 = vmatpush1.msra.mxu0 0.0
    %2837 = vmatprep.subr.mxu0 0.0
    %2838 = vmatpush1.msra.mxu0 0.0
    %2839 = vmatprep.subr.mxu0 0.0
    %2840 = vmatpush1.msra.mxu0 0.0
    %2841 = vmatprep.subr.mxu0 0.0
    %2842 = vmatpush1.msra.mxu0 0.0
    %2843 = vmatprep.subr.mxu0 0.0
    %2844 = vmatpush1.msra.mxu0 0.0
    %2845 = vmatprep.subr.mxu0 0.0
    %2846 = vmatpush1.msra.mxu0 0.0
    %2847 = vmatprep.subr.mxu0 0.0
    %2848 = vmatpush1.msra.mxu0 0.0
    %2849 = vmatprep.subr.mxu0 0.0
    %2850 = vmatpush1.msra.mxu0 0.0
    %2851 = vmatprep.subr.mxu0 0.0
    %2852 = vmatpush1.msra.mxu0 0.0
    %2853 = vmatprep.subr.mxu0 0.0
    %2854 = vmatpush1.msra.mxu0 0.0
    %2855 = vmatprep.subr.mxu0 0.0
    %2856 = vmatpush1.msra.mxu0 0.0
    %2857 = vmatprep.subr.mxu0 0.0
    %2858 = vmatpush1.msra.mxu0 0.0
    %2859 = vmatprep.subr.mxu0 0.0
    %2860 = vmatpush1.msra.mxu0 0.0
    %2861 = vmatprep.subr.mxu0 0.0
    %2862 = vmatpush1.msra.mxu0 0.0
    %2863 = vmatprep.subr.mxu0 0.0
    %2864 = vmatpush1.msra.mxu0 0.0
    %2865 = vmatprep.subr.mxu0 0.0
    %2866 = vmatpush1.msra.mxu0 0.0
    %2867 = vmatprep.subr.mxu0 0.0
    %2868 = vmatpush1.msra.mxu0 0.0
    %2869 = vmatprep.subr.mxu0 0.0
    %2870 = vmatpush1.msra.mxu0 0.0
    %2871 = vmatprep.subr.mxu0 0.0
    %2872 = vmatpush1.msra.mxu0 0.0
    %2873 = vmatprep.subr.mxu0 0.0
    %2874 = vmatpush1.msra.mxu0 0.0
    %2875 = vmatprep.subr.mxu0 0.0
    %2876 = vmatpush1.msra.mxu0 0.0
    %2877 = vmatprep.subr.mxu0 0.0
    %2878 = vmatpush1.msra.mxu0 0.0
    %2879 = vmatprep.subr.mxu0 0.0
    %2880 = vmatpush1.msra.mxu0 0.0
    %2881 = vmatprep.subr.mxu0 0.0
    %2882 = vmatpush1.msra.mxu0 0.0
    %2883 = vmatprep.subr.mxu0 0.0
    %2884 = vmatpush1.msra.mxu0 0.0
    %2885 = vmatprep.subr.mxu0 0.0
    %2886 = vmatpush1.msra.mxu0 0.0
    %2887 = vmatprep.subr.mxu0 0.0
    %2888 = vmatpush1.msra.mxu0 0.0
    %2889 = vmatprep.subr.mxu0 0.0
    %2890 = vmatpush1.msra.mxu0 0.0
    %2891 = vmatprep.subr.mxu0 0.0
    %2892 = vmatpush1.msra.mxu0 0.0
    %2893 = vmatprep.subr.mxu0 0.0
    %2894 = vmatpush1.msra.mxu0 0.0
    %2895 = vmatprep.mubr.f32.mxu0 0.0
    %2896 = vmatmul.mubr.f32.gmra.mrb[0].mxu0 %v2829
    %v2897 = vpop.f32.mrb[0].mxu0
    %v2898 = vadd.f32 0.0, %v2897
    %v2899 = vpop.f32.mrb[0].mxu0
    %2900 = vdwg.mxu0
    %2901 = vrot.lane.b32.xlu0 %v2050, 120
    %v2902 = vpop.permute.xlu0 %2901
    %2903 = vrot.lane.b32.xlu0 %v2050, 88
    %v2904 = vpop.permute.xlu0 %2903
    %v2905 = vsel %vm204, %v2902, 0
    %v2907 = vsel %vm204, %v2904, 0
    %2909 = vmatprep.subr.mxu0 0.0
    %2910 = vmatpush1.xpose.msra.mxu0 %v2907
    %2911 = vmatprep.subr.mxu0 0.0
    %2912 = vmatpush1.xpose.msra.mxu0 0.0
    %2913 = vmatprep.subr.mxu0 0.0
    %2914 = vmatpush1.xpose.msra.mxu0 0.0
    %2915 = vmatprep.subr.mxu0 0.0
    %2916 = vmatpush1.xpose.msra.mxu0 0.0
    %2917 = vmatprep.subr.mxu0 0.0
    %2918 = vmatpush1.xpose.msra.mxu0 0.0
    %2919 = vmatprep.subr.mxu0 0.0
    %2920 = vmatpush1.xpose.msra.mxu0 0.0
    %2921 = vmatprep.subr.mxu0 0.0
    %2922 = vmatpush1.xpose.msra.mxu0 0.0
    %2923 = vmatprep.subr.mxu0 0.0
    %2924 = vmatpush1.xpose.msra.mxu0 0.0
    %2925 = vmatprep.subr.mxu0 0.0
    %2926 = vmatpush1.xpose.msra.mxu0 0.0
    %2927 = vmatprep.subr.mxu0 0.0
    %2928 = vmatpush1.xpose.msra.mxu0 0.0
    %2929 = vmatprep.subr.mxu0 0.0
    %2930 = vmatpush1.xpose.msra.mxu0 0.0
    %2931 = vmatprep.subr.mxu0 0.0
    %2932 = vmatpush1.xpose.msra.mxu0 0.0
    %2933 = vmatprep.subr.mxu0 0.0
    %2934 = vmatpush1.xpose.msra.mxu0 0.0
    %2935 = vmatprep.subr.mxu0 0.0
    %2936 = vmatpush1.xpose.msra.mxu0 0.0
    %2937 = vmatprep.subr.mxu0 0.0
    %2938 = vmatpush1.xpose.msra.mxu0 0.0
    %2939 = vmatprep.subr.mxu0 0.0
    %2940 = vmatpush1.xpose.msra.mxu0 0.0
    %2941 = vmatprep.subr.mxu0 0.0
    %2942 = vmatpush1.xpose.msra.mxu0 0.0
    %2943 = vmatprep.subr.mxu0 0.0
    %2944 = vmatpush1.xpose.msra.mxu0 0.0
    %2945 = vmatprep.subr.mxu0 0.0
    %2946 = vmatpush1.xpose.msra.mxu0 0.0
    %2947 = vmatprep.subr.mxu0 0.0
    %2948 = vmatpush1.xpose.msra.mxu0 0.0
    %2949 = vmatprep.subr.mxu0 0.0
    %2950 = vmatpush1.xpose.msra.mxu0 0.0
    %2951 = vmatprep.subr.mxu0 0.0
    %2952 = vmatpush1.xpose.msra.mxu0 0.0
    %2953 = vmatprep.subr.mxu0 0.0
    %2954 = vmatpush1.xpose.msra.mxu0 0.0
    %2955 = vmatprep.subr.mxu0 0.0
    %2956 = vmatpush1.xpose.msra.mxu0 0.0
    %2957 = vmatprep.subr.mxu0 0.0
    %2958 = vmatpush1.xpose.msra.mxu0 0.0
    %2959 = vmatprep.subr.mxu0 0.0
    %2960 = vmatpush1.xpose.msra.mxu0 0.0
    %2961 = vmatprep.subr.mxu0 0.0
    %2962 = vmatpush1.xpose.msra.mxu0 0.0
    %2963 = vmatprep.subr.mxu0 0.0
    %2964 = vmatpush1.xpose.msra.mxu0 0.0
    %2965 = vmatprep.subr.mxu0 0.0
    %2966 = vmatpush1.xpose.msra.mxu0 0.0
    %2967 = vmatprep.subr.mxu0 0.0
    %2968 = vmatpush1.xpose.msra.mxu0 0.0
    %2969 = vmatprep.subr.mxu0 0.0
    %2970 = vmatpush1.xpose.msra.mxu0 0.0
    %2971 = vmatprep.subr.mxu0 0.0
    %2972 = vmatpush1.xpose.msra.mxu0 0.0
    %2973 = vmatprep.mubr.f32.mxu0 0.0
    %2974 = vmatmul.mubr.f32.gmra.mrb[0].mxu0 %v2905
    %v2975 = vpop.f32.mrb[0].mxu0
    %v2976 = vadd.f32 0.0, %v2975
    %v2977 = vpop.f32.mrb[0].mxu0
    %2978 = vdwg.mxu0
    %v2979 = vmul.f32 %v2976, 0.35355338
    %v2980 = vadd.f32 %v2979, %v971
    %v2981 = vsel %vm204, %v2980, -inf
    %2982 = vmax.xlane.f32.xlu0 %v2981
    %v2983 = vpop.xlane.xlu0 %2982
    %v2984 = vsub.f32 %v2980, %v2983
    %v2985 = vmul.f32 %v2984, 1.442695
    %v2986 = vpow.pop %v2985
    %v2987 = vsel %vm204, %v2986, 0.0
    %2988 = vadd.xlane.f32.xlu0 %v2987
    %v2989 = vpop.xlane.xlu0 %2988
    %v2990 = vrcp.pop %v2989
    %v2991 = vmul.f32 %v2986, %v2990
    %2992 = vrot.lane.b32.xlu0 %v2050, 56
    %v2993 = vpop.permute.xlu0 %2992
    %v2996 = vsel %vm204, %v2991, 0
    %2998 = vmatprep.subr.mxu0 0.0
    %2999 = vmatpush1.msra.mxu0 %v2993
    %3000 = vmatprep.subr.mxu0 0.0
    %3001 = vmatpush1.msra.mxu0 0.0
    %3002 = vmatprep.subr.mxu0 0.0
    %3003 = vmatpush1.msra.mxu0 0.0
    %3004 = vmatprep.subr.mxu0 0.0
    %3005 = vmatpush1.msra.mxu0 0.0
    %3006 = vmatprep.subr.mxu0 0.0
    %3007 = vmatpush1.msra.mxu0 0.0
    %3008 = vmatprep.subr.mxu0 0.0
    %3009 = vmatpush1.msra.mxu0 0.0
    %3010 = vmatprep.subr.mxu0 0.0
    %3011 = vmatpush1.msra.mxu0 0.0
    %3012 = vmatprep.subr.mxu0 0.0
    %3013 = vmatpush1.msra.mxu0 0.0
    %3014 = vmatprep.subr.mxu0 0.0
    %3015 = vmatpush1.msra.mxu0 0.0
    %3016 = vmatprep.subr.mxu0 0.0
    %3017 = vmatpush1.msra.mxu0 0.0
    %3018 = vmatprep.subr.mxu0 0.0
    %3019 = vmatpush1.msra.mxu0 0.0
    %3020 = vmatprep.subr.mxu0 0.0
    %3021 = vmatpush1.msra.mxu0 0.0
    %3022 = vmatprep.subr.mxu0 0.0
    %3023 = vmatpush1.msra.mxu0 0.0
    %3024 = vmatprep.subr.mxu0 0.0
    %3025 = vmatpush1.msra.mxu0 0.0
    %3026 = vmatprep.subr.mxu0 0.0
    %3027 = vmatpush1.msra.mxu0 0.0
    %3028 = vmatprep.subr.mxu0 0.0
    %3029 = vmatpush1.msra.mxu0 0.0
    %3030 = vmatprep.subr.mxu0 0.0
    %3031 = vmatpush1.msra.mxu0 0.0
    %3032 = vmatprep.subr.mxu0 0.0
    %3033 = vmatpush1.msra.mxu0 0.0
    %3034 = vmatprep.subr.mxu0 0.0
    %3035 = vmatpush1.msra.mxu0 0.0
    %3036 = vmatprep.subr.mxu0 0.0
    %3037 = vmatpush1.msra.mxu0 0.0
    %3038 = vmatprep.subr.mxu0 0.0
    %3039 = vmatpush1.msra.mxu0 0.0
    %3040 = vmatprep.subr.mxu0 0.0
    %3041 = vmatpush1.msra.mxu0 0.0
    %3042 = vmatprep.subr.mxu0 0.0
    %3043 = vmatpush1.msra.mxu0 0.0
    %3044 = vmatprep.subr.mxu0 0.0
    %3045 = vmatpush1.msra.mxu0 0.0
    %3046 = vmatprep.subr.mxu0 0.0
    %3047 = vmatpush1.msra.mxu0 0.0
    %3048 = vmatprep.subr.mxu0 0.0
    %3049 = vmatpush1.msra.mxu0 0.0
    %3050 = vmatprep.subr.mxu0 0.0
    %3051 = vmatpush1.msra.mxu0 0.0
    %3052 = vmatprep.subr.mxu0 0.0
    %3053 = vmatpush1.msra.mxu0 0.0
    %3054 = vmatprep.subr.mxu0 0.0
    %3055 = vmatpush1.msra.mxu0 0.0
    %3056 = vmatprep.subr.mxu0 0.0
    %3057 = vmatpush1.msra.mxu0 0.0
    %3058 = vmatprep.subr.mxu0 0.0
    %3059 = vmatpush1.msra.mxu0 0.0
    %3060 = vmatprep.subr.mxu0 0.0
    %3061 = vmatpush1.msra.mxu0 0.0
    %3062 = vmatprep.mubr.f32.mxu0 0.0
    %3063 = vmatmul.mubr.f32.gmra.mrb[0].mxu0 %v2996
    %v3064 = vpop.f32.mrb[0].mxu0
    %v3065 = vadd.f32 0.0, %v3064
    %v3066 = vpop.f32.mrb[0].mxu0
    %3067 = vdwg.mxu0
    %3068 = vrot.lane.b32.xlu0 %v2050, 112
    %v3069 = vpop.permute.xlu0 %3068
    %3070 = vrot.lane.b32.xlu0 %v2050, 80
    %v3071 = vpop.permute.xlu0 %3070
    %v3072 = vsel %vm204, %v3069, 0
    %v3074 = vsel %vm204, %v3071, 0
    %3076 = vmatprep.subr.mxu0 0.0
    %3077 = vmatpush1.xpose.msra.mxu0 %v3074
    %3078 = vmatprep.subr.mxu0 0.0
    %3079 = vmatpush1.xpose.msra.mxu0 0.0
    %3080 = vmatprep.subr.mxu0 0.0
    %3081 = vmatpush1.xpose.msra.mxu0 0.0
    %3082 = vmatprep.subr.mxu0 0.0
    %3083 = vmatpush1.xpose.msra.mxu0 0.0
    %3084 = vmatprep.subr.mxu0 0.0
    %3085 = vmatpush1.xpose.msra.mxu0 0.0
    %3086 = vmatprep.subr.mxu0 0.0
    %3087 = vmatpush1.xpose.msra.mxu0 0.0
    %3088 = vmatprep.subr.mxu0 0.0
    %3089 = vmatpush1.xpose.msra.mxu0 0.0
    %3090 = vmatprep.subr.mxu0 0.0
    %3091 = vmatpush1.xpose.msra.mxu0 0.0
    %3092 = vmatprep.subr.mxu0 0.0
    %3093 = vmatpush1.xpose.msra.mxu0 0.0
    %3094 = vmatprep.subr.mxu0 0.0
    %3095 = vmatpush1.xpose.msra.mxu0 0.0
    %3096 = vmatprep.subr.mxu0 0.0
    %3097 = vmatpush1.xpose.msra.mxu0 0.0
    %3098 = vmatprep.subr.mxu0 0.0
    %3099 = vmatpush1.xpose.msra.mxu0 0.0
    %3100 = vmatprep.subr.mxu0 0.0
    %3101 = vmatpush1.xpose.msra.mxu0 0.0
    %3102 = vmatprep.subr.mxu0 0.0
    %3103 = vmatpush1.xpose.msra.mxu0 0.0
    %3104 = vmatprep.subr.mxu0 0.0
    %3105 = vmatpush1.xpose.msra.mxu0 0.0
    %3106 = vmatprep.subr.mxu0 0.0
    %3107 = vmatpush1.xpose.msra.mxu0 0.0
    %3108 = vmatprep.subr.mxu0 0.0
    %3109 = vmatpush1.xpose.msra.mxu0 0.0
    %3110 = vmatprep.subr.mxu0 0.0
    %3111 = vmatpush1.xpose.msra.mxu0 0.0
    %3112 = vmatprep.subr.mxu0 0.0
    %3113 = vmatpush1.xpose.msra.mxu0 0.0
    %3114 = vmatprep.subr.mxu0 0.0
    %3115 = vmatpush1.xpose.msra.mxu0 0.0
    %3116 = vmatprep.subr.mxu0 0.0
    %3117 = vmatpush1.xpose.msra.mxu0 0.0
    %3118 = vmatprep.subr.mxu0 0.0
    %3119 = vmatpush1.xpose.msra.mxu0 0.0
    %3120 = vmatprep.subr.mxu0 0.0
    %3121 = vmatpush1.xpose.msra.mxu0 0.0
    %3122 = vmatprep.subr.mxu0 0.0
    %3123 = vmatpush1.xpose.msra.mxu0 0.0
    %3124 = vmatprep.subr.mxu0 0.0
    %3125 = vmatpush1.xpose.msra.mxu0 0.0
    %3126 = vmatprep.subr.mxu0 0.0
    %3127 = vmatpush1.xpose.msra.mxu0 0.0
    %3128 = vmatprep.subr.mxu0 0.0
    %3129 = vmatpush1.xpose.msra.mxu0 0.0
    %3130 = vmatprep.subr.mxu0 0.0
    %3131 = vmatpush1.xpose.msra.mxu0 0.0
    %3132 = vmatprep.subr.mxu0 0.0
    %3133 = vmatpush1.xpose.msra.mxu0 0.0
    %3134 = vmatprep.subr.mxu0 0.0
    %3135 = vmatpush1.xpose.msra.mxu0 0.0
    %3136 = vmatprep.subr.mxu0 0.0
    %3137 = vmatpush1.xpose.msra.mxu0 0.0
    %3138 = vmatprep.subr.mxu0 0.0
    %3139 = vmatpush1.xpose.msra.mxu0 0.0
    %3140 = vmatprep.mubr.f32.mxu0 0.0
    %3141 = vmatmul.mubr.f32.gmra.mrb[0].mxu0 %v3072
    %v3142 = vpop.f32.mrb[0].mxu0
    %v3143 = vadd.f32 0.0, %v3142
    %v3144 = vpop.f32.mrb[0].mxu0
    %3145 = vdwg.mxu0
    %v3146 = vmul.f32 %v3143, 0.35355338
    %v3147 = vadd.f32 %v3146, %v971
    %v3148 = vsel %vm204, %v3147, -inf
    %3149 = vmax.xlane.f32.xlu0 %v3148
    %v3150 = vpop.xlane.xlu0 %3149
    %v3151 = vsub.f32 %v3147, %v3150
    %v3152 = vmul.f32 %v3151, 1.442695
    %v3153 = vpow.pop %v3152
    %v3154 = vsel %vm204, %v3153, 0.0
    %3155 = vadd.xlane.f32.xlu0 %v3154
    %v3156 = vpop.xlane.xlu0 %3155
    %v3157 = vrcp.pop %v3156
    %v3158 = vmul.f32 %v3153, %v3157
    %3159 = vrot.lane.b32.xlu0 %v2050, 48
    %v3160 = vpop.permute.xlu0 %3159
    %v3163 = vsel %vm204, %v3158, 0
    %3165 = vmatprep.subr.mxu0 0.0
    %3166 = vmatpush1.msra.mxu0 %v3160
    %3167 = vmatprep.subr.mxu0 0.0
    %3168 = vmatpush1.msra.mxu0 0.0
    %3169 = vmatprep.subr.mxu0 0.0
    %3170 = vmatpush1.msra.mxu0 0.0
    %3171 = vmatprep.subr.mxu0 0.0
    %3172 = vmatpush1.msra.mxu0 0.0
    %3173 = vmatprep.subr.mxu0 0.0
    %3174 = vmatpush1.msra.mxu0 0.0
    %3175 = vmatprep.subr.mxu0 0.0
    %3176 = vmatpush1.msra.mxu0 0.0
    %3177 = vmatprep.subr.mxu0 0.0
    %3178 = vmatpush1.msra.mxu0 0.0
    %3179 = vmatprep.subr.mxu0 0.0
    %3180 = vmatpush1.msra.mxu0 0.0
    %3181 = vmatprep.subr.mxu0 0.0
    %3182 = vmatpush1.msra.mxu0 0.0
    %3183 = vmatprep.subr.mxu0 0.0
    %3184 = vmatpush1.msra.mxu0 0.0
    %3185 = vmatprep.subr.mxu0 0.0
    %3186 = vmatpush1.msra.mxu0 0.0
    %3187 = vmatprep.subr.mxu0 0.0
    %3188 = vmatpush1.msra.mxu0 0.0
    %3189 = vmatprep.subr.mxu0 0.0
    %3190 = vmatpush1.msra.mxu0 0.0
    %3191 = vmatprep.subr.mxu0 0.0
    %3192 = vmatpush1.msra.mxu0 0.0
    %3193 = vmatprep.subr.mxu0 0.0
    %3194 = vmatpush1.msra.mxu0 0.0
    %3195 = vmatprep.subr.mxu0 0.0
    %3196 = vmatpush1.msra.mxu0 0.0
    %3197 = vmatprep.subr.mxu0 0.0
    %3198 = vmatpush1.msra.mxu0 0.0
    %3199 = vmatprep.subr.mxu0 0.0
    %3200 = vmatpush1.msra.mxu0 0.0
    %3201 = vmatprep.subr.mxu0 0.0
    %3202 = vmatpush1.msra.mxu0 0.0
    %3203 = vmatprep.subr.mxu0 0.0
    %3204 = vmatpush1.msra.mxu0 0.0
    %3205 = vmatprep.subr.mxu0 0.0
    %3206 = vmatpush1.msra.mxu0 0.0
    %3207 = vmatprep.subr.mxu0 0.0
    %3208 = vmatpush1.msra.mxu0 0.0
    %3209 = vmatprep.subr.mxu0 0.0
    %3210 = vmatpush1.msra.mxu0 0.0
    %3211 = vmatprep.subr.mxu0 0.0
    %3212 = vmatpush1.msra.mxu0 0.0
    %3213 = vmatprep.subr.mxu0 0.0
    %3214 = vmatpush1.msra.mxu0 0.0
    %3215 = vmatprep.subr.mxu0 0.0
    %3216 = vmatpush1.msra.mxu0 0.0
    %3217 = vmatprep.subr.mxu0 0.0
    %3218 = vmatpush1.msra.mxu0 0.0
    %3219 = vmatprep.subr.mxu0 0.0
    %3220 = vmatpush1.msra.mxu0 0.0
    %3221 = vmatprep.subr.mxu0 0.0
    %3222 = vmatpush1.msra.mxu0 0.0
    %3223 = vmatprep.subr.mxu0 0.0
    %3224 = vmatpush1.msra.mxu0 0.0
    %3225 = vmatprep.subr.mxu0 0.0
    %3226 = vmatpush1.msra.mxu0 0.0
    %3227 = vmatprep.subr.mxu0 0.0
    %3228 = vmatpush1.msra.mxu0 0.0
    %3229 = vmatprep.mubr.f32.mxu0 0.0
    %3230 = vmatmul.mubr.f32.gmra.mrb[0].mxu0 %v3163
    %v3231 = vpop.f32.mrb[0].mxu0
    %v3232 = vadd.f32 0.0, %v3231
    %v3233 = vpop.f32.mrb[0].mxu0
    %3234 = vdwg.mxu0
    %3235 = vrot.lane.b32.xlu0 %v2050, 104
    %v3236 = vpop.permute.xlu0 %3235
    %3237 = vrot.lane.b32.xlu0 %v2050, 72
    %v3238 = vpop.permute.xlu0 %3237
    %v3239 = vsel %vm204, %v3236, 0
    %v3241 = vsel %vm204, %v3238, 0
    %3243 = vmatprep.subr.mxu0 0.0
    %3244 = vmatpush1.xpose.msra.mxu0 %v3241
    %3245 = vmatprep.subr.mxu0 0.0
    %3246 = vmatpush1.xpose.msra.mxu0 0.0
    %3247 = vmatprep.subr.mxu0 0.0
    %3248 = vmatpush1.xpose.msra.mxu0 0.0
    %3249 = vmatprep.subr.mxu0 0.0
    %3250 = vmatpush1.xpose.msra.mxu0 0.0
    %3251 = vmatprep.subr.mxu0 0.0
    %3252 = vmatpush1.xpose.msra.mxu0 0.0
    %3253 = vmatprep.subr.mxu0 0.0
    %3254 = vmatpush1.xpose.msra.mxu0 0.0
    %3255 = vmatprep.subr.mxu0 0.0
    %3256 = vmatpush1.xpose.msra.mxu0 0.0
    %3257 = vmatprep.subr.mxu0 0.0
    %3258 = vmatpush1.xpose.msra.mxu0 0.0
    %3259 = vmatprep.subr.mxu0 0.0
    %3260 = vmatpush1.xpose.msra.mxu0 0.0
    %3261 = vmatprep.subr.mxu0 0.0
    %3262 = vmatpush1.xpose.msra.mxu0 0.0
    %3263 = vmatprep.subr.mxu0 0.0
    %3264 = vmatpush1.xpose.msra.mxu0 0.0
    %3265 = vmatprep.subr.mxu0 0.0
    %3266 = vmatpush1.xpose.msra.mxu0 0.0
    %3267 = vmatprep.subr.mxu0 0.0
    %3268 = vmatpush1.xpose.msra.mxu0 0.0
    %3269 = vmatprep.subr.mxu0 0.0
    %3270 = vmatpush1.xpose.msra.mxu0 0.0
    %3271 = vmatprep.subr.mxu0 0.0
    %3272 = vmatpush1.xpose.msra.mxu0 0.0
    %3273 = vmatprep.subr.mxu0 0.0
    %3274 = vmatpush1.xpose.msra.mxu0 0.0
    %3275 = vmatprep.subr.mxu0 0.0
    %3276 = vmatpush1.xpose.msra.mxu0 0.0
    %3277 = vmatprep.subr.mxu0 0.0
    %3278 = vmatpush1.xpose.msra.mxu0 0.0
    %3279 = vmatprep.subr.mxu0 0.0
    %3280 = vmatpush1.xpose.msra.mxu0 0.0
    %3281 = vmatprep.subr.mxu0 0.0
    %3282 = vmatpush1.xpose.msra.mxu0 0.0
    %3283 = vmatprep.subr.mxu0 0.0
    %3284 = vmatpush1.xpose.msra.mxu0 0.0
    %3285 = vmatprep.subr.mxu0 0.0
    %3286 = vmatpush1.xpose.msra.mxu0 0.0
    %3287 = vmatprep.subr.mxu0 0.0
    %3288 = vmatpush1.xpose.msra.mxu0 0.0
    %3289 = vmatprep.subr.mxu0 0.0
    %3290 = vmatpush1.xpose.msra.mxu0 0.0
    %3291 = vmatprep.subr.mxu0 0.0
    %3292 = vmatpush1.xpose.msra.mxu0 0.0
    %3293 = vmatprep.subr.mxu0 0.0
    %3294 = vmatpush1.xpose.msra.mxu0 0.0
    %3295 = vmatprep.subr.mxu0 0.0
    %3296 = vmatpush1.xpose.msra.mxu0 0.0
    %3297 = vmatprep.subr.mxu0 0.0
    %3298 = vmatpush1.xpose.msra.mxu0 0.0
    %3299 = vmatprep.subr.mxu0 0.0
    %3300 = vmatpush1.xpose.msra.mxu0 0.0
    %3301 = vmatprep.subr.mxu0 0.0
    %3302 = vmatpush1.xpose.msra.mxu0 0.0
    %3303 = vmatprep.subr.mxu0 0.0
    %3304 = vmatpush1.xpose.msra.mxu0 0.0
    %3305 = vmatprep.subr.mxu0 0.0
    %3306 = vmatpush1.xpose.msra.mxu0 0.0
    %3307 = vmatprep.mubr.f32.mxu0 0.0
    %3308 = vmatmul.mubr.f32.gmra.mrb[0].mxu0 %v3239
    %v3309 = vpop.f32.mrb[0].mxu0
    %v3310 = vadd.f32 0.0, %v3309
    %v3311 = vpop.f32.mrb[0].mxu0
    %3312 = vdwg.mxu0
    %v3313 = vmul.f32 %v3310, 0.35355338
    %v3314 = vadd.f32 %v3313, %v971
    %v3315 = vsel %vm204, %v3314, -inf
    %3316 = vmax.xlane.f32.xlu0 %v3315
    %v3317 = vpop.xlane.xlu0 %3316
    %v3318 = vsub.f32 %v3314, %v3317
    %v3319 = vmul.f32 %v3318, 1.442695
    %v3320 = vpow.pop %v3319
    %v3321 = vsel %vm204, %v3320, 0.0
    %3322 = vadd.xlane.f32.xlu0 %v3321
    %v3323 = vpop.xlane.xlu0 %3322
    %v3324 = vrcp.pop %v3323
    %v3325 = vmul.f32 %v3320, %v3324
    %3326 = vrot.lane.b32.xlu0 %v2050, 40
    %v3327 = vpop.permute.xlu0 %3326
    %v3330 = vsel %vm204, %v3325, 0
    %3332 = vmatprep.subr.mxu0 0.0
    %3333 = vmatpush1.msra.mxu0 %v3327
    %3334 = vmatprep.subr.mxu0 0.0
    %3335 = vmatpush1.msra.mxu0 0.0
    %3336 = vmatprep.subr.mxu0 0.0
    %3337 = vmatpush1.msra.mxu0 0.0
    %3338 = vmatprep.subr.mxu0 0.0
    %3339 = vmatpush1.msra.mxu0 0.0
    %3340 = vmatprep.subr.mxu0 0.0
    %3341 = vmatpush1.msra.mxu0 0.0
    %3342 = vmatprep.subr.mxu0 0.0
    %3343 = vmatpush1.msra.mxu0 0.0
    %3344 = vmatprep.subr.mxu0 0.0
    %3345 = vmatpush1.msra.mxu0 0.0
    %3346 = vmatprep.subr.mxu0 0.0
    %3347 = vmatpush1.msra.mxu0 0.0
    %3348 = vmatprep.subr.mxu0 0.0
    %3349 = vmatpush1.msra.mxu0 0.0
    %3350 = vmatprep.subr.mxu0 0.0
    %3351 = vmatpush1.msra.mxu0 0.0
    %3352 = vmatprep.subr.mxu0 0.0
    %3353 = vmatpush1.msra.mxu0 0.0
    %3354 = vmatprep.subr.mxu0 0.0
    %3355 = vmatpush1.msra.mxu0 0.0
    %3356 = vmatprep.subr.mxu0 0.0
    %3357 = vmatpush1.msra.mxu0 0.0
    %3358 = vmatprep.subr.mxu0 0.0
    %3359 = vmatpush1.msra.mxu0 0.0
    %3360 = vmatprep.subr.mxu0 0.0
    %3361 = vmatpush1.msra.mxu0 0.0
    %3362 = vmatprep.subr.mxu0 0.0
    %3363 = vmatpush1.msra.mxu0 0.0
    %3364 = vmatprep.subr.mxu0 0.0
    %3365 = vmatpush1.msra.mxu0 0.0
    %3366 = vmatprep.subr.mxu0 0.0
    %3367 = vmatpush1.msra.mxu0 0.0
    %3368 = vmatprep.subr.mxu0 0.0
    %3369 = vmatpush1.msra.mxu0 0.0
    %3370 = vmatprep.subr.mxu0 0.0
    %3371 = vmatpush1.msra.mxu0 0.0
    %3372 = vmatprep.subr.mxu0 0.0
    %3373 = vmatpush1.msra.mxu0 0.0
    %3374 = vmatprep.subr.mxu0 0.0
    %3375 = vmatpush1.msra.mxu0 0.0
    %3376 = vmatprep.subr.mxu0 0.0
    %3377 = vmatpush1.msra.mxu0 0.0
    %3378 = vmatprep.subr.mxu0 0.0
    %3379 = vmatpush1.msra.mxu0 0.0
    %3380 = vmatprep.subr.mxu0 0.0
    %3381 = vmatpush1.msra.mxu0 0.0
    %3382 = vmatprep.subr.mxu0 0.0
    %3383 = vmatpush1.msra.mxu0 0.0
    %3384 = vmatprep.subr.mxu0 0.0
    %3385 = vmatpush1.msra.mxu0 0.0
    %3386 = vmatprep.subr.mxu0 0.0
    %3387 = vmatpush1.msra.mxu0 0.0
    %3388 = vmatprep.subr.mxu0 0.0
    %3389 = vmatpush1.msra.mxu0 0.0
    %3390 = vmatprep.subr.mxu0 0.0
    %3391 = vmatpush1.msra.mxu0 0.0
    %3392 = vmatprep.subr.mxu0 0.0
    %3393 = vmatpush1.msra.mxu0 0.0
    %3394 = vmatprep.subr.mxu0 0.0
    %3395 = vmatpush1.msra.mxu0 0.0
    %3396 = vmatprep.mubr.f32.mxu0 0.0
    %3397 = vmatmul.mubr.f32.gmra.mrb[0].mxu0 %v3330
    %v3398 = vpop.f32.mrb[0].mxu0
    %v3399 = vadd.f32 0.0, %v3398
    %v3400 = vpop.f32.mrb[0].mxu0
    %3401 = vdwg.mxu0
    %3403 = vrot.lane.b32.xlu0 %v3065, 8
    %v3404 = vpop.permute.xlu0 %3403
    %3407 = vrot.lane.b32.xlu0 %v3232, 16
    %v3408 = vpop.permute.xlu0 %3407
    %3411 = vrot.lane.b32.xlu0 %v3399, 24
    %v3412 = vpop.permute.xlu0 %3411
    %v3414 = vsel %vm204, %v2898, %v3404
    %v3415 = vsel %vm886, %v3414, %v3408
    %v3416 = vsel %vm888, %v3415, %v3412
    %s3417 = scalar_lea.vmem %s6, 32
    %v3418 = vld [vmem:[%s3417] sm:$0xff]
    %v3419 = vld [vmem:[%s3417 + $0x8] sm:$0xff]
    %v3420 = vld [vmem:[%s3417 + $0x10] sm:$0xff]
    %v3421 = vld [vmem:[%s3417 + $0x18] sm:$0xff]
    %s3422 = scalar_lea.vmem %s7, 1
    %v3423 = vld [vmem:[%s3422] sm:$0x1]
    %v3425 = vlaneseq
    %v3426 = vshrl.u32 %v3425, 7
    %v3427 = vsub.s32 0, %v3426
    %v3428 = vrot.slane %v3423, %v3427
    %v3431 = vsel %vm65, %v2734, 0
    %v3434 = vsel %vm65, %v3416, 0
    %3436 = vmatprep.subr.mxu0 0.0
    %3437 = vmatpush1.msra.mxu0 %v3418
    %3438 = vmatprep.subr.mxu0 0.0
    %3439 = vmatpush1.msra.mxu0 %v3419
    %3440 = vmatprep.subr.mxu0 0.0
    %3441 = vmatpush1.msra.mxu0 %v3420
    %3442 = vmatprep.subr.mxu0 0.0
    %3443 = vmatpush1.msra.mxu0 %v3421
    %3444 = vmatprep.subr.mxu0 0.0
    %3445 = vmatpush1.msra.mxu0 0.0
    %3446 = vmatprep.subr.mxu0 0.0
    %3447 = vmatpush1.msra.mxu0 0.0
    %3448 = vmatprep.subr.mxu0 0.0
    %3449 = vmatpush1.msra.mxu0 0.0
    %3450 = vmatprep.subr.mxu0 0.0
    %3451 = vmatpush1.msra.mxu0 0.0
    %3452 = vmatprep.subr.mxu0 0.0
    %3453 = vmatpush1.msra.mxu0 0.0
    %3454 = vmatprep.subr.mxu0 0.0
    %3455 = vmatpush1.msra.mxu0 0.0
    %3456 = vmatprep.subr.mxu0 0.0
    %3457 = vmatpush1.msra.mxu0 0.0
    %3458 = vmatprep.subr.mxu0 0.0
    %3459 = vmatpush1.msra.mxu0 0.0
    %3460 = vmatprep.subr.mxu0 0.0
    %3461 = vmatpush1.msra.mxu0 0.0
    %3462 = vmatprep.subr.mxu0 0.0
    %3463 = vmatpush1.msra.mxu0 0.0
    %3464 = vmatprep.subr.mxu0 0.0
    %3465 = vmatpush1.msra.mxu0 0.0
    %3466 = vmatprep.subr.mxu0 0.0
    %3467 = vmatpush1.msra.mxu0 0.0
    %3468 = vmatprep.subr.mxu0 0.0
    %3469 = vmatpush1.msra.mxu0 0.0
    %3470 = vmatprep.subr.mxu0 0.0
    %3471 = vmatpush1.msra.mxu0 0.0
    %3472 = vmatprep.subr.mxu0 0.0
    %3473 = vmatpush1.msra.mxu0 0.0
    %3474 = vmatprep.subr.mxu0 0.0
    %3475 = vmatpush1.msra.mxu0 0.0
    %3476 = vmatprep.subr.mxu0 0.0
    %3477 = vmatpush1.msra.mxu0 0.0
    %3478 = vmatprep.subr.mxu0 0.0
    %3479 = vmatpush1.msra.mxu0 0.0
    %3480 = vmatprep.subr.mxu0 0.0
    %3481 = vmatpush1.msra.mxu0 0.0
    %3482 = vmatprep.subr.mxu0 0.0
    %3483 = vmatpush1.msra.mxu0 0.0
    %3484 = vmatprep.subr.mxu0 0.0
    %3485 = vmatpush1.msra.mxu0 0.0
    %3486 = vmatprep.subr.mxu0 0.0
    %3487 = vmatpush1.msra.mxu0 0.0
    %3488 = vmatprep.subr.mxu0 0.0
    %3489 = vmatpush1.msra.mxu0 0.0
    %3490 = vmatprep.subr.mxu0 0.0
    %3491 = vmatpush1.msra.mxu0 0.0
    %3492 = vmatprep.subr.mxu0 0.0
    %3493 = vmatpush1.msra.mxu0 0.0
    %3494 = vmatprep.subr.mxu0 0.0
    %3495 = vmatpush1.msra.mxu0 0.0
    %3496 = vmatprep.subr.mxu0 0.0
    %3497 = vmatpush1.msra.mxu0 0.0
    %3498 = vmatprep.subr.mxu0 0.0
    %3499 = vmatpush1.msra.mxu0 0.0
    %3500 = vmatprep.mubr.f32.mxu0 0.0
    %3501 = vmatmul.mubr.f32.gmra.mrb[0].mxu0 %v3431
    %v3502 = vpop.f32.mrb[0].mxu0
    %v3503 = vadd.f32 %v3428, %v3502
    %v3504 = vpop.f32.mrb[0].mxu0
    %3505 = vmatprep.mubr.f32.mxu0 0.0
    %3506 = vmatmul.mubr.f32.gmra.mrb[0].mxu0 %v3434
    %v3507 = vpop.f32.mrb[0].mxu0
    %v3508 = vadd.f32 %v3428, %v3507
    %v3509 = vpop.f32.mrb[0].mxu0
    %3510 = vdwg.mxu0
    %v3511 = vadd.f32 %v3503, %v1957
    %v3512 = vadd.f32 %v3508, %v1958
    %s3513 = scalar_lea.vmem %s8, 1
    %v3514 = vld [vmem:[%s3513] sm:$0x1]
    %s3515 = scalar_lea.vmem %s9, 1
    %v3516 = vld [vmem:[%s3515] sm:$0x1]
    %v3517 = vsel %vm65, %v3511, 0.0
    %3518 = vadd.xlane.f32.xlu0 %v3517
    %v3519 = vpop.xlane.xlu0 %3518
    %v3520 = vsel %vm65, %v3512, 0.0
    %3521 = vadd.xlane.f32.xlu0 %v3520
    %v3522 = vpop.xlane.xlu0 %3521
    %v3523 = vmul.f32 %v3519, %v72
    %v3524 = vmul.f32 %v3522, %v72
    %v3525 = vsub.f32 %v3511, %v3523
    %v3526 = vsub.f32 %v3512, %v3524
    %v3527 = vmul.f32 %v3525, %v3525
    %v3528 = vmul.f32 %v3526, %v3526
    %v3529 = vsel %vm65, %v3527, 0.0
    %3530 = vadd.xlane.f32.xlu0 %v3529
    %v3531 = vpop.xlane.xlu0 %3530
    %v3532 = vsel %vm65, %v3528, 0.0
    %3533 = vadd.xlane.f32.xlu0 %v3532
    %v3534 = vpop.xlane.xlu0 %3533
    %v3535 = vmul.f32 %v3531, %v72
    %v3536 = vmul.f32 %v3534, %v72
    %v3537 = vadd.f32 %v3535, 1e-12
    %v3538 = vadd.f32 %v3536, 1e-12
    %v3539 = vrsqrt.pop %v3537
    %v3540 = vrsqrt.pop %v3538
    %v3541 = vmul.f32 %v3525, %v3539
    %v3542 = vmul.f32 %v3526, %v3540
    %v3544 = vlaneseq
    %v3545 = vshrl.u32 %v3544, 7
    %v3546 = vsub.s32 0, %v3545
    %v3547 = vrot.slane %v3514, %v3546
    %v3549 = vmul.f32 %v3541, %v3547
    %v3550 = vmul.f32 %v3542, %v3547
    %v3552 = vlaneseq
    %v3553 = vshrl.u32 %v3552, 7
    %v3554 = vsub.s32 0, %v3553
    %v3555 = vrot.slane %v3516, %v3554
    %v3557 = vadd.f32 %v3549, %v3555
    %v3558 = vadd.f32 %v3550, %v3555
    %s3559 = scalar_lea.vmem %s10, 32
    %v3560 = vld [vmem:[%s3559] sm:$0xff]
    %v3561 = vld [vmem:[%s3559 + $0x8] sm:$0xff]
    %v3562 = vld [vmem:[%s3559 + $0x10] sm:$0xff]
    %v3563 = vld [vmem:[%s3559 + $0x18] sm:$0xff]
    %s3564 = scalar_lea.vmem %s11, 1
    %v3565 = vld [vmem:[%s3564] sm:$0x1]
    %v3567 = vlaneseq
    %v3568 = vshrl.u32 %v3567, 7
    %v3569 = vsub.s32 0, %v3568
    %v3570 = vrot.slane %v3565, %v3569
    %v3573 = vsel %vm65, %v3557, 0
    %v3576 = vsel %vm65, %v3558, 0
    %3578 = vmatprep.subr.mxu0 0.0
    %3579 = vmatpush1.msra.mxu0 %v3560
    %3580 = vmatprep.subr.mxu0 0.0
    %3581 = vmatpush1.msra.mxu0 %v3561
    %3582 = vmatprep.subr.mxu0 0.0
    %3583 = vmatpush1.msra.mxu0 %v3562
    %3584 = vmatprep.subr.mxu0 0.0
    %3585 = vmatpush1.msra.mxu0 %v3563
    %3586 = vmatprep.subr.mxu0 0.0
    %3587 = vmatpush1.msra.mxu0 0.0
    %3588 = vmatprep.subr.mxu0 0.0
    %3589 = vmatpush1.msra.mxu0 0.0
    %3590 = vmatprep.subr.mxu0 0.0
    %3591 = vmatpush1.msra.mxu0 0.0
    %3592 = vmatprep.subr.mxu0 0.0
    %3593 = vmatpush1.msra.mxu0 0.0
    %3594 = vmatprep.subr.mxu0 0.0
    %3595 = vmatpush1.msra.mxu0 0.0
    %3596 = vmatprep.subr.mxu0 0.0
    %3597 = vmatpush1.msra.mxu0 0.0
    %3598 = vmatprep.subr.mxu0 0.0
    %3599 = vmatpush1.msra.mxu0 0.0
    %3600 = vmatprep.subr.mxu0 0.0
    %3601 = vmatpush1.msra.mxu0 0.0
    %3602 = vmatprep.subr.mxu0 0.0
    %3603 = vmatpush1.msra.mxu0 0.0
    %3604 = vmatprep.subr.mxu0 0.0
    %3605 = vmatpush1.msra.mxu0 0.0
    %3606 = vmatprep.subr.mxu0 0.0
    %3607 = vmatpush1.msra.mxu0 0.0
    %3608 = vmatprep.subr.mxu0 0.0
    %3609 = vmatpush1.msra.mxu0 0.0
    %3610 = vmatprep.subr.mxu0 0.0
    %3611 = vmatpush1.msra.mxu0 0.0
    %3612 = vmatprep.subr.mxu0 0.0
    %3613 = vmatpush1.msra.mxu0 0.0
    %3614 = vmatprep.subr.mxu0 0.0
    %3615 = vmatpush1.msra.mxu0 0.0
    %3616 = vmatprep.subr.mxu0 0.0
    %3617 = vmatpush1.msra.mxu0 0.0
    %3618 = vmatprep.subr.mxu0 0.0
    %3619 = vmatpush1.msra.mxu0 0.0
    %3620 = vmatprep.subr.mxu0 0.0
    %3621 = vmatpush1.msra.mxu0 0.0
    %3622 = vmatprep.subr.mxu0 0.0
    %3623 = vmatpush1.msra.mxu0 0.0
    %3624 = vmatprep.subr.mxu0 0.0
    %3625 = vmatpush1.msra.mxu0 0.0
    %3626 = vmatprep.subr.mxu0 0.0
    %3627 = vmatpush1.msra.mxu0 0.0
    %3628 = vmatprep.subr.mxu0 0.0
    %3629 = vmatpush1.msra.mxu0 0.0
    %3630 = vmatprep.subr.mxu0 0.0
    %3631 = vmatpush1.msra.mxu0 0.0
    %3632 = vmatprep.subr.mxu0 0.0
    %3633 = vmatpush1.msra.mxu0 0.0
    %3634 = vmatprep.subr.mxu0 0.0
    %3635 = vmatpush1.msra.mxu0 0.0
    %3636 = vmatprep.subr.mxu0 0.0
    %3637 = vmatpush1.msra.mxu0 0.0
    %3638 = vmatprep.subr.mxu0 0.0
    %3639 = vmatpush1.msra.mxu0 0.0
    %3640 = vmatprep.subr.mxu0 0.0
    %3641 = vmatpush1.msra.mxu0 0.0
    %3642 = vmatprep.mubr.f32.mxu0 0.0
    %3643 = vmatmul.mubr.f32.gmra.mrb[0].mxu0 %v3573
    %v3644 = vpop.f32.mrb[0].mxu0
    %v3645 = vadd.f32 %v3570, %v3644
    %v3646 = vpop.f32.mrb[0].mxu0
    %3647 = vmatprep.mubr.f32.mxu0 0.0
    %3648 = vmatmul.mubr.f32.gmra.mrb[0].mxu0 %v3576
    %v3649 = vpop.f32.mrb[0].mxu0
    %v3650 = vadd.f32 %v3570, %v3649
    %v3651 = vpop.f32.mrb[0].mxu0
    %3652 = vdwg.mxu0
    %v3653 = vmul.f32 %v3645, 0.5
    %v3654 = vmul.f32 %v3650, 0.5
    %v3655 = vmul.f32 %v3645, 0.70710677
    %v3656 = vmul.f32 %v3650, 0.70710677
    %v3657 = verf.f32.pop %v3655
    %v3658 = verf.f32.pop %v3656
    %v3659 = vadd.f32 %v3657, 1.0
    %v3660 = vadd.f32 %v3658, 1.0
    %v3661 = vmul.f32 %v3653, %v3659
    %v3662 = vmul.f32 %v3654, %v3660
    %s3663 = scalar_lea.vmem %s12, 64
    %v3664 = vld [vmem:[%s3663] sm:$0xff]
    %v3665 = vld [vmem:[%s3663 + $0x8] sm:$0xff]
    %v3666 = vld [vmem:[%s3663 + $0x10] sm:$0xff]
    %v3667 = vld [vmem:[%s3663 + $0x18] sm:$0xff]
    %v3668 = vld [vmem:[%s3663 + $0x20] sm:$0xff]
    %v3669 = vld [vmem:[%s3663 + $0x28] sm:$0xff]
    %v3670 = vld [vmem:[%s3663 + $0x30] sm:$0xff]
    %v3671 = vld [vmem:[%s3663 + $0x38] sm:$0xff]
    %s3672 = scalar_lea.vmem %s13, 1
    %v3673 = vld [vmem:[%s3672] sm:$0x1]
    %v3675 = vlaneseq
    %v3676 = vshrl.u32 %v3675, 7
    %v3677 = vsub.s32 0, %v3676
    %v3678 = vrot.slane %v3673, %v3677
    %v3681 = vsel %vm1831, %v3661, 0
    %v3684 = vsel %vm1831, %v3662, 0
    %3686 = vmatprep.subr.mxu0 0.0
    %3687 = vmatpush1.msra.mxu0 %v3664
    %3688 = vmatprep.subr.mxu0 0.0
    %3689 = vmatpush1.msra.mxu0 %v3665
    %3690 = vmatprep.subr.mxu0 0.0
    %3691 = vmatpush1.msra.mxu0 %v3666
    %3692 = vmatprep.subr.mxu0 0.0
    %3693 = vmatpush1.msra.mxu0 %v3667
    %3694 = vmatprep.subr.mxu0 0.0
    %3695 = vmatpush1.msra.mxu0 %v3668
    %3696 = vmatprep.subr.mxu0 0.0
    %3697 = vmatpush1.msra.mxu0 %v3669
    %3698 = vmatprep.subr.mxu0 0.0
    %3699 = vmatpush1.msra.mxu0 %v3670
    %3700 = vmatprep.subr.mxu0 0.0
    %3701 = vmatpush1.msra.mxu0 %v3671
    %3702 = vmatprep.subr.mxu0 0.0
    %3703 = vmatpush1.msra.mxu0 0.0
    %3704 = vmatprep.subr.mxu0 0.0
    %3705 = vmatpush1.msra.mxu0 0.0
    %3706 = vmatprep.subr.mxu0 0.0
    %3707 = vmatpush1.msra.mxu0 0.0
    %3708 = vmatprep.subr.mxu0 0.0
    %3709 = vmatpush1.msra.mxu0 0.0
    %3710 = vmatprep.subr.mxu0 0.0
    %3711 = vmatpush1.msra.mxu0 0.0
    %3712 = vmatprep.subr.mxu0 0.0
    %3713 = vmatpush1.msra.mxu0 0.0
    %3714 = vmatprep.subr.mxu0 0.0
    %3715 = vmatpush1.msra.mxu0 0.0
    %3716 = vmatprep.subr.mxu0 0.0
    %3717 = vmatpush1.msra.mxu0 0.0
    %3718 = vmatprep.subr.mxu0 0.0
    %3719 = vmatpush1.msra.mxu0 0.0
    %3720 = vmatprep.subr.mxu0 0.0
    %3721 = vmatpush1.msra.mxu0 0.0
    %3722 = vmatprep.subr.mxu0 0.0
    %3723 = vmatpush1.msra.mxu0 0.0
    %3724 = vmatprep.subr.mxu0 0.0
    %3725 = vmatpush1.msra.mxu0 0.0
    %3726 = vmatprep.subr.mxu0 0.0
    %3727 = vmatpush1.msra.mxu0 0.0
    %3728 = vmatprep.subr.mxu0 0.0
    %3729 = vmatpush1.msra.mxu0 0.0
    %3730 = vmatprep.subr.mxu0 0.0
    %3731 = vmatpush1.msra.mxu0 0.0
    %3732 = vmatprep.subr.mxu0 0.0
    %3733 = vmatpush1.msra.mxu0 0.0
    %3734 = vmatprep.subr.mxu0 0.0
    %3735 = vmatpush1.msra.mxu0 0.0
    %3736 = vmatprep.subr.mxu0 0.0
    %3737 = vmatpush1.msra.mxu0 0.0
    %3738 = vmatprep.subr.mxu0 0.0
    %3739 = vmatpush1.msra.mxu0 0.0
    %3740 = vmatprep.subr.mxu0 0.0
    %3741 = vmatpush1.msra.mxu0 0.0
    %3742 = vmatprep.subr.mxu0 0.0
    %3743 = vmatpush1.msra.mxu0 0.0
    %3744 = vmatprep.subr.mxu0 0.0
    %3745 = vmatpush1.msra.mxu0 0.0
    %3746 = vmatprep.subr.mxu0 0.0
    %3747 = vmatpush1.msra.mxu0 0.0
    %3748 = vmatprep.subr.mxu0 0.0
    %3749 = vmatpush1.msra.mxu0 0.0
    %3750 = vmatprep.mubr.f32.mxu0 0.0
    %3751 = vmatmul.mubr.f32.gmra.mrb[0].mxu0 %v3681
    %v3752 = vpop.f32.mrb[0].mxu0
    %v3753 = vadd.f32 %v3678, %v3752
    %v3754 = vpop.f32.mrb[0].mxu0
    %3755 = vmatprep.mubr.f32.mxu0 0.0
    %3756 = vmatmul.mubr.f32.gmra.mrb[0].mxu0 %v3684
    %v3757 = vpop.f32.mrb[0].mxu0
    %v3758 = vadd.f32 %v3678, %v3757
    %v3759 = vpop.f32.mrb[0].mxu0
    %3760 = vdwg.mxu0
    %v3761 = vadd.f32 %v3753, %v3557
    %v3762 = vadd.f32 %v3758, %v3558
    %s3763 = scalar_lea.vmem %s14, 1
    %v3764 = vld [vmem:[%s3763] sm:$0x1]
    %s3765 = scalar_lea.vmem %s15, 1
    %v3766 = vld [vmem:[%s3765] sm:$0x1]
    %v3767 = vsel %vm65, %v3761, 0.0
    %3768 = vadd.xlane.f32.xlu0 %v3767
    %v3769 = vpop.xlane.xlu0 %3768
    %v3770 = vsel %vm65, %v3762, 0.0
    %3771 = vadd.xlane.f32.xlu0 %v3770
    %v3772 = vpop.xlane.xlu0 %3771
    %v3773 = vmul.f32 %v3769, %v72
    %v3774 = vmul.f32 %v3772, %v72
    %v3775 = vsub.f32 %v3761, %v3773
    %v3776 = vsub.f32 %v3762, %v3774
    %v3777 = vmul.f32 %v3775, %v3775
    %v3778 = vmul.f32 %v3776, %v3776
    %v3779 = vsel %vm65, %v3777, 0.0
    %3780 = vadd.xlane.f32.xlu0 %v3779
    %v3781 = vpop.xlane.xlu0 %3780
    %v3782 = vsel %vm65, %v3778, 0.0
    %3783 = vadd.xlane.f32.xlu0 %v3782
    %v3784 = vpop.xlane.xlu0 %3783
    %v3785 = vmul.f32 %v3781, %v72
    %v3786 = vmul.f32 %v3784, %v72
    %v3787 = vadd.f32 %v3785, 1e-12
    %v3788 = vadd.f32 %v3786, 1e-12
    %v3789 = vrsqrt.pop %v3787
    %v3790 = vrsqrt.pop %v3788
    %v3791 = vmul.f32 %v3775, %v3789
    %v3792 = vmul.f32 %v3776, %v3790
    %v3794 = vlaneseq
    %v3795 = vshrl.u32 %v3794, 7
    %v3796 = vsub.s32 0, %v3795
    %v3797 = vrot.slane %v3764, %v3796
    %v3799 = vmul.f32 %v3791, %v3797
    %v3800 = vmul.f32 %v3792, %v3797
    %v3802 = vlaneseq
    %v3803 = vshrl.u32 %v3802, 7
    %v3804 = vsub.s32 0, %v3803
    %v3805 = vrot.slane %v3766, %v3804
    %v3807 = vadd.f32 %v3799, %v3805
    %v3808 = vadd.f32 %v3800, %v3805
    %v3810 = vrot.slane %v3808, 7
    %vm3812 = vcmask 1040384
    %v3813 = vsel %vm3812, %v3807, %v3810
    %v3814 = vld [vmem:[%s16] sm:$0xff]
    %v3815 = vld [vmem:[%s16 + $0x8] sm:$0xff]
    %v3816 = vld [vmem:[%s16 + $0x10] sm:$0xff]
    %v3817 = vld [vmem:[%s16 + $0x18] sm:$0xff]
    %v3818 = vld [vmem:[%s17] sm:$0x1]
    %v3820 = vlaneseq
    %v3821 = vshrl.u32 %v3820, 7
    %v3822 = vsub.s32 0, %v3821
    %v3823 = vrot.slane %v3818, %v3822
    %v3826 = vsel %vm65, %v3813, 0
    %3828 = vmatprep.subr.mxu0 0.0
    %3829 = vmatpush1.msra.mxu0 %v3814
    %3830 = vmatprep.subr.mxu0 0.0
    %3831 = vmatpush1.msra.mxu0 %v3815
    %3832 = vmatprep.subr.mxu0 0.0
    %3833 = vmatpush1.msra.mxu0 %v3816
    %3834 = vmatprep.subr.mxu0 0.0
    %3835 = vmatpush1.msra.mxu0 %v3817
    %3836 = vmatprep.subr.mxu0 0.0
    %3837 = vmatpush1.msra.mxu0 0.0
    %3838 = vmatprep.subr.mxu0 0.0
    %3839 = vmatpush1.msra.mxu0 0.0
    %3840 = vmatprep.subr.mxu0 0.0
    %3841 = vmatpush1.msra.mxu0 0.0
    %3842 = vmatprep.subr.mxu0 0.0
    %3843 = vmatpush1.msra.mxu0 0.0
    %3844 = vmatprep.subr.mxu0 0.0
    %3845 = vmatpush1.msra.mxu0 0.0
    %3846 = vmatprep.subr.mxu0 0.0
    %3847 = vmatpush1.msra.mxu0 0.0
    %3848 = vmatprep.subr.mxu0 0.0
    %3849 = vmatpush1.msra.mxu0 0.0
    %3850 = vmatprep.subr.mxu0 0.0
    %3851 = vmatpush1.msra.mxu0 0.0
    %3852 = vmatprep.subr.mxu0 0.0
    %3853 = vmatpush1.msra.mxu0 0.0
    %3854 = vmatprep.subr.mxu0 0.0
    %3855 = vmatpush1.msra.mxu0 0.0
    %3856 = vmatprep.subr.mxu0 0.0
    %3857 = vmatpush1.msra.mxu0 0.0
    %3858 = vmatprep.subr.mxu0 0.0
    %3859 = vmatpush1.msra.mxu0 0.0
    %3860 = vmatprep.subr.mxu0 0.0
    %3861 = vmatpush1.msra.mxu0 0.0
    %3862 = vmatprep.subr.mxu0 0.0
    %3863 = vmatpush1.msra.mxu0 0.0
    %3864 = vmatprep.subr.mxu0 0.0
    %3865 = vmatpush1.msra.mxu0 0.0
    %3866 = vmatprep.subr.mxu0 0.0
    %3867 = vmatpush1.msra.mxu0 0.0
    %3868 = vmatprep.subr.mxu0 0.0
    %3869 = vmatpush1.msra.mxu0 0.0
    %3870 = vmatprep.subr.mxu0 0.0
    %3871 = vmatpush1.msra.mxu0 0.0
    %3872 = vmatprep.subr.mxu0 0.0
    %3873 = vmatpush1.msra.mxu0 0.0
    %3874 = vmatprep.subr.mxu0 0.0
    %3875 = vmatpush1.msra.mxu0 0.0
    %3876 = vmatprep.subr.mxu0 0.0
    %3877 = vmatpush1.msra.mxu0 0.0
    %3878 = vmatprep.subr.mxu0 0.0
    %3879 = vmatpush1.msra.mxu0 0.0
    %3880 = vmatprep.subr.mxu0 0.0
    %3881 = vmatpush1.msra.mxu0 0.0
    %3882 = vmatprep.subr.mxu0 0.0
    %3883 = vmatpush1.msra.mxu0 0.0
    %3884 = vmatprep.subr.mxu0 0.0
    %3885 = vmatpush1.msra.mxu0 0.0
    %3886 = vmatprep.subr.mxu0 0.0
    %3887 = vmatpush1.msra.mxu0 0.0
    %3888 = vmatprep.subr.mxu0 0.0
    %3889 = vmatpush1.msra.mxu0 0.0
    %3890 = vmatprep.subr.mxu0 0.0
    %3891 = vmatpush1.msra.mxu0 0.0
    %3892 = vmatprep.mubr.f32.mxu0 0.0
    %3893 = vmatmul.mubr.f32.gmra.mrb[0].mxu0 %v3826
    %v3894 = vpop.f32.mrb[0].mxu0
    %v3895 = vadd.f32 %v3823, %v3894
    %v3896 = vpop.f32.mrb[0].mxu0
    %3897 = vdwg.mxu0
    %3898 = vst [vmem:[#allocation2] sm:$0x3] %v3895
    // Predicated region
    $region74: #{bert_cls_forward.1} parent=1 // pred_check
      _
    $region75: #{bert_cls_forward.1} parent=1 // pred_check_branch
      %3900 = sbr.rel (0) target = $region77
    $region76: #{bert_cls_forward.1} parent=1 // pred_region
      %s3902 = ssub.s32 32, 32
      %3903 = vsyncadd [#allocation3], %s3902
      %s3905 = sshll.u32 [#allocation2], 4
      %s3906 = int_to_ptr.vmem [resolvable:$true] %s3905
      %3908 = dma.vmem_to_hbm [thread:$0]  %s3906, 32, %s18, [#allocation3]
    $region77: #{bert_cls_forward.1} parent=1 // pred_fallthru
      _
    // Predicated region
    $region78: #{bert_cls_forward.1} parent=1 // pred_check
      _
    $region79: #{bert_cls_forward.1} parent=1 // pred_check_branch
      %3910 = sbr.rel (0) target = $region81
    $region80: #{bert_cls_forward.1} parent=1 // pred_region
      %3911 = dma.done [#allocation3], 32
    $region81: #{bert_cls_forward.1} parent=1 // pred_fallthru
      _
    %3912 = vsyncpa [#allocation3], 1

</llo_original>
